<compile_context>
chip_gen: v7x
topology: tpu7x:2x2x1
jax: 0.10.0
libtpu: 0.0.40
codegen_flags: <defaults>
</compile_context>

<pallas_src>
import functools

import jax
import jax.numpy as jnp
from jax.experimental import pallas as pl
from jax.experimental.pallas import tpu as pltpu


# -----------------------------------------------------------------------------
# Generation-aware VMEM limit & tiling knobs
# -----------------------------------------------------------------------------
def _vmem_limit_bytes():
    try:
        cap = int(pltpu.get_tpu_info().vmem_capacity_bytes)
        return max(cap - 16 * 1024 * 1024, 32 * 1024 * 1024)   # leave headroom for compiler scratch
    except Exception:
        return 48 * 1024 * 1024                                # safe on every generation (v7x = 64 MiB)


VMEM_LIMIT = _vmem_limit_bytes()
# Bigger MLP row tile only on the 128-MiB-VMEM parts (v5e/v6e); v7x keeps 256 until weights
# are single-buffered.
MLP_TILE_M = 512 if VMEM_LIMIT >= 96 * 1024 * 1024 else 256
ATTN_TILE_Q = 256


def _const_spec(shape):
    """Grid-invariant (resident) input: constant block index, never re-fetched."""
    n = len(shape)
    return pl.BlockSpec(shape, lambda *idx: (0,) * n)


def _cparams(*sem):
    return pltpu.CompilerParams(dimension_semantics=sem, vmem_limit_bytes=VMEM_LIMIT)


def _layernorm(v, w, b, eps):
    mu = jnp.mean(v, axis=-1, keepdims=True)
    var = jnp.mean(jnp.square(v - mu), axis=-1, keepdims=True)
    return (v - mu) * jax.lax.rsqrt(var + eps) * w + b


# -----------------------------------------------------------------------------
# Patch embedding: Conv2d(kernel=stride=patch) == per-patch matmul.
# pos_embed addition is fused; output is written directly in bf16.
# -----------------------------------------------------------------------------
def _patch_embed_kernel(p_ref, w_ref, b_ref, pos_ref, o_ref):
    o_ref[0] = (
        jnp.dot(p_ref[0], w_ref[...], preferred_element_type=jnp.float32)
        + b_ref[...] + pos_ref[...]
    ).astype(o_ref.dtype)


def patch_embed_pallas(patches, w, b, pos, *, tile_m=256):
    B, N, K = patches.shape
    D = w.shape[1]
    tm = N if N <= tile_m else tile_m
    return pl.pallas_call(
        _patch_embed_kernel,
        out_shape=jax.ShapeDtypeStruct((B, N, D), jnp.bfloat16),
        grid=(B, pl.cdiv(N, tm)),
        in_specs=[
            pl.BlockSpec((1, tm, K), lambda bb, i: (bb, i, 0)),
            _const_spec(w.shape),
            _const_spec(b.shape),
            pl.BlockSpec((tm, D), lambda bb, i: (i, 0)),
        ],
        out_specs=pl.BlockSpec((1, tm, D), lambda bb, i: (bb, i, 0)),
        compiler_params=_cparams("parallel", "parallel"),
    )(patches, w, b, pos)


# -----------------------------------------------------------------------------
# QKV projection + RoPE, q-tiled.  RoPE uses precomputed sign/zero-masked sin tables so the
# kernel needs no iota / select; lane wrap of the rolls is killed by the zeroed table entries.
# -----------------------------------------------------------------------------
def _qkv_rope_kernel(x_ref, cos_ref, sa_ref, sb_ref, ln1w_ref, ln1b_ref,
                     wqkv_ref, bqkv_ref, q_ref, k_ref, v_ref,
                     *, num_heads, head_dim, eps):
    D = num_heads * head_dim
    x = x_ref[0].astype(jnp.float32)                       # (tq, D)

    xn = _layernorm(x, ln1w_ref[...], ln1b_ref[...], eps)
    qkv = (
        jnp.dot(xn.astype(jnp.bfloat16), wqkv_ref[...],
                preferred_element_type=jnp.float32)
        + bqkv_ref[...]
    )                                                      # (tq, 3D) f32

    cos = cos_ref[...]
    sa = sa_ref[...]                                       # -sin on even lanes, 0 on odd
    sb = sb_ref[...]                                       # 0 on even lanes,  sin on odd

    def rope(t):
        # rot(t)[2i] = -t[2i+1], rot(t)[2i+1] = t[2i]  (signs folded into sa/sb tables)
        return (t * cos
                + pltpu.roll(t, shift=D - 1, axis=1) * sa   # t[j+1 mod D]
                + pltpu.roll(t, shift=1, axis=1) * sb)      # t[j-1 mod D]

    scale = head_dim ** -0.5
    q_ref[0] = rope(qkv[:, :D] * scale).astype(q_ref.dtype)   # qk scale applied once, to q
    k_ref[0] = rope(qkv[:, D:2 * D]).astype(k_ref.dtype)
    v_ref[0] = qkv[:, 2 * D:].astype(v_ref.dtype)


def qkv_rope_pallas(x, cos_t, sin_a, sin_b, blk, *, num_heads, head_dim, tile_q=None):
    B, S, D = x.shape
    tile_q = ATTN_TILE_Q if tile_q is None else tile_q
    tq = S if S <= tile_q else tile_q
    kernel = functools.partial(_qkv_rope_kernel, num_heads=num_heads,
                               head_dim=head_dim, eps=1e-6)
    row = pl.BlockSpec((1, tq, D), lambda bb, i: (bb, i, 0))
    tab = pl.BlockSpec((tq, D), lambda bb, i: (i, 0))
    args = (x, cos_t, sin_a, sin_b,
            blk["ln1_w"], blk["ln1_b"], blk["wqkv"], blk["bqkv"])
    in_specs = [row, tab, tab, tab] + [_const_spec(a.shape) for a in args[4:]]
    qkv_shape = jax.ShapeDtypeStruct((B, S, D), jnp.bfloat16)
    return pl.pallas_call(
        kernel,
        out_shape=(qkv_shape, qkv_shape, qkv_shape),
        grid=(B, pl.cdiv(S, tq)),
        in_specs=in_specs,
        out_specs=(row, row, row),
        compiler_params=_cparams("parallel", "parallel"),
    )(*args)


# -----------------------------------------------------------------------------
# Attention core, q-tiled:  x = x + Proj(softmax(q k^T) v)
# Scores live only as (H, tq, S); K/V are full-sequence but grid-invariant across q-tiles.
# -----------------------------------------------------------------------------
def _attn_core_kernel(x_ref, q_ref, k_ref, v_ref, wproj_ref, bproj_ref, o_ref,
                      *, num_heads, head_dim):
    D = num_heads * head_dim
    TQ = q_ref.shape[1]
    S = k_ref.shape[1]

    q = q_ref[0].reshape(TQ, num_heads, head_dim)          # bf16, already scaled
    k = k_ref[0].reshape(S, num_heads, head_dim)
    v = v_ref[0].reshape(S, num_heads, head_dim)

    s = jnp.einsum("qhd,khd->hqk", q, k,
                   preferred_element_type=jnp.float32)     # (H, TQ, S) f32
    m = jnp.max(s, axis=-1, keepdims=True)
    # bf16 exp: uses bf16 EUP on v6e/v7x; legalized (f32 internally) on older parts.
    p = jnp.exp((s - m).astype(jnp.bfloat16))              # (H, TQ, S) bf16
    denom = jnp.sum(p.astype(jnp.float32), axis=-1, keepdims=True)   # (H, TQ, 1), >= 1

    # Output order 'qhd' avoids the explicit head-major -> token-major transpose afterwards.
    o = jnp.einsum("hqk,khd->qhd", p, v,
                   preferred_element_type=jnp.float32)     # (TQ, H, hd) f32
    inv = pl.reciprocal(denom[..., 0], approx=True)        # (H, TQ), EUP
    o = o * jnp.transpose(inv)[:, :, None]                 # (TQ, H, 1) broadcast

    attn = o.reshape(TQ, D).astype(jnp.bfloat16)
    y = (
        x_ref[0].astype(jnp.float32)
        + jnp.dot(attn, wproj_ref[...], preferred_element_type=jnp.float32)
        + bproj_ref[...]
    )
    o_ref[0] = y.astype(o_ref.dtype)


def attn_core_pallas(x, q, k, v, blk, *, num_heads, head_dim, tile_q=None):
    B, S, D = x.shape
    tile_q = ATTN_TILE_Q if tile_q is None else tile_q
    tq = S if S <= tile_q else tile_q
    kernel = functools.partial(_attn_core_kernel, num_heads=num_heads, head_dim=head_dim)
    qrow = pl.BlockSpec((1, tq, D), lambda bb, i: (bb, i, 0))
    full = pl.BlockSpec((1, S, D), lambda bb, i: (bb, 0, 0))   # constant over q-tiles -> resident
    in_specs = [qrow, qrow, full, full,
                _const_spec(blk["wproj"].shape), _const_spec(blk["bproj"].shape)]
    return pl.pallas_call(
        kernel,
        out_shape=jax.ShapeDtypeStruct((B, S, D), x.dtype),
        grid=(B, pl.cdiv(S, tq)),
        in_specs=in_specs,
        out_specs=qrow,
        compiler_params=_cparams("parallel", "parallel"),
    )(x, q, k, v, blk["wproj"], blk["bproj"])


# -----------------------------------------------------------------------------
# MLP kernel (row-tiled, token-wise):  x = x + MLP(LN2(x))
# Optionally emits a second bf16 output = final-LayerNorm(x) for tapped layers (fused).
# -----------------------------------------------------------------------------
def _mlp_kernel(x_ref, ln2w_ref, ln2b_ref, w1_ref, b1_ref, w2_ref, b2_ref,
                normw_ref, normb_ref, *out_refs, eps, with_tap):
    o_ref = out_refs[0]
    x = x_ref[...].astype(jnp.float32)                     # (TM, D)

    # TODO(synk): EVA-02 variants use a SwiGLU MLP with sub-LN; a plain GELU MLP is used here.
    xn = _layernorm(x, ln2w_ref[...], ln2b_ref[...], eps)
    h = (
        jnp.dot(xn.astype(jnp.bfloat16), w1_ref[...],
                preferred_element_type=jnp.float32)
        + b1_ref[...]
    )
    h = jax.nn.gelu(h, approximate=True)
    h2 = (
        jnp.dot(h.astype(jnp.bfloat16), w2_ref[...],
                preferred_element_type=jnp.float32)
        + b2_ref[...]
    )
    y = x + h2
    o_ref[...] = y.astype(o_ref.dtype)

    if with_tap:
        tap_ref = out_refs[1]
        tap_ref[...] = _layernorm(
            y, normw_ref[...], normb_ref[...], eps
        ).astype(tap_ref.dtype)


def mlp_block_pallas(x2d, blk, norm_w, norm_b, *, with_tap, tile_m=None):
    R, D = x2d.shape
    tile_m = MLP_TILE_M if tile_m is None else tile_m
    tm = R if R <= tile_m else tile_m
    kernel = functools.partial(_mlp_kernel, eps=1e-6, with_tap=with_tap)
    args = (
        x2d, blk["ln2_w"], blk["ln2_b"], blk["w1"], blk["b1"],
        blk["w2"], blk["b2"], norm_w, norm_b,
    )
    row_spec = pl.BlockSpec((tm, D), lambda i: (i, 0))
    in_specs = [row_spec] + [_const_spec(a.shape) for a in args[1:]]
    out_shape = jax.ShapeDtypeStruct((R, D), x2d.dtype)
    out_spec = pl.BlockSpec((tm, D), lambda i: (i, 0))
    if with_tap:
        # Tapped features stored in bf16 (halves writeback & downstream concat traffic).
        out_shape = (out_shape, jax.ShapeDtypeStruct((R, D), x2d.dtype))
        out_spec = (out_spec, pl.BlockSpec((tm, D), lambda i: (i, 0)))
    return pl.pallas_call(
        kernel,
        out_shape=out_shape,
        grid=(pl.cdiv(R, tm),),
        in_specs=in_specs,
        out_specs=out_spec,
        compiler_params=_cparams("parallel"),
    )(*args)


# -----------------------------------------------------------------------------
# Glue: RoPE tables (pre-tiled to D lanes, sign masks folded), params, full forward.
# -----------------------------------------------------------------------------
def build_rope_tables(grid_size, head_dim, num_heads, theta=100.0):
    # 2D axial RoPE (interleaved-pair convention); simplified frequency schedule.
    # TODO(synk): timm's EVA rot_pos_embed frequency construction differs numerically.
    n_bands = head_dim // 4
    freqs = 1.0 / (theta ** (jnp.arange(n_bands, dtype=jnp.float32) / n_bands))
    ys, xs = jnp.meshgrid(
        jnp.arange(grid_size, dtype=jnp.float32),
        jnp.arange(grid_size, dtype=jnp.float32),
        indexing="ij",
    )
    ang = jnp.concatenate(
        [ys.reshape(-1, 1) * freqs, xs.reshape(-1, 1) * freqs], axis=-1
    )                                                        # (N, head_dim//2)
    ang = jnp.repeat(ang, 2, axis=-1)                        # (N, head_dim) pairwise
    # identity row for the cls token (RoPE skips prefix tokens in timm EVA)
    cos = jnp.concatenate([jnp.ones((1, head_dim), jnp.float32), jnp.cos(ang)], axis=0)
    sin = jnp.concatenate([jnp.zeros((1, head_dim), jnp.float32), jnp.sin(ang)], axis=0)
    D = head_dim * num_heads
    cos_t = jnp.tile(cos, (1, num_heads))                    # (S, D)
    sin_t = jnp.tile(sin, (1, num_heads))
    even = (jnp.arange(D) % 2 == 0)[None, :]
    # rope(t) = t*cos + t[j+1]*sin_a + t[j-1]*sin_b ; zeros kill the roll lane-wrap terms.
    sin_a = jnp.where(even, -sin_t, 0.0)
    sin_b = jnp.where(even, 0.0, sin_t)
    return cos_t, sin_a, sin_b


def init_params(key, *, in_chans, image_size, patch_size, embed_dim, num_heads,
                depth, mlp_ratio=4):
    D = embed_dim
    Dm = mlp_ratio * D
    num_patches = (image_size // patch_size) ** 2

    def nrm(k, shape, scale=0.02):
        return (scale * jax.random.normal(k, shape, jnp.float32)).astype(jnp.bfloat16)

    keys = iter(jax.random.split(key, 3 + 4 * depth))
    params = {
        "patch_w": nrm(next(keys), (in_chans * patch_size * patch_size, D)),
        "patch_b": jnp.zeros((1, D), jnp.float32),
        "cls_token": 0.02 * jax.random.normal(next(keys), (1, 1, D), jnp.float32),
        "pos_embed": 0.02 * jax.random.normal(next(keys), (1, num_patches + 1, D), jnp.float32),
        "norm_w": jnp.ones((1, D), jnp.float32),
        "norm_b": jnp.zeros((1, D), jnp.float32),
        "blocks": [],
    }
    for _ in range(depth):
        params["blocks"].append({
            "ln1_w": jnp.ones((1, D), jnp.float32),
            "ln1_b": jnp.zeros((1, D), jnp.float32),
            "wqkv": nrm(next(keys), (D, 3 * D)),
            "bqkv": jnp.zeros((1, 3 * D), jnp.float32),
            "wproj": nrm(next(keys), (D, D)),
            "bproj": jnp.zeros((1, D), jnp.float32),
            "ln2_w": jnp.ones((1, D), jnp.float32),
            "ln2_b": jnp.zeros((1, D), jnp.float32),
            "w1": nrm(next(keys), (D, Dm)),
            "b1": jnp.zeros((1, Dm), jnp.float32),
            "w2": nrm(next(keys), (Dm, D)),
            "b2": jnp.zeros((1, D), jnp.float32),
        })
    return params


def feature_extractor_eva_forward(params, x, layer_indices, *, patch_size, num_heads):
    B, C, H, W = x.shape
    gh, gw = H // patch_size, W // patch_size
    N = gh * gw
    D = params["patch_w"].shape[1]
    head_dim = D // num_heads
    S = N + 1

    # NCHW -> per-patch rows (channel-major inside a patch, matching Conv2d weight layout)
    patches = x.reshape(B, C, gh, patch_size, gw, patch_size)
    patches = patches.transpose(0, 2, 4, 1, 3, 5).reshape(
        B, N, C * patch_size * patch_size
    ).astype(jnp.bfloat16)

    pos_patch = params["pos_embed"][0, 1:, :]                     # (N, D) f32
    tok = patch_embed_pallas(patches, params["patch_w"], params["patch_b"], pos_patch)
    cls = jnp.broadcast_to(
        (params["cls_token"] + params["pos_embed"][:, :1, :]).astype(jnp.bfloat16),
        (B, 1, D),
    )
    xs = jnp.concatenate([cls, tok], axis=1)                      # (B, S, D) bf16

    cos_t, sin_a, sin_b = build_rope_tables(gh, head_dim, num_heads)

    max_idx = max(layer_indices)
    outs = []
    for idx, blk in enumerate(params["blocks"], start=1):
        q, k, v = qkv_rope_pallas(xs, cos_t, sin_a, sin_b, blk,
                                  num_heads=num_heads, head_dim=head_dim)
        xs = attn_core_pallas(xs, q, k, v, blk, num_heads=num_heads, head_dim=head_dim)
        with_tap = idx in layer_indices
        res = mlp_block_pallas(
            xs.reshape(B * S, D), blk, params["norm_w"], params["norm_b"],
            with_tap=with_tap,
        )
        if with_tap:
            xs2d, tap = res
            outs.append(tap.reshape(B, S, D)[:, 1:, :])           # drop cls token for features
        else:
            xs2d = res
        xs = xs2d.reshape(B, S, D)
        if idx == max_idx:
            break
    return jnp.concatenate(outs, axis=-1)


if __name__ == "__main__":
    B, C, IMG = 2, 3, 16
    PATCH, EMBED, HEADS, DEPTH = 8, 32, 4, 2
    LAYER_INDICES = (1, 2)

    key = jax.random.PRNGKey(0)
    kx, kp = jax.random.split(key)
    x = jax.random.normal(kx, (B, C, IMG, IMG), jnp.float32)
    params = init_params(kp, in_chans=C, image_size=IMG, patch_size=PATCH,
                         embed_dim=EMBED, num_heads=HEADS, depth=DEPTH)

    fwd = jax.jit(functools.partial(
        feature_extractor_eva_forward,
        layer_indices=LAYER_INDICES, patch_size=PATCH, num_heads=HEADS))
    feats = jax.block_until_ready(fwd(params, x))

    num_patches = (IMG // PATCH) ** 2
    assert feats.shape == (B, num_patches, len(LAYER_INDICES) * EMBED), feats.shape
    assert bool(jnp.all(jnp.isfinite(feats.astype(jnp.float32))))
    print("KERNEL_OK")
</pallas_src>

<mosaic_0001>
module attributes {stable_mosaic.version = 11 : i64} {
  func.func @_patch_embed_kernel(%arg0: i32, %arg1: i32, %arg2: memref<1x4x192xbf16, #tpu.memory_space<vmem>>, %arg3: memref<192x32xbf16, #tpu.memory_space<vmem>>, %arg4: memref<1x32xf32, #tpu.memory_space<vmem>>, %arg5: memref<4x32xf32, #tpu.memory_space<vmem>>, %arg6: memref<1x4x32xbf16, #tpu.memory_space<vmem>>) attributes {dimension_semantics = [#tpu.dimension_semantics<parallel>, #tpu.dimension_semantics<parallel>], iteration_bounds = array<i64: 2, 1>, scalar_prefetch = 0 : i64, scratch_operands = 0 : i64, tpu.core_type = #tpu.core_type<tc>, window_params = [{transform_indices = @transform_0, window_bounds = array<i64: 1, 4, 192>}, {pipeline_mode = #tpu.pipeline_mode<synchronous>, transform_indices = @transform_1, window_bounds = array<i64: 192, 32>}, {pipeline_mode = #tpu.pipeline_mode<synchronous>, transform_indices = @transform_2, window_bounds = array<i64: 1, 32>}, {transform_indices = @transform_3, window_bounds = array<i64: 4, 32>}, {transform_indices = @transform_4, window_bounds = array<i64: 1, 4, 32>}]} {
    %c0 = arith.constant 0 : index
    %c0_0 = arith.constant 0 : index
    %c0_1 = arith.constant 0 : index
    %0 = vector.load %arg2[%c0, %c0_0, %c0_1] : memref<1x4x192xbf16, #tpu.memory_space<vmem>>, vector<1x4x192xbf16>
    %1 = vector.shape_cast %0 : vector<1x4x192xbf16> to vector<4x192xbf16>
    %c0_2 = arith.constant 0 : index
    %c0_3 = arith.constant 0 : index
    %2 = vector.load %arg3[%c0_2, %c0_3] : memref<192x32xbf16, #tpu.memory_space<vmem>>, vector<192x32xbf16>
    %cst = arith.constant dense<0.000000e+00> : vector<4x32xf32>
    %3 = tpu.matmul %1, %2, %cst {dimension_numbers = #tpu.dot_dimension_numbers<[1], [0], [0], [1], [0, 0, 1, 1], [], []>} : vector<4x192xbf16>, vector<192x32xbf16>, vector<4x32xf32> -> vector<4x32xf32>
    %c0_4 = arith.constant 0 : index
    %c0_5 = arith.constant 0 : index
    %4 = vector.load %arg4[%c0_4, %c0_5] : memref<1x32xf32, #tpu.memory_space<vmem>>, vector<1x32xf32>
    %5 = vector.broadcast %4 : vector<1x32xf32> to vector<4x32xf32>
    %6 = arith.addf %3, %5 : vector<4x32xf32>
    %c0_6 = arith.constant 0 : index
    %c0_7 = arith.constant 0 : index
    %7 = vector.load %arg5[%c0_6, %c0_7] : memref<4x32xf32, #tpu.memory_space<vmem>>, vector<4x32xf32>
    %8 = arith.addf %6, %7 : vector<4x32xf32>
    %9 = arith.truncf %8 : vector<4x32xf32> to vector<4x32xbf16>
    %c0_8 = arith.constant 0 : index
    %c0_9 = arith.constant 0 : index
    %c0_10 = arith.constant 0 : index
    %10 = vector.load %arg6[%c0_8, %c0_9, %c0_10] : memref<1x4x32xbf16, #tpu.memory_space<vmem>>, vector<1x4x32xbf16>
    %11 = vector.shape_cast %10 : vector<1x4x32xbf16> to vector<4x32xbf16>
    %12 = vector.shape_cast %9 : vector<4x32xbf16> to vector<1x4x32xbf16>
    tpu.vector_store %arg6[%c0_8, %c0_9, %c0_10], %12 {strides = array<i32>} : memref<1x4x32xbf16, #tpu.memory_space<vmem>>, vector<1x4x32xbf16>,
    return
  }
  func.func @transform_0(%arg0: i32, %arg1: i32) -> (i32, i32, i32) {
    %c0_i32 = arith.constant 0 : i32
    %c0_i32_0 = arith.constant 0 : i32
    return %arg0, %arg1, %c0_i32 : i32, i32, i32
  }
  func.func @transform_1(%arg0: i32, %arg1: i32) -> (i32, i32) {
    %c0_i32 = arith.constant 0 : i32
    %c0_i32_0 = arith.constant 0 : i32
    %c0_i32_1 = arith.constant 0 : i32
    return %c0_i32, %c0_i32_0 : i32, i32
  }
  func.func @transform_2(%arg0: i32, %arg1: i32) -> (i32, i32) {
    %c0_i32 = arith.constant 0 : i32
    %c0_i32_0 = arith.constant 0 : i32
    %c0_i32_1 = arith.constant 0 : i32
    return %c0_i32, %c0_i32_0 : i32, i32
  }
  func.func @transform_3(%arg0: i32, %arg1: i32) -> (i32, i32) {
    %c0_i32 = arith.constant 0 : i32
    %c0_i32_0 = arith.constant 0 : i32
    return %arg1, %c0_i32 : i32, i32
  }
  func.func @transform_4(%arg0: i32, %arg1: i32) -> (i32, i32, i32) {
    %c0_i32 = arith.constant 0 : i32
    %c0_i32_0 = arith.constant 0 : i32
    return %arg0, %arg1, %c0_i32 : i32, i32, i32
  }
}

module attributes {stable_mosaic.version = 11 : i64} {
  func.func @_qkv_rope_kernel(%arg0: i32, %arg1: i32, %arg2: memref<1x5x32xbf16, #tpu.memory_space<vmem>>, %arg3: memref<5x32xf32, #tpu.memory_space<vmem>>, %arg4: memref<5x32xf32, #tpu.memory_space<vmem>>, %arg5: memref<5x32xf32, #tpu.memory_space<vmem>>, %arg6: memref<1x32xf32, #tpu.memory_space<vmem>>, %arg7: memref<1x32xf32, #tpu.memory_space<vmem>>, %arg8: memref<32x96xbf16, #tpu.memory_space<vmem>>, %arg9: memref<1x96xf32, #tpu.memory_space<vmem>>, %arg10: memref<1x5x32xbf16, #tpu.memory_space<vmem>>, %arg11: memref<1x5x32xbf16, #tpu.memory_space<vmem>>, %arg12: memref<1x5x32xbf16, #tpu.memory_space<vmem>>) attributes {dimension_semantics = [#tpu.dimension_semantics<parallel>, #tpu.dimension_semantics<parallel>], iteration_bounds = array<i64: 2, 1>, scalar_prefetch = 0 : i64, scratch_operands = 0 : i64, tpu.core_type = #tpu.core_type<tc>, window_params = [{transform_indices = @transform_0, window_bounds = array<i64: 1, 5, 32>}, {transform_indices = @transform_1, window_bounds = array<i64: 5, 32>}, {transform_indices = @transform_2, window_bounds = array<i64: 5, 32>}, {transform_indices = @transform_3, window_bounds = array<i64: 5, 32>}, {pipeline_mode = #tpu.pipeline_mode<synchronous>, transform_indices = @transform_4, window_bounds = array<i64: 1, 32>}, {pipeline_mode = #tpu.pipeline_mode<synchronous>, transform_indices = @transform_5, window_bounds = array<i64: 1, 32>}, {pipeline_mode = #tpu.pipeline_mode<synchronous>, transform_indices = @transform_6, window_bounds = array<i64: 32, 96>}, {pipeline_mode = #tpu.pipeline_mode<synchronous>, transform_indices = @transform_7, window_bounds = array<i64: 1, 96>}, {transform_indices = @transform_8, window_bounds = array<i64: 1, 5, 32>}, {transform_indices = @transform_9, window_bounds = array<i64: 1, 5, 32>}, {transform_indices = @transform_10, window_bounds = array<i64: 1, 5, 32>}]} {
    %c0 = arith.constant 0 : index
    %c0_0 = arith.constant 0 : index
    %c0_1 = arith.constant 0 : index
    %0 = vector.load %arg2[%c0, %c0_0, %c0_1] : memref<1x5x32xbf16, #tpu.memory_space<vmem>>, vector<1x5x32xbf16>
    %1 = vector.shape_cast %0 : vector<1x5x32xbf16> to vector<5x32xbf16>
    %2 = arith.extf %1 : vector<5x32xbf16> to vector<5x32xf32>
    %c0_2 = arith.constant 0 : index
    %c0_3 = arith.constant 0 : index
    %3 = vector.load %arg6[%c0_2, %c0_3] : memref<1x32xf32, #tpu.memory_space<vmem>>, vector<1x32xf32>
    %c0_4 = arith.constant 0 : index
    %c0_5 = arith.constant 0 : index
    %4 = vector.load %arg7[%c0_4, %c0_5] : memref<1x32xf32, #tpu.memory_space<vmem>>, vector<1x32xf32>
    %cst = arith.constant dense<0.000000e+00> : vector<5xf32>
    %5 = vector.multi_reduction <add>, %2, %cst [1] : vector<5x32xf32> to vector<5xf32>
    %6 = vector.shape_cast %5 : vector<5xf32> to vector<5x1xf32>
    %cst_6 = arith.constant 3.200000e+01 : f32
    %7 = vector.broadcast %cst_6 : f32 to vector<5x1xf32>
    %8 = arith.divf %6, %7 : vector<5x1xf32>
    %9 = vector.broadcast %8 : vector<5x1xf32> to vector<5x32xf32>
    %10 = arith.subf %2, %9 : vector<5x32xf32>
    %11 = arith.mulf %10, %10 : vector<5x32xf32>
    %cst_7 = arith.constant dense<0.000000e+00> : vector<5xf32>
    %12 = vector.multi_reduction <add>, %11, %cst_7 [1] : vector<5x32xf32> to vector<5xf32>
    %13 = vector.shape_cast %12 : vector<5xf32> to vector<5x1xf32>
    %cst_8 = arith.constant 3.200000e+01 : f32
    %14 = vector.broadcast %cst_8 : f32 to vector<5x1xf32>
    %15 = arith.divf %13, %14 : vector<5x1xf32>
    %16 = vector.broadcast %8 : vector<5x1xf32> to vector<5x32xf32>
    %17 = arith.subf %2, %16 : vector<5x32xf32>
    %cst_9 = arith.constant 9.99999997E-7 : f32
    %18 = vector.broadcast %cst_9 : f32 to vector<5x1xf32>
    %19 = arith.addf %15, %18 : vector<5x1xf32>
    %20 = math.rsqrt %19 : vector<5x1xf32>
    %21 = vector.broadcast %20 : vector<5x1xf32> to vector<5x32xf32>
    %22 = arith.mulf %17, %21 : vector<5x32xf32>
    %23 = vector.broadcast %3 : vector<1x32xf32> to vector<5x32xf32>
    %24 = arith.mulf %22, %23 : vector<5x32xf32>
    %25 = vector.broadcast %4 : vector<1x32xf32> to vector<5x32xf32>
    %26 = arith.addf %24, %25 : vector<5x32xf32>
    %27 = arith.truncf %26 : vector<5x32xf32> to vector<5x32xbf16>
    %c0_10 = arith.constant 0 : index
    %c0_11 = arith.constant 0 : index
    %28 = vector.load %arg8[%c0_10, %c0_11] : memref<32x96xbf16, #tpu.memory_space<vmem>>, vector<32x96xbf16>
    %cst_12 = arith.constant dense<0.000000e+00> : vector<5x96xf32>
    %29 = tpu.matmul %27, %28, %cst_12 {dimension_numbers = #tpu.dot_dimension_numbers<[1], [0], [0], [1], [0, 0, 1, 1], [], []>} : vector<5x32xbf16>, vector<32x96xbf16>, vector<5x96xf32> -> vector<5x96xf32>
    %c0_13 = arith.constant 0 : index
    %c0_14 = arith.constant 0 : index
    %30 = vector.load %arg9[%c0_13, %c0_14] : memref<1x96xf32, #tpu.memory_space<vmem>>, vector<1x96xf32>
    %31 = vector.broadcast %30 : vector<1x96xf32> to vector<5x96xf32>
    %32 = arith.addf %29, %31 : vector<5x96xf32>
    %c0_15 = arith.constant 0 : index
    %c0_16 = arith.constant 0 : index
    %33 = vector.load %arg3[%c0_15, %c0_16] : memref<5x32xf32, #tpu.memory_space<vmem>>, vector<5x32xf32>
    %c0_17 = arith.constant 0 : index
    %c0_18 = arith.constant 0 : index
    %34 = vector.load %arg4[%c0_17, %c0_18] : memref<5x32xf32, #tpu.memory_space<vmem>>, vector<5x32xf32>
    %c0_19 = arith.constant 0 : index
    %c0_20 = arith.constant 0 : index
    %35 = vector.load %arg5[%c0_19, %c0_20] : memref<5x32xf32, #tpu.memory_space<vmem>>, vector<5x32xf32>
    %36 = vector.extract_strided_slice %32 {offsets = [0, 0], sizes = [5, 32], strides = [1, 1]} : vector<5x96xf32> to vector<5x32xf32>
    %cst_21 = arith.constant 0.353553385 : f32
    %37 = vector.broadcast %cst_21 : f32 to vector<5x32xf32>
    %38 = arith.mulf %36, %37 : vector<5x32xf32>
    %39 = arith.mulf %38, %33 : vector<5x32xf32>
    %c31_i32 = arith.constant 31 : i32
    %40 = tpu.dynamic_rotate %38 by %c31_i32 dim 1 : vector<5x32xf32>, i32 -> vector<5x32xf32>
    %41 = arith.mulf %40, %34 : vector<5x32xf32>
    %42 = arith.addf %39, %41 : vector<5x32xf32>
    %c1_i32 = arith.constant 1 : i32
    %43 = tpu.dynamic_rotate %38 by %c1_i32 dim 1 : vector<5x32xf32>, i32 -> vector<5x32xf32>
    %44 = arith.mulf %43, %35 : vector<5x32xf32>
    %45 = arith.addf %42, %44 : vector<5x32xf32>
    %46 = arith.truncf %45 : vector<5x32xf32> to vector<5x32xbf16>
    %c0_22 = arith.constant 0 : index
    %c0_23 = arith.constant 0 : index
    %c0_24 = arith.constant 0 : index
    %47 = vector.load %arg10[%c0_22, %c0_23, %c0_24] : memref<1x5x32xbf16, #tpu.memory_space<vmem>>, vector<1x5x32xbf16>
    %48 = vector.shape_cast %47 : vector<1x5x32xbf16> to vector<5x32xbf16>
    %49 = vector.shape_cast %46 : vector<5x32xbf16> to vector<1x5x32xbf16>
    tpu.vector_store %arg10[%c0_22, %c0_23, %c0_24], %49 {strides = array<i32>} : memref<1x5x32xbf16, #tpu.memory_space<vmem>>, vector<1x5x32xbf16>,
    %50 = vector.extract_strided_slice %32 {offsets = [0, 32], sizes = [5, 32], strides = [1, 1]} : vector<5x96xf32> to vector<5x32xf32>
    %51 = arith.mulf %50, %33 : vector<5x32xf32>
    %c31_i32_25 = arith.constant 31 : i32
    %52 = tpu.dynamic_rotate %50 by %c31_i32_25 dim 1 : vector<5x32xf32>, i32 -> vector<5x32xf32>
    %53 = arith.mulf %52, %34 : vector<5x32xf32>
    %54 = arith.addf %51, %53 : vector<5x32xf32>
    %c1_i32_26 = arith.constant 1 : i32
    %55 = tpu.dynamic_rotate %50 by %c1_i32_26 dim 1 : vector<5x32xf32>, i32 -> vector<5x32xf32>
    %56 = arith.mulf %55, %35 : vector<5x32xf32>
    %57 = arith.addf %54, %56 : vector<5x32xf32>
    %58 = arith.truncf %57 : vector<5x32xf32> to vector<5x32xbf16>
    %c0_27 = arith.constant 0 : index
    %c0_28 = arith.constant 0 : index
    %c0_29 = arith.constant 0 : index
    %59 = vector.load %arg11[%c0_27, %c0_28, %c0_29] : memref<1x5x32xbf16, #tpu.memory_space<vmem>>, vector<1x5x32xbf16>
    %60 = vector.shape_cast %59 : vector<1x5x32xbf16> to vector<5x32xbf16>
    %61 = vector.shape_cast %58 : vector<5x32xbf16> to vector<1x5x32xbf16>
    tpu.vector_store %arg11[%c0_27, %c0_28, %c0_29], %61 {strides = array<i32>} : memref<1x5x32xbf16, #tpu.memory_space<vmem>>, vector<1x5x32xbf16>,
    %62 = vector.extract_strided_slice %32 {offsets = [0, 64], sizes = [5, 32], strides = [1, 1]} : vector<5x96xf32> to vector<5x32xf32>
    %63 = arith.truncf %62 : vector<5x32xf32> to vector<5x32xbf16>
    %c0_30 = arith.constant 0 : index
    %c0_31 = arith.constant 0 : index
    %c0_32 = arith.constant 0 : index
    %64 = vector.load %arg12[%c0_30, %c0_31, %c0_32] : memref<1x5x32xbf16, #tpu.memory_space<vmem>>, vector<1x5x32xbf16>
    %65 = vector.shape_cast %64 : vector<1x5x32xbf16> to vector<5x32xbf16>
    %66 = vector.shape_cast %63 : vector<5x32xbf16> to vector<1x5x32xbf16>
    tpu.vector_store %arg12[%c0_30, %c0_31, %c0_32], %66 {strides = array<i32>} : memref<1x5x32xbf16, #tpu.memory_space<vmem>>, vector<1x5x32xbf16>,
    return
  }
  func.func @transform_0(%arg0: i32, %arg1: i32) -> (i32, i32, i32) {
    %c0_i32 = arith.constant 0 : i32
    %c0_i32_0 = arith.constant 0 : i32
    return %arg0, %arg1, %c0_i32 : i32, i32, i32
  }
  func.func @transform_1(%arg0: i32, %arg1: i32) -> (i32, i32) {
    %c0_i32 = arith.constant 0 : i32
    %c0_i32_0 = arith.constant 0 : i32
    return %arg1, %c0_i32 : i32, i32
  }
  func.func @transform_2(%arg0: i32, %arg1: i32) -> (i32, i32) {
    %c0_i32 = arith.constant 0 : i32
    %c0_i32_0 = arith.constant 0 : i32
    return %arg1, %c0_i32 : i32, i32
  }
  func.func @transform_3(%arg0: i32, %arg1: i32) -> (i32, i32) {
    %c0_i32 = arith.constant 0 : i32
    %c0_i32_0 = arith.constant 0 : i32
    return %arg1, %c0_i32 : i32, i32
  }
  func.func @transform_4(%arg0: i32, %arg1: i32) -> (i32, i32) {
    %c0_i32 = arith.constant 0 : i32
    %c0_i32_0 = arith.constant 0 : i32
    %c0_i32_1 = arith.constant 0 : i32
    return %c0_i32, %c0_i32_0 : i32, i32
  }
  func.func @transform_5(%arg0: i32, %arg1: i32) -> (i32, i32) {
    %c0_i32 = arith.constant 0 : i32
    %c0_i32_0 = arith.constant 0 : i32
    %c0_i32_1 = arith.constant 0 : i32
    return %c0_i32, %c0_i32_0 : i32, i32
  }
  func.func @transform_6(%arg0: i32, %arg1: i32) -> (i32, i32) {
    %c0_i32 = arith.constant 0 : i32
    %c0_i32_0 = arith.constant 0 : i32
    %c0_i32_1 = arith.constant 0 : i32
    return %c0_i32, %c0_i32_0 : i32, i32
  }
  func.func @transform_7(%arg0: i32, %arg1: i32) -> (i32, i32) {
    %c0_i32 = arith.constant 0 : i32
    %c0_i32_0 = arith.constant 0 : i32
    %c0_i32_1 = arith.constant 0 : i32
    return %c0_i32, %c0_i32_0 : i32, i32
  }
  func.func @transform_8(%arg0: i32, %arg1: i32) -> (i32, i32, i32) {
    %c0_i32 = arith.constant 0 : i32
    %c0_i32_0 = arith.constant 0 : i32
    return %arg0, %arg1, %c0_i32 : i32, i32, i32
  }
  func.func @transform_9(%arg0: i32, %arg1: i32) -> (i32, i32, i32) {
    %c0_i32 = arith.constant 0 : i32
    %c0_i32_0 = arith.constant 0 : i32
    return %arg0, %arg1, %c0_i32 : i32, i32, i32
  }
  func.func @transform_10(%arg0: i32, %arg1: i32) -> (i32, i32, i32) {
    %c0_i32 = arith.constant 0 : i32
    %c0_i32_0 = arith.constant 0 : i32
    return %arg0, %arg1, %c0_i32 : i32, i32, i32
  }
}

module attributes {stable_mosaic.version = 11 : i64} {
  func.func @_attn_core_kernel(%arg0: i32, %arg1: i32, %arg2: memref<1x5x32xbf16, #tpu.memory_space<vmem>>, %arg3: memref<1x5x32xbf16, #tpu.memory_space<vmem>>, %arg4: memref<1x5x32xbf16, #tpu.memory_space<vmem>>, %arg5: memref<1x5x32xbf16, #tpu.memory_space<vmem>>, %arg6: memref<32x32xbf16, #tpu.memory_space<vmem>>, %arg7: memref<1x32xf32, #tpu.memory_space<vmem>>, %arg8: memref<1x5x32xbf16, #tpu.memory_space<vmem>>) attributes {dimension_semantics = [#tpu.dimension_semantics<parallel>, #tpu.dimension_semantics<parallel>], iteration_bounds = array<i64: 2, 1>, scalar_prefetch = 0 : i64, scratch_operands = 0 : i64, tpu.core_type = #tpu.core_type<tc>, window_params = [{transform_indices = @transform_0, window_bounds = array<i64: 1, 5, 32>}, {transform_indices = @transform_1, window_bounds = array<i64: 1, 5, 32>}, {transform_indices = @transform_2, window_bounds = array<i64: 1, 5, 32>}, {transform_indices = @transform_3, window_bounds = array<i64: 1, 5, 32>}, {pipeline_mode = #tpu.pipeline_mode<synchronous>, transform_indices = @transform_4, window_bounds = array<i64: 32, 32>}, {pipeline_mode = #tpu.pipeline_mode<synchronous>, transform_indices = @transform_5, window_bounds = array<i64: 1, 32>}, {transform_indices = @transform_6, window_bounds = array<i64: 1, 5, 32>}]} {
    %c0 = arith.constant 0 : index
    %c0_0 = arith.constant 0 : index
    %c0_1 = arith.constant 0 : index
    %0 = vector.load %arg3[%c0, %c0_0, %c0_1] : memref<1x5x32xbf16, #tpu.memory_space<vmem>>, vector<1x5x32xbf16>
    %1 = vector.shape_cast %0 : vector<1x5x32xbf16> to vector<5x32xbf16>
    %2 = vector.shape_cast %1 : vector<5x32xbf16> to vector<5x4x8xbf16>
    %c0_2 = arith.constant 0 : index
    %c0_3 = arith.constant 0 : index
    %c0_4 = arith.constant 0 : index
    %3 = vector.load %arg4[%c0_2, %c0_3, %c0_4] : memref<1x5x32xbf16, #tpu.memory_space<vmem>>, vector<1x5x32xbf16>
    %4 = vector.shape_cast %3 : vector<1x5x32xbf16> to vector<5x32xbf16>
    %5 = vector.shape_cast %4 : vector<5x32xbf16> to vector<5x4x8xbf16>
    %c0_5 = arith.constant 0 : index
    %c0_6 = arith.constant 0 : index
    %c0_7 = arith.constant 0 : index
    %6 = vector.load %arg5[%c0_5, %c0_6, %c0_7] : memref<1x5x32xbf16, #tpu.memory_space<vmem>>, vector<1x5x32xbf16>
    %7 = vector.shape_cast %6 : vector<1x5x32xbf16> to vector<5x32xbf16>
    %8 = vector.shape_cast %7 : vector<5x32xbf16> to vector<5x4x8xbf16>
    "tpu.trace_start"() <{level = 10 : i32, message = "qhd,khd->hqk"}> : () -> ()
    %cst = arith.constant dense<0.000000e+00> : vector<4x5x5xf32>
    %9 = tpu.matmul %2, %5, %cst {dimension_numbers = #tpu.dot_dimension_numbers<[2], [2], [0], [0], [0, 1, 0, 0, 1, 0], [1], [1]>} : vector<5x4x8xbf16>, vector<5x4x8xbf16>, vector<4x5x5xf32> -> vector<4x5x5xf32>
    "tpu.trace_stop"() : () -> ()
    %cst_8 = arith.constant dense<0xFF800000> : vector<4x5xf32>
    %10 = vector.multi_reduction <maximumf>, %9, %cst_8 [2] : vector<4x5x5xf32> to vector<4x5xf32>
    %11 = vector.shape_cast %10 : vector<4x5xf32> to vector<4x5x1xf32>
    %12 = vector.broadcast %11 : vector<4x5x1xf32> to vector<4x5x5xf32>
    %13 = arith.subf %9, %12 : vector<4x5x5xf32>
    %14 = arith.truncf %13 : vector<4x5x5xf32> to vector<4x5x5xbf16>
    %15 = math.exp %14 : vector<4x5x5xbf16>
    %16 = arith.extf %15 : vector<4x5x5xbf16> to vector<4x5x5xf32>
    %cst_9 = arith.constant dense<0.000000e+00> : vector<4x5xf32>
    %17 = vector.multi_reduction <add>, %16, %cst_9 [2] : vector<4x5x5xf32> to vector<4x5xf32>
    %18 = vector.shape_cast %17 : vector<4x5xf32> to vector<4x5x1xf32>
    "tpu.trace_start"() <{level = 10 : i32, message = "hqk,khd->qhd"}> : () -> ()
    %cst_10 = arith.constant dense<0.000000e+00> : vector<4x8x5xf32>
    %19 = tpu.matmul %8, %15, %cst_10 {dimension_numbers = #tpu.dot_dimension_numbers<[0], [2], [2], [1], [0, 1, 0, 2, 1, 1], [1], [0]>} : vector<5x4x8xbf16>, vector<4x5x5xbf16>, vector<4x8x5xf32> -> vector<4x8x5xf32>
    %20 = tpu.transpose %19, [2, 0, 1] : vector<4x8x5xf32> -> vector<5x4x8xf32>
    "tpu.trace_stop"() : () -> ()
    %21 = vector.shape_cast %18 : vector<4x5x1xf32> to vector<4x5xf32>
    %22 = tpu.reciprocal %21 {approx = true} : vector<4x5xf32> -> vector<4x5xf32>
    %23 = tpu.transpose %22, [1, 0] : vector<4x5xf32> -> vector<5x4xf32>
    %24 = vector.shape_cast %23 : vector<5x4xf32> to vector<5x4x1xf32>
    %25 = vector.broadcast %24 : vector<5x4x1xf32> to vector<5x4x8xf32>
    %26 = arith.mulf %20, %25 : vector<5x4x8xf32>
    %27 = vector.shape_cast %26 : vector<5x4x8xf32> to vector<5x32xf32>
    %28 = arith.truncf %27 : vector<5x32xf32> to vector<5x32xbf16>
    %c0_11 = arith.constant 0 : index
    %c0_12 = arith.constant 0 : index
    %c0_13 = arith.constant 0 : index
    %29 = vector.load %arg2[%c0_11, %c0_12, %c0_13] : memref<1x5x32xbf16, #tpu.memory_space<vmem>>, vector<1x5x32xbf16>
    %30 = vector.shape_cast %29 : vector<1x5x32xbf16> to vector<5x32xbf16>
    %31 = arith.extf %30 : vector<5x32xbf16> to vector<5x32xf32>
    %c0_14 = arith.constant 0 : index
    %c0_15 = arith.constant 0 : index
    %32 = vector.load %arg6[%c0_14, %c0_15] : memref<32x32xbf16, #tpu.memory_space<vmem>>, vector<32x32xbf16>
    %cst_16 = arith.constant dense<0.000000e+00> : vector<5x32xf32>
    %33 = tpu.matmul %28, %32, %cst_16 {dimension_numbers = #tpu.dot_dimension_numbers<[1], [0], [0], [1], [0, 0, 1, 1], [], []>} : vector<5x32xbf16>, vector<32x32xbf16>, vector<5x32xf32> -> vector<5x32xf32>
    %34 = arith.addf %31, %33 : vector<5x32xf32>
    %c0_17 = arith.constant 0 : index
    %c0_18 = arith.constant 0 : index
    %35 = vector.load %arg7[%c0_17, %c0_18] : memref<1x32xf32, #tpu.memory_space<vmem>>, vector<1x32xf32>
    %36 = vector.broadcast %35 : vector<1x32xf32> to vector<5x32xf32>
    %37 = arith.addf %34, %36 : vector<5x32xf32>
    %38 = arith.truncf %37 : vector<5x32xf32> to vector<5x32xbf16>
    %c0_19 = arith.constant 0 : index
    %c0_20 = arith.constant 0 : index
    %c0_21 = arith.constant 0 : index
    %39 = vector.load %arg8[%c0_19, %c0_20, %c0_21] : memref<1x5x32xbf16, #tpu.memory_space<vmem>>, vector<1x5x32xbf16>
    %40 = vector.shape_cast %39 : vector<1x5x32xbf16> to vector<5x32xbf16>
    %41 = vector.shape_cast %38 : vector<5x32xbf16> to vector<1x5x32xbf16>
    tpu.vector_store %arg8[%c0_19, %c0_20, %c0_21], %41 {strides = array<i32>} : memref<1x5x32xbf16, #tpu.memory_space<vmem>>, vector<1x5x32xbf16>,
    return
  }
  func.func @transform_0(%arg0: i32, %arg1: i32) -> (i32, i32, i32) {
    %c0_i32 = arith.constant 0 : i32
    %c0_i32_0 = arith.constant 0 : i32
    return %arg0, %arg1, %c0_i32 : i32, i32, i32
  }
  func.func @transform_1(%arg0: i32, %arg1: i32) -> (i32, i32, i32) {
    %c0_i32 = arith.constant 0 : i32
    %c0_i32_0 = arith.constant 0 : i32
    return %arg0, %arg1, %c0_i32 : i32, i32, i32
  }
  func.func @transform_2(%arg0: i32, %arg1: i32) -> (i32, i32, i32) {
    %c0_i32 = arith.constant 0 : i32
    %c0_i32_0 = arith.constant 0 : i32
    %c0_i32_1 = arith.constant 0 : i32
    return %arg0, %c0_i32, %c0_i32_0 : i32, i32, i32
  }
  func.func @transform_3(%arg0: i32, %arg1: i32) -> (i32, i32, i32) {
    %c0_i32 = arith.constant 0 : i32
    %c0_i32_0 = arith.constant 0 : i32
    %c0_i32_1 = arith.constant 0 : i32
    return %arg0, %c0_i32, %c0_i32_0 : i32, i32, i32
  }
  func.func @transform_4(%arg0: i32, %arg1: i32) -> (i32, i32) {
    %c0_i32 = arith.constant 0 : i32
    %c0_i32_0 = arith.constant 0 : i32
    %c0_i32_1 = arith.constant 0 : i32
    return %c0_i32, %c0_i32_0 : i32, i32
  }
  func.func @transform_5(%arg0: i32, %arg1: i32) -> (i32, i32) {
    %c0_i32 = arith.constant 0 : i32
    %c0_i32_0 = arith.constant 0 : i32
    %c0_i32_1 = arith.constant 0 : i32
    return %c0_i32, %c0_i32_0 : i32, i32
  }
  func.func @transform_6(%arg0: i32, %arg1: i32) -> (i32, i32, i32) {
    %c0_i32 = arith.constant 0 : i32
    %c0_i32_0 = arith.constant 0 : i32
    return %arg0, %arg1, %c0_i32 : i32, i32, i32
  }
}

module attributes {stable_mosaic.version = 11 : i64} {
  func.func @_mlp_kernel(%arg0: i32, %arg1: memref<10x32xbf16, #tpu.memory_space<vmem>>, %arg2: memref<1x32xf32, #tpu.memory_space<vmem>>, %arg3: memref<1x32xf32, #tpu.memory_space<vmem>>, %arg4: memref<32x128xbf16, #tpu.memory_space<vmem>>, %arg5: memref<1x128xf32, #tpu.memory_space<vmem>>, %arg6: memref<128x32xbf16, #tpu.memory_space<vmem>>, %arg7: memref<1x32xf32, #tpu.memory_space<vmem>>, %arg8: memref<1x32xf32, #tpu.memory_space<vmem>>, %arg9: memref<1x32xf32, #tpu.memory_space<vmem>>, %arg10: memref<10x32xbf16, #tpu.memory_space<vmem>>, %arg11: memref<10x32xbf16, #tpu.memory_space<vmem>>) attributes {dimension_semantics = [#tpu.dimension_semantics<parallel>], iteration_bounds = array<i64: 1>, scalar_prefetch = 0 : i64, scratch_operands = 0 : i64, tpu.core_type = #tpu.core_type<tc>, window_params = [{transform_indices = @transform_0, window_bounds = array<i64: 10, 32>}, {pipeline_mode = #tpu.pipeline_mode<synchronous>, transform_indices = @transform_1, window_bounds = array<i64: 1, 32>}, {pipeline_mode = #tpu.pipeline_mode<synchronous>, transform_indices = @transform_2, window_bounds = array<i64: 1, 32>}, {pipeline_mode = #tpu.pipeline_mode<synchronous>, transform_indices = @transform_3, window_bounds = array<i64: 32, 128>}, {pipeline_mode = #tpu.pipeline_mode<synchronous>, transform_indices = @transform_4, window_bounds = array<i64: 1, 128>}, {pipeline_mode = #tpu.pipeline_mode<synchronous>, transform_indices = @transform_5, window_bounds = array<i64: 128, 32>}, {pipeline_mode = #tpu.pipeline_mode<synchronous>, transform_indices = @transform_6, window_bounds = array<i64: 1, 32>}, {pipeline_mode = #tpu.pipeline_mode<synchronous>, transform_indices = @transform_7, window_bounds = array<i64: 1, 32>}, {pipeline_mode = #tpu.pipeline_mode<synchronous>, transform_indices = @transform_8, window_bounds = array<i64: 1, 32>}, {transform_indices = @transform_9, window_bounds = array<i64: 10, 32>}, {transform_indices = @transform_10, window_bounds = array<i64: 10, 32>}]} {
    %c0 = arith.constant 0 : index
    %c0_0 = arith.constant 0 : index
    %0 = vector.load %arg1[%c0, %c0_0] : memref<10x32xbf16, #tpu.memory_space<vmem>>, vector<10x32xbf16>
    %1 = arith.extf %0 : vector<10x32xbf16> to vector<10x32xf32>
    %c0_1 = arith.constant 0 : index
    %c0_2 = arith.constant 0 : index
    %2 = vector.load %arg2[%c0_1, %c0_2] : memref<1x32xf32, #tpu.memory_space<vmem>>, vector<1x32xf32>
    %c0_3 = arith.constant 0 : index
    %c0_4 = arith.constant 0 : index
    %3 = vector.load %arg3[%c0_3, %c0_4] : memref<1x32xf32, #tpu.memory_space<vmem>>, vector<1x32xf32>
    %cst = arith.constant dense<0.000000e+00> : vector<10xf32>
    %4 = vector.multi_reduction <add>, %1, %cst [1] : vector<10x32xf32> to vector<10xf32>
    %5 = vector.shape_cast %4 : vector<10xf32> to vector<10x1xf32>
    %cst_5 = arith.constant 3.200000e+01 : f32
    %6 = vector.broadcast %cst_5 : f32 to vector<10x1xf32>
    %7 = arith.divf %5, %6 : vector<10x1xf32>
    %8 = vector.broadcast %7 : vector<10x1xf32> to vector<10x32xf32>
    %9 = arith.subf %1, %8 : vector<10x32xf32>
    %10 = arith.mulf %9, %9 : vector<10x32xf32>
    %cst_6 = arith.constant dense<0.000000e+00> : vector<10xf32>
    %11 = vector.multi_reduction <add>, %10, %cst_6 [1] : vector<10x32xf32> to vector<10xf32>
    %12 = vector.shape_cast %11 : vector<10xf32> to vector<10x1xf32>
    %cst_7 = arith.constant 3.200000e+01 : f32
    %13 = vector.broadcast %cst_7 : f32 to vector<10x1xf32>
    %14 = arith.divf %12, %13 : vector<10x1xf32>
    %15 = vector.broadcast %7 : vector<10x1xf32> to vector<10x32xf32>
    %16 = arith.subf %1, %15 : vector<10x32xf32>
    %cst_8 = arith.constant 9.99999997E-7 : f32
    %17 = vector.broadcast %cst_8 : f32 to vector<10x1xf32>
    %18 = arith.addf %14, %17 : vector<10x1xf32>
    %19 = math.rsqrt %18 : vector<10x1xf32>
    %20 = vector.broadcast %19 : vector<10x1xf32> to vector<10x32xf32>
    %21 = arith.mulf %16, %20 : vector<10x32xf32>
    %22 = vector.broadcast %2 : vector<1x32xf32> to vector<10x32xf32>
    %23 = arith.mulf %21, %22 : vector<10x32xf32>
    %24 = vector.broadcast %3 : vector<1x32xf32> to vector<10x32xf32>
    %25 = arith.addf %23, %24 : vector<10x32xf32>
    %26 = arith.truncf %25 : vector<10x32xf32> to vector<10x32xbf16>
    %c0_9 = arith.constant 0 : index
    %c0_10 = arith.constant 0 : index
    %27 = vector.load %arg4[%c0_9, %c0_10] : memref<32x128xbf16, #tpu.memory_space<vmem>>, vector<32x128xbf16>
    %cst_11 = arith.constant dense<0.000000e+00> : vector<10x128xf32>
    %28 = tpu.matmul %26, %27, %cst_11 {dimension_numbers = #tpu.dot_dimension_numbers<[1], [0], [0], [1], [0, 0, 1, 1], [], []>} : vector<10x32xbf16>, vector<32x128xbf16>, vector<10x128xf32> -> vector<10x128xf32>
    %c0_12 = arith.constant 0 : index
    %c0_13 = arith.constant 0 : index
    %29 = vector.load %arg5[%c0_12, %c0_13] : memref<1x128xf32, #tpu.memory_space<vmem>>, vector<1x128xf32>
    %30 = vector.broadcast %29 : vector<1x128xf32> to vector<10x128xf32>
    %31 = arith.addf %28, %30 : vector<10x128xf32>
    %32 = arith.mulf %31, %31 : vector<10x128xf32>
    %33 = arith.mulf %31, %32 : vector<10x128xf32>
    %cst_14 = arith.constant 4.471500e-02 : f32
    %34 = vector.broadcast %cst_14 : f32 to vector<10x128xf32>
    %35 = arith.mulf %34, %33 : vector<10x128xf32>
    %36 = arith.addf %31, %35 : vector<10x128xf32>
    %cst_15 = arith.constant 0.797884583 : f32
    %37 = vector.broadcast %cst_15 : f32 to vector<10x128xf32>
    %38 = arith.mulf %37, %36 : vector<10x128xf32>
    %39 = math.tanh %38 : vector<10x128xf32>
    %cst_16 = arith.constant 1.000000e+00 : f32
    %40 = vector.broadcast %cst_16 : f32 to vector<10x128xf32>
    %41 = arith.addf %40, %39 : vector<10x128xf32>
    %cst_17 = arith.constant 5.000000e-01 : f32
    %42 = vector.broadcast %cst_17 : f32 to vector<10x128xf32>
    %43 = arith.mulf %42, %41 : vector<10x128xf32>
    %44 = arith.mulf %31, %43 : vector<10x128xf32>
    %45 = arith.truncf %44 : vector<10x128xf32> to vector<10x128xbf16>
    %c0_18 = arith.constant 0 : index
    %c0_19 = arith.constant 0 : index
    %46 = vector.load %arg6[%c0_18, %c0_19] : memref<128x32xbf16, #tpu.memory_space<vmem>>, vector<128x32xbf16>
    %cst_20 = arith.constant dense<0.000000e+00> : vector<10x32xf32>
    %47 = tpu.matmul %45, %46, %cst_20 {dimension_numbers = #tpu.dot_dimension_numbers<[1], [0], [0], [1], [0, 0, 1, 1], [], []>} : vector<10x128xbf16>, vector<128x32xbf16>, vector<10x32xf32> -> vector<10x32xf32>
    %c0_21 = arith.constant 0 : index
    %c0_22 = arith.constant 0 : index
    %48 = vector.load %arg7[%c0_21, %c0_22] : memref<1x32xf32, #tpu.memory_space<vmem>>, vector<1x32xf32>
    %49 = vector.broadcast %48 : vector<1x32xf32> to vector<10x32xf32>
    %50 = arith.addf %47, %49 : vector<10x32xf32>
    %51 = arith.addf %1, %50 : vector<10x32xf32>
    %52 = arith.truncf %51 : vector<10x32xf32> to vector<10x32xbf16>
    %c0_23 = arith.constant 0 : index
    %c0_24 = arith.constant 0 : index
    %53 = vector.load %arg10[%c0_23, %c0_24] : memref<10x32xbf16, #tpu.memory_space<vmem>>, vector<10x32xbf16>
    tpu.vector_store %arg10[%c0_23, %c0_24], %52 {strides = array<i32>} : memref<10x32xbf16, #tpu.memory_space<vmem>>, vector<10x32xbf16>,
    %c0_25 = arith.constant 0 : index
    %c0_26 = arith.constant 0 : index
    %54 = vector.load %arg8[%c0_25, %c0_26] : memref<1x32xf32, #tpu.memory_space<vmem>>, vector<1x32xf32>
    %c0_27 = arith.constant 0 : index
    %c0_28 = arith.constant 0 : index
    %55 = vector.load %arg9[%c0_27, %c0_28] : memref<1x32xf32, #tpu.memory_space<vmem>>, vector<1x32xf32>
    %cst_29 = arith.constant dense<0.000000e+00> : vector<10xf32>
    %56 = vector.multi_reduction <add>, %51, %cst_29 [1] : vector<10x32xf32> to vector<10xf32>
    %57 = vector.shape_cast %56 : vector<10xf32> to vector<10x1xf32>
    %cst_30 = arith.constant 3.200000e+01 : f32
    %58 = vector.broadcast %cst_30 : f32 to vector<10x1xf32>
    %59 = arith.divf %57, %58 : vector<10x1xf32>
    %60 = vector.broadcast %59 : vector<10x1xf32> to vector<10x32xf32>
    %61 = arith.subf %51, %60 : vector<10x32xf32>
    %62 = arith.mulf %61, %61 : vector<10x32xf32>
    %cst_31 = arith.constant dense<0.000000e+00> : vector<10xf32>
    %63 = vector.multi_reduction <add>, %62, %cst_31 [1] : vector<10x32xf32> to vector<10xf32>
    %64 = vector.shape_cast %63 : vector<10xf32> to vector<10x1xf32>
    %cst_32 = arith.constant 3.200000e+01 : f32
    %65 = vector.broadcast %cst_32 : f32 to vector<10x1xf32>
    %66 = arith.divf %64, %65 : vector<10x1xf32>
    %67 = vector.broadcast %59 : vector<10x1xf32> to vector<10x32xf32>
    %68 = arith.subf %51, %67 : vector<10x32xf32>
    %cst_33 = arith.constant 9.99999997E-7 : f32
    %69 = vector.broadcast %cst_33 : f32 to vector<10x1xf32>
    %70 = arith.addf %66, %69 : vector<10x1xf32>
    %71 = math.rsqrt %70 : vector<10x1xf32>
    %72 = vector.broadcast %71 : vector<10x1xf32> to vector<10x32xf32>
    %73 = arith.mulf %68, %72 : vector<10x32xf32>
    %74 = vector.broadcast %54 : vector<1x32xf32> to vector<10x32xf32>
    %75 = arith.mulf %73, %74 : vector<10x32xf32>
    %76 = vector.broadcast %55 : vector<1x32xf32> to vector<10x32xf32>
    %77 = arith.addf %75, %76 : vector<10x32xf32>
    %78 = arith.truncf %77 : vector<10x32xf32> to vector<10x32xbf16>
    %c0_34 = arith.constant 0 : index
    %c0_35 = arith.constant 0 : index
    %79 = vector.load %arg11[%c0_34, %c0_35] : memref<10x32xbf16, #tpu.memory_space<vmem>>, vector<10x32xbf16>
    tpu.vector_store %arg11[%c0_34, %c0_35], %78 {strides = array<i32>} : memref<10x32xbf16, #tpu.memory_space<vmem>>, vector<10x32xbf16>,
    return
  }
  func.func @transform_0(%arg0: i32) -> (i32, i32) {
    %c0_i32 = arith.constant 0 : i32
    %c0_i32_0 = arith.constant 0 : i32
    return %arg0, %c0_i32 : i32, i32
  }
  func.func @transform_1(%arg0: i32) -> (i32, i32) {
    %c0_i32 = arith.constant 0 : i32
    %c0_i32_0 = arith.constant 0 : i32
    %c0_i32_1 = arith.constant 0 : i32
    return %c0_i32, %c0_i32_0 : i32, i32
  }
  func.func @transform_2(%arg0: i32) -> (i32, i32) {
    %c0_i32 = arith.constant 0 : i32
    %c0_i32_0 = arith.constant 0 : i32
    %c0_i32_1 = arith.constant 0 : i32
    return %c0_i32, %c0_i32_0 : i32, i32
  }
  func.func @transform_3(%arg0: i32) -> (i32, i32) {
    %c0_i32 = arith.constant 0 : i32
    %c0_i32_0 = arith.constant 0 : i32
    %c0_i32_1 = arith.constant 0 : i32
    return %c0_i32, %c0_i32_0 : i32, i32
  }
  func.func @transform_4(%arg0: i32) -> (i32, i32) {
    %c0_i32 = arith.constant 0 : i32
    %c0_i32_0 = arith.constant 0 : i32
    %c0_i32_1 = arith.constant 0 : i32
    return %c0_i32, %c0_i32_0 : i32, i32
  }
  func.func @transform_5(%arg0: i32) -> (i32, i32) {
    %c0_i32 = arith.constant 0 : i32
    %c0_i32_0 = arith.constant 0 : i32
    %c0_i32_1 = arith.constant 0 : i32
    return %c0_i32, %c0_i32_0 : i32, i32
  }
  func.func @transform_6(%arg0: i32) -> (i32, i32) {
    %c0_i32 = arith.constant 0 : i32
    %c0_i32_0 = arith.constant 0 : i32
    %c0_i32_1 = arith.constant 0 : i32
    return %c0_i32, %c0_i32_0 : i32, i32
  }
  func.func @transform_7(%arg0: i32) -> (i32, i32) {
    %c0_i32 = arith.constant 0 : i32
    %c0_i32_0 = arith.constant 0 : i32
    %c0_i32_1 = arith.constant 0 : i32
    return %c0_i32, %c0_i32_0 : i32, i32
  }
  func.func @transform_8(%arg0: i32) -> (i32, i32) {
    %c0_i32 = arith.constant 0 : i32
    %c0_i32_0 = arith.constant 0 : i32
    %c0_i32_1 = arith.constant 0 : i32
    return %c0_i32, %c0_i32_0 : i32, i32
  }
  func.func @transform_9(%arg0: i32) -> (i32, i32) {
    %c0_i32 = arith.constant 0 : i32
    %c0_i32_0 = arith.constant 0 : i32
    return %arg0, %c0_i32 : i32, i32
  }
  func.func @transform_10(%arg0: i32) -> (i32, i32) {
    %c0_i32 = arith.constant 0 : i32
    %c0_i32_0 = arith.constant 0 : i32
    return %arg0, %c0_i32 : i32, i32
  }
}

module attributes {stable_mosaic.version = 11 : i64} {
  func.func @_mlp_kernel(%arg0: i32, %arg1: memref<10x32xbf16, #tpu.memory_space<vmem>>, %arg2: memref<1x32xf32, #tpu.memory_space<vmem>>, %arg3: memref<1x32xf32, #tpu.memory_space<vmem>>, %arg4: memref<32x128xbf16, #tpu.memory_space<vmem>>, %arg5: memref<1x128xf32, #tpu.memory_space<vmem>>, %arg6: memref<128x32xbf16, #tpu.memory_space<vmem>>, %arg7: memref<1x32xf32, #tpu.memory_space<vmem>>, %arg8: memref<1x32xf32, #tpu.memory_space<vmem>>, %arg9: memref<1x32xf32, #tpu.memory_space<vmem>>, %arg10: memref<10x32xbf16, #tpu.memory_space<vmem>>, %arg11: memref<10x32xbf16, #tpu.memory_space<vmem>>) attributes {dimension_semantics = [#tpu.dimension_semantics<parallel>], iteration_bounds = array<i64: 1>, scalar_prefetch = 0 : i64, scratch_operands = 0 : i64, tpu.core_type = #tpu.core_type<tc>, window_params = [{transform_indices = @transform_0, window_bounds = array<i64: 10, 32>}, {pipeline_mode = #tpu.pipeline_mode<synchronous>, transform_indices = @transform_1, window_bounds = array<i64: 1, 32>}, {pipeline_mode = #tpu.pipeline_mode<synchronous>, transform_indices = @transform_2, window_bounds = array<i64: 1, 32>}, {pipeline_mode = #tpu.pipeline_mode<synchronous>, transform_indices = @transform_3, window_bounds = array<i64: 32, 128>}, {pipeline_mode = #tpu.pipeline_mode<synchronous>, transform_indices = @transform_4, window_bounds = array<i64: 1, 128>}, {pipeline_mode = #tpu.pipeline_mode<synchronous>, transform_indices = @transform_5, window_bounds = array<i64: 128, 32>}, {pipeline_mode = #tpu.pipeline_mode<synchronous>, transform_indices = @transform_6, window_bounds = array<i64: 1, 32>}, {pipeline_mode = #tpu.pipeline_mode<synchronous>, transform_indices = @transform_7, window_bounds = array<i64: 1, 32>}, {pipeline_mode = #tpu.pipeline_mode<synchronous>, transform_indices = @transform_8, window_bounds = array<i64: 1, 32>}, {transform_indices = @transform_9, window_bounds = array<i64: 10, 32>}, {transform_indices = @transform_10, window_bounds = array<i64: 10, 32>}]} {
    %c0 = arith.constant 0 : index
    %c0_0 = arith.constant 0 : index
    %0 = vector.load %arg1[%c0, %c0_0] : memref<10x32xbf16, #tpu.memory_space<vmem>>, vector<10x32xbf16>
    %1 = arith.extf %0 : vector<10x32xbf16> to vector<10x32xf32>
    %c0_1 = arith.constant 0 : index
    %c0_2 = arith.constant 0 : index
    %2 = vector.load %arg2[%c0_1, %c0_2] : memref<1x32xf32, #tpu.memory_space<vmem>>, vector<1x32xf32>
    %c0_3 = arith.constant 0 : index
    %c0_4 = arith.constant 0 : index
    %3 = vector.load %arg3[%c0_3, %c0_4] : memref<1x32xf32, #tpu.memory_space<vmem>>, vector<1x32xf32>
    %cst = arith.constant dense<0.000000e+00> : vector<10xf32>
    %4 = vector.multi_reduction <add>, %1, %cst [1] : vector<10x32xf32> to vector<10xf32>
    %5 = vector.shape_cast %4 : vector<10xf32> to vector<10x1xf32>
    %cst_5 = arith.constant 3.200000e+01 : f32
    %6 = vector.broadcast %cst_5 : f32 to vector<10x1xf32>
    %7 = arith.divf %5, %6 : vector<10x1xf32>
    %8 = vector.broadcast %7 : vector<10x1xf32> to vector<10x32xf32>
    %9 = arith.subf %1, %8 : vector<10x32xf32>
    %10 = arith.mulf %9, %9 : vector<10x32xf32>
    %cst_6 = arith.constant dense<0.000000e+00> : vector<10xf32>
    %11 = vector.multi_reduction <add>, %10, %cst_6 [1] : vector<10x32xf32> to vector<10xf32>
    %12 = vector.shape_cast %11 : vector<10xf32> to vector<10x1xf32>
    %cst_7 = arith.constant 3.200000e+01 : f32
    %13 = vector.broadcast %cst_7 : f32 to vector<10x1xf32>
    %14 = arith.divf %12, %13 : vector<10x1xf32>
    %15 = vector.broadcast %7 : vector<10x1xf32> to vector<10x32xf32>
    %16 = arith.subf %1, %15 : vector<10x32xf32>
    %cst_8 = arith.constant 9.99999997E-7 : f32
    %17 = vector.broadcast %cst_8 : f32 to vector<10x1xf32>
    %18 = arith.addf %14, %17 : vector<10x1xf32>
    %19 = math.rsqrt %18 : vector<10x1xf32>
    %20 = vector.broadcast %19 : vector<10x1xf32> to vector<10x32xf32>
    %21 = arith.mulf %16, %20 : vector<10x32xf32>
    %22 = vector.broadcast %2 : vector<1x32xf32> to vector<10x32xf32>
    %23 = arith.mulf %21, %22 : vector<10x32xf32>
    %24 = vector.broadcast %3 : vector<1x32xf32> to vector<10x32xf32>
    %25 = arith.addf %23, %24 : vector<10x32xf32>
    %26 = arith.truncf %25 : vector<10x32xf32> to vector<10x32xbf16>
    %c0_9 = arith.constant 0 : index
    %c0_10 = arith.constant 0 : index
    %27 = vector.load %arg4[%c0_9, %c0_10] : memref<32x128xbf16, #tpu.memory_space<vmem>>, vector<32x128xbf16>
    %cst_11 = arith.constant dense<0.000000e+00> : vector<10x128xf32>
    %28 = tpu.matmul %26, %27, %cst_11 {dimension_numbers = #tpu.dot_dimension_numbers<[1], [0], [0], [1], [0, 0, 1, 1], [], []>} : vector<10x32xbf16>, vector<32x128xbf16>, vector<10x128xf32> -> vector<10x128xf32>
    %c0_12 = arith.constant 0 : index
    %c0_13 = arith.constant 0 : index
    %29 = vector.load %arg5[%c0_12, %c0_13] : memref<1x128xf32, #tpu.memory_space<vmem>>, vector<1x128xf32>
    %30 = vector.broadcast %29 : vector<1x128xf32> to vector<10x128xf32>
    %31 = arith.addf %28, %30 : vector<10x128xf32>
    %32 = arith.mulf %31, %31 : vector<10x128xf32>
    %33 = arith.mulf %31, %32 : vector<10x128xf32>
    %cst_14 = arith.constant 4.471500e-02 : f32
    %34 = vector.broadcast %cst_14 : f32 to vector<10x128xf32>
    %35 = arith.mulf %34, %33 : vector<10x128xf32>
    %36 = arith.addf %31, %35 : vector<10x128xf32>
    %cst_15 = arith.constant 0.797884583 : f32
    %37 = vector.broadcast %cst_15 : f32 to vector<10x128xf32>
    %38 = arith.mulf %37, %36 : vector<10x128xf32>
    %39 = math.tanh %38 : vector<10x128xf32>
    %cst_16 = arith.constant 1.000000e+00 : f32
    %40 = vector.broadcast %cst_16 : f32 to vector<10x128xf32>
    %41 = arith.addf %40, %39 : vector<10x128xf32>
    %cst_17 = arith.constant 5.000000e-01 : f32
    %42 = vector.broadcast %cst_17 : f32 to vector<10x128xf32>
    %43 = arith.mulf %42, %41 : vector<10x128xf32>
    %44 = arith.mulf %31, %43 : vector<10x128xf32>
    %45 = arith.truncf %44 : vector<10x128xf32> to vector<10x128xbf16>
    %c0_18 = arith.constant 0 : index
    %c0_19 = arith.constant 0 : index
    %46 = vector.load %arg6[%c0_18, %c0_19] : memref<128x32xbf16, #tpu.memory_space<vmem>>, vector<128x32xbf16>
    %cst_20 = arith.constant dense<0.000000e+00> : vector<10x32xf32>
    %47 = tpu.matmul %45, %46, %cst_20 {dimension_numbers = #tpu.dot_dimension_numbers<[1], [0], [0], [1], [0, 0, 1, 1], [], []>} : vector<10x128xbf16>, vector<128x32xbf16>, vector<10x32xf32> -> vector<10x32xf32>
    %c0_21 = arith.constant 0 : index
    %c0_22 = arith.constant 0 : index
    %48 = vector.load %arg7[%c0_21, %c0_22] : memref<1x32xf32, #tpu.memory_space<vmem>>, vector<1x32xf32>
    %49 = vector.broadcast %48 : vector<1x32xf32> to vector<10x32xf32>
    %50 = arith.addf %47, %49 : vector<10x32xf32>
    %51 = arith.addf %1, %50 : vector<10x32xf32>
    %52 = arith.truncf %51 : vector<10x32xf32> to vector<10x32xbf16>
    %c0_23 = arith.constant 0 : index
    %c0_24 = arith.constant 0 : index
    %53 = vector.load %arg10[%c0_23, %c0_24] : memref<10x32xbf16, #tpu.memory_space<vmem>>, vector<10x32xbf16>
    tpu.vector_store %arg10[%c0_23, %c0_24], %52 {strides = array<i32>} : memref<10x32xbf16, #tpu.memory_space<vmem>>, vector<10x32xbf16>,
    %c0_25 = arith.constant 0 : index
    %c0_26 = arith.constant 0 : index
    %54 = vector.load %arg8[%c0_25, %c0_26] : memref<1x32xf32, #tpu.memory_space<vmem>>, vector<1x32xf32>
    %c0_27 = arith.constant 0 : index
    %c0_28 = arith.constant 0 : index
    %55 = vector.load %arg9[%c0_27, %c0_28] : memref<1x32xf32, #tpu.memory_space<vmem>>, vector<1x32xf32>
    %cst_29 = arith.constant dense<0.000000e+00> : vector<10xf32>
    %56 = vector.multi_reduction <add>, %51, %cst_29 [1] : vector<10x32xf32> to vector<10xf32>
    %57 = vector.shape_cast %56 : vector<10xf32> to vector<10x1xf32>
    %cst_30 = arith.constant 3.200000e+01 : f32
    %58 = vector.broadcast %cst_30 : f32 to vector<10x1xf32>
    %59 = arith.divf %57, %58 : vector<10x1xf32>
    %60 = vector.broadcast %59 : vector<10x1xf32> to vector<10x32xf32>
    %61 = arith.subf %51, %60 : vector<10x32xf32>
    %62 = arith.mulf %61, %61 : vector<10x32xf32>
    %cst_31 = arith.constant dense<0.000000e+00> : vector<10xf32>
    %63 = vector.multi_reduction <add>, %62, %cst_31 [1] : vector<10x32xf32> to vector<10xf32>
    %64 = vector.shape_cast %63 : vector<10xf32> to vector<10x1xf32>
    %cst_32 = arith.constant 3.200000e+01 : f32
    %65 = vector.broadcast %cst_32 : f32 to vector<10x1xf32>
    %66 = arith.divf %64, %65 : vector<10x1xf32>
    %67 = vector.broadcast %59 : vector<10x1xf32> to vector<10x32xf32>
    %68 = arith.subf %51, %67 : vector<10x32xf32>
    %cst_33 = arith.constant 9.99999997E-7 : f32
    %69 = vector.broadcast %cst_33 : f32 to vector<10x1xf32>
    %70 = arith.addf %66, %69 : vector<10x1xf32>
    %71 = math.rsqrt %70 : vector<10x1xf32>
    %72 = vector.broadcast %71 : vector<10x1xf32> to vector<10x32xf32>
    %73 = arith.mulf %68, %72 : vector<10x32xf32>
    %74 = vector.broadcast %54 : vector<1x32xf32> to vector<10x32xf32>
    %75 = arith.mulf %73, %74 : vector<10x32xf32>
    %76 = vector.broadcast %55 : vector<1x32xf32> to vector<10x32xf32>
    %77 = arith.addf %75, %76 : vector<10x32xf32>
    %78 = arith.truncf %77 : vector<10x32xf32> to vector<10x32xbf16>
    %c0_34 = arith.constant 0 : index
    %c0_35 = arith.constant 0 : index
    %79 = vector.load %arg11[%c0_34, %c0_35] : memref<10x32xbf16, #tpu.memory_space<vmem>>, vector<10x32xbf16>
    tpu.vector_store %arg11[%c0_34, %c0_35], %78 {strides = array<i32>} : memref<10x32xbf16, #tpu.memory_space<vmem>>, vector<10x32xbf16>,
    return
  }
  func.func @transform_0(%arg0: i32) -> (i32, i32) {
    %c0_i32 = arith.constant 0 : i32
    %c0_i32_0 = arith.constant 0 : i32
    return %arg0, %c0_i32 : i32, i32
  }
  func.func @transform_1(%arg0: i32) -> (i32, i32) {
    %c0_i32 = arith.constant 0 : i32
    %c0_i32_0 = arith.constant 0 : i32
    %c0_i32_1 = arith.constant 0 : i32
    return %c0_i32, %c0_i32_0 : i32, i32
  }
  func.func @transform_2(%arg0: i32) -> (i32, i32) {
    %c0_i32 = arith.constant 0 : i32
    %c0_i32_0 = arith.constant 0 : i32
    %c0_i32_1 = arith.constant 0 : i32
    return %c0_i32, %c0_i32_0 : i32, i32
  }
  func.func @transform_3(%arg0: i32) -> (i32, i32) {
    %c0_i32 = arith.constant 0 : i32
    %c0_i32_0 = arith.constant 0 : i32
    %c0_i32_1 = arith.constant 0 : i32
    return %c0_i32, %c0_i32_0 : i32, i32
  }
  func.func @transform_4(%arg0: i32) -> (i32, i32) {
    %c0_i32 = arith.constant 0 : i32
    %c0_i32_0 = arith.constant 0 : i32
    %c0_i32_1 = arith.constant 0 : i32
    return %c0_i32, %c0_i32_0 : i32, i32
  }
  func.func @transform_5(%arg0: i32) -> (i32, i32) {
    %c0_i32 = arith.constant 0 : i32
    %c0_i32_0 = arith.constant 0 : i32
    %c0_i32_1 = arith.constant 0 : i32
    return %c0_i32, %c0_i32_0 : i32, i32
  }
  func.func @transform_6(%arg0: i32) -> (i32, i32) {
    %c0_i32 = arith.constant 0 : i32
    %c0_i32_0 = arith.constant 0 : i32
    %c0_i32_1 = arith.constant 0 : i32
    return %c0_i32, %c0_i32_0 : i32, i32
  }
  func.func @transform_7(%arg0: i32) -> (i32, i32) {
    %c0_i32 = arith.constant 0 : i32
    %c0_i32_0 = arith.constant 0 : i32
    %c0_i32_1 = arith.constant 0 : i32
    return %c0_i32, %c0_i32_0 : i32, i32
  }
  func.func @transform_8(%arg0: i32) -> (i32, i32) {
    %c0_i32 = arith.constant 0 : i32
    %c0_i32_0 = arith.constant 0 : i32
    %c0_i32_1 = arith.constant 0 : i32
    return %c0_i32, %c0_i32_0 : i32, i32
  }
  func.func @transform_9(%arg0: i32) -> (i32, i32) {
    %c0_i32 = arith.constant 0 : i32
    %c0_i32_0 = arith.constant 0 : i32
    return %arg0, %c0_i32 : i32, i32
  }
  func.func @transform_10(%arg0: i32) -> (i32, i32) {
    %c0_i32 = arith.constant 0 : i32
    %c0_i32_0 = arith.constant 0 : i32
    return %arg0, %c0_i32 : i32, i32
  }
}

</mosaic_0001>

<llo_original>
// kernel: mul.15
$region0: #{mul.15}
  %s0 = inlined_call_operand.vmem [shape: f32[2,2], index: 0, kind: input, shape index: {}]
  %s1 = inlined_call_operand.vmem [shape: f32[4], index: 1, kind: output, shape index: {}]
  $region1: #{mul.15} parent=0
    #allocation0 [shape = 'u8[4096]{0}', space=vmem, size = 0x1000, scoped, tag = 'scoped mem for output reshape']
    #allocation1 [shape = 'u8[4096]{0}', space=vmem, size = 0x1000, scoped, tag = 'scoped mem for input reshape']
    %s3 = sshllo.u32 0, 2
    %v4 = vld [vmem:[%s0] sm:%s3]
    %5 = vst [vmem:[#allocation1] sm:%s3] %v4
    %v6 = vld [vmem:[#allocation1] sm:$0x1]
    %vm7 = vcmask 15360
    %8 = vst.msk [vmem:[#allocation0] sm:$0x1] %vm7, %v6
    %s9 = scalar_lea.vmem [#allocation1], 1
    %v10 = vld [vmem:[%s9] sm:$0x1]
    %11 = vrot.lane.b32.xlu0 %v10, 2
    %v12 = vpop.permute.xlu0 %11
    %vm13 = vcmask 31760
    %14 = vst.msk [vmem:[#allocation0] sm:$0x1] %vm13, %v12
    %s16 = sshllo.u32 0, 1
    %v18 = vld [vmem:[#allocation0] sm:%s16]
    %s19 = sshllo.u32 0, 1
    %20 = vst [vmem:[%s1] sm:%s19] %v18

// kernel: tile.14
$region0: #{tile.14}
  %s0 = inlined_call_operand.vmem [shape: f32[5,4,8], index: 0, kind: input, shape index: {}]
  %s1 = inlined_call_operand.vmem [shape: f32[5,32], index: 1, kind: output, shape index: {}]
  $region1: #{tile.14} parent=0
    #allocation0 [shape = 'u8[20480]{0}', space=vmem, size = 0x5000, scoped, tag = 'scoped mem for input reshape']
    %s3 = sshllo.u32 0, 4
    %s4 = smul.addr 4, 4
    %s5 = scalar_lea.vmem %s0, %s4
    %v6 = vld [vmem:[%s5] sm:%s3]
    %s7 = scalar_lea.vmem [#allocation0], 32
    %8 = vst [vmem:[%s7] sm:%s3] %v6
    %s9 = smul.addr 4, 3
    %s10 = scalar_lea.vmem %s0, %s9
    %v11 = vld [vmem:[%s10] sm:%s3]
    %s12 = scalar_lea.vmem [#allocation0], 24
    %13 = vst [vmem:[%s12] sm:%s3] %v11
    %s14 = smul.addr 4, 2
    %s15 = scalar_lea.vmem %s0, %s14
    %v16 = vld [vmem:[%s15] sm:%s3]
    %s17 = scalar_lea.vmem [#allocation0], 16
    %18 = vst [vmem:[%s17] sm:%s3] %v16
    %s19 = scalar_lea.vmem %s0, 4
    %v20 = vld [vmem:[%s19] sm:%s3]
    %s21 = scalar_lea.vmem [#allocation0], 8
    %22 = vst [vmem:[%s21] sm:%s3] %v20
    %v23 = vld [vmem:[%s0] sm:%s3]
    %24 = vst [vmem:[#allocation0] sm:%s3] %v23
    %v25 = vld [vmem:[#allocation0] ss:$8 sm:$0xf]
    %s26 = scalar_lea.vmem [#allocation0], 28
    %v27 = vld [vmem:[%s26] sm:$0x10]
    %vm28 = vcmask 1044484
    %v29 = vsel %vm28, %v27, %v25
    %vm30 = vcmask 64512
    %31 = vst.msk [vmem:[%s1] sm:$0x1f] %vm30, %v29
    %s32 = scalar_lea.vmem [#allocation0], 3
    %v33 = vld [vmem:[%s32] ss:$8 sm:$0xf]
    %s34 = scalar_lea.vmem [#allocation0], 31
    %v35 = vld [vmem:[%s34] sm:$0x10]
    %vm36 = vcmask 1044484
    %v37 = vsel %vm36, %v35, %v33
    %38 = vrot.lane.b32.xlu0 %v37, 24
    %v39 = vpop.permute.xlu0 %38
    %vm40 = vcmask 261312
    %41 = vst.msk [vmem:[%s1] sm:$0x1f] %vm40, %v39
    %s42 = scalar_lea.vmem [#allocation0], 2
    %v43 = vld [vmem:[%s42] ss:$8 sm:$0xf]
    %s44 = scalar_lea.vmem [#allocation0], 30
    %v45 = vld [vmem:[%s44] sm:$0x10]
    %vm46 = vcmask 1044484
    %v47 = vsel %vm46, %v45, %v43
    %48 = vrot.lane.b32.xlu0 %v47, 16
    %v49 = vpop.permute.xlu0 %48
    %vm50 = vcmask 195712
    %51 = vst.msk [vmem:[%s1] sm:$0x1f] %vm50, %v49
    %s52 = scalar_lea.vmem [#allocation0], 1
    %v53 = vld [vmem:[%s52] ss:$8 sm:$0xf]
    %s54 = scalar_lea.vmem [#allocation0], 29
    %v55 = vld [vmem:[%s54] sm:$0x10]
    %vm56 = vcmask 1044484
    %v57 = vsel %vm56, %v55, %v53
    %58 = vrot.lane.b32.xlu0 %v57, 8
    %v59 = vpop.permute.xlu0 %58
    %vm60 = vcmask 130112
    %61 = vst.msk [vmem:[%s1] sm:$0x1f] %vm60, %v59

// kernel: feature_extractor_eva_forward.7
$region0: #{feature_extractor_eva_forward.7}
  #allocation0 [shape = 'u32[]', space=smem, size = 0x4, offset = 0x4, fixed_abs, tag = 'smem constant byte address 0x4 - core index']
  #allocation1 [shape = 'u32[144,128]{1,0:T(1,128)}', space=vmem, size = 0x12000, scoped, tag = 'internal scratch']
  %s0 = inlined_call_operand.vmem [shape: bf16[2,4,192], index: 0, kind: input, shape index: {}]
  %s1 = inlined_call_operand.vmem [shape: bf16[192,32], index: 1, kind: input, shape index: {}]
  %s2 = inlined_call_operand.vmem [shape: f32[1,32], index: 2, kind: input, shape index: {}]
  %s3 = inlined_call_operand.vmem [shape: f32[4,32], index: 3, kind: input, shape index: {}]
  %s4 = inlined_call_operand.vmem [shape: bf16[2,4,32], index: 4, kind: output, shape index: {}]
  %s5 = sld [smem:[#allocation0]]
  $region49: #{feature_extractor_eva_forward.7} parent=0
    _
  %s7 = ssub.s32 1, %s5
  %s8 = scalar_select 0, %s7, %s5
  loop: start=0, step=1, limit=4
  $region2: #{feature_extractor_eva_forward.7} parent=0 // loop_pre_header
    _
  $region3: #{feature_extractor_eva_forward.7} parent=0 // loop_header
    %s10 = sphi 0, %s14
    %p11 = scmp.ge.s32.totalorder %s10, 4
    %s17 = sphi 0, %s29
    %s18 = sphi 0, %s25
    %s19 = sphi 0, %s17
    %s20 = sphi 0, %s18
    %s21 = sphi 0, %s19
    %s22 = sphi 0, %s20
    %s34 = sphi 0, %s36
    %s37 = sphi 0, %s34
    %s38 = sphi 0, %s37
    %s54 = sphi 0, %s38
    %s58 = sphi 0, %s58
    %s60 = sphi 0, %s58
    %s61 = sphi 0, %s60
    %s75 = sphi 0, %s61
    %s79 = sphi 0, %s79
    %s81 = sphi 0, %s79
    %s82 = sphi 0, %s81
    %s96 = sphi 0, %s82
    %s102 = sphi 0, %s104
    %s105 = sphi 0, %s102
    %s106 = sphi 0, %s105
    %s122 = sphi 0, %s106
    %s130 = sphi 0, %s132
    %s133 = sphi 0, %s130
    %s134 = sphi 0, %s133
    %s150 = sphi 0, %s134
  $region4: #{feature_extractor_eva_forward.7} parent=0 // loop_header_branch
    %13 = sbr.rel (%p11) target = $region8
  $region5: #{feature_extractor_eva_forward.7} parent=0 // loop_body
    %s15 = ssub.s32 %s10, 1
    %s16 = ssub.s32 %s10, 2
    %s23 = sadd.s32 1, %s18
    %p24 = scmp.ge.s32.totalorder %s23, 1
    %s25 = scalar_select %p24, 0, %s23
    %s26 = sadd.s32 1, %s17
    %s27 = scalar_select %p24, %s26, %s17
    %p28 = scmp.ge.s32.totalorder %s27, 2
    %s29 = scalar_select %p28, 0, %s27
    %s30 = ssub.s32 %s17, %s29
    %s31 = ssub.s32 %s18, %s25
    %s32 = sor.u32 %s30, %s31
    %p33 = scmp.eq.s32.totalorder %s32, 0
    %s35 = sadd.s32 %s34, 1
    %s36 = scalar_select %p33, %s34, %s35
    %p39 = pneg %p33
    %p40 = scmp.eq.s32.totalorder %s10, 1
    %p41 = por %p39, %p40
    %p42 = scmp.ne.s32.totalorder %s34, %s37
    %p43 = scmp.eq.s32.totalorder %s10, 0
    %p44 = por %p42, %p43
    %p45 = scmp.ne.s32.totalorder %s34, %s37
    %p46 = scmp.eq.s32.totalorder %s15, 1
    %p47 = por %p45, %p46
    %p48 = scmp.ne.s32.totalorder %s37, %s38
    %p49 = scmp.eq.s32.totalorder %s15, 0
    %p50 = por %p48, %p49
    %p51 = scmp.ne.s32.totalorder %s37, %s38
    %p52 = scmp.eq.s32.totalorder %s16, 1
    %p53 = por %p51, %p52
    %p55 = scmp.ne.s32.totalorder %s38, %s54
    %p56 = scmp.eq.s32.totalorder %s16, 0
    %p57 = por %p55, %p56
    %s59 = sadd.s32 %s58, 1
    %p62 = scmp.eq.s32.totalorder %s10, 1
    %p63 = scmp.ne.s32.totalorder %s58, %s60
    %p64 = scmp.eq.s32.totalorder %s10, 0
    %p65 = por %p63, %p64
    %p66 = scmp.ne.s32.totalorder %s58, %s60
    %p67 = scmp.eq.s32.totalorder %s15, 1
    %p68 = por %p66, %p67
    %p69 = scmp.ne.s32.totalorder %s60, %s61
    %p70 = scmp.eq.s32.totalorder %s15, 0
    %p71 = por %p69, %p70
    %p72 = scmp.ne.s32.totalorder %s60, %s61
    %p73 = scmp.eq.s32.totalorder %s16, 1
    %p74 = por %p72, %p73
    %p76 = scmp.ne.s32.totalorder %s61, %s75
    %p77 = scmp.eq.s32.totalorder %s16, 0
    %p78 = por %p76, %p77
    %s80 = sadd.s32 %s79, 1
    %p83 = scmp.eq.s32.totalorder %s10, 1
    %p84 = scmp.ne.s32.totalorder %s79, %s81
    %p85 = scmp.eq.s32.totalorder %s10, 0
    %p86 = por %p84, %p85
    %p87 = scmp.ne.s32.totalorder %s79, %s81
    %p88 = scmp.eq.s32.totalorder %s15, 1
    %p89 = por %p87, %p88
    %p90 = scmp.ne.s32.totalorder %s81, %s82
    %p91 = scmp.eq.s32.totalorder %s15, 0
    %p92 = por %p90, %p91
    %p93 = scmp.ne.s32.totalorder %s81, %s82
    %p94 = scmp.eq.s32.totalorder %s16, 1
    %p95 = por %p93, %p94
    %p97 = scmp.ne.s32.totalorder %s82, %s96
    %p98 = scmp.eq.s32.totalorder %s16, 0
    %p99 = por %p97, %p98
    %s100 = ssub.s32 %s18, %s25
    %p101 = scmp.eq.s32.totalorder %s100, 0
    %s103 = sadd.s32 %s102, 1
    %s104 = scalar_select %p101, %s102, %s103
    %p107 = pneg %p101
    %p108 = scmp.eq.s32.totalorder %s10, 1
    %p109 = por %p107, %p108
    %p110 = scmp.ne.s32.totalorder %s102, %s105
    %p111 = scmp.eq.s32.totalorder %s10, 0
    %p112 = por %p110, %p111
    %p113 = scmp.ne.s32.totalorder %s102, %s105
    %p114 = scmp.eq.s32.totalorder %s15, 1
    %p115 = por %p113, %p114
    %p116 = scmp.ne.s32.totalorder %s105, %s106
    %p117 = scmp.eq.s32.totalorder %s15, 0
    %p118 = por %p116, %p117
    %p119 = scmp.ne.s32.totalorder %s105, %s106
    %p120 = scmp.eq.s32.totalorder %s16, 1
    %p121 = por %p119, %p120
    %p123 = scmp.ne.s32.totalorder %s106, %s122
    %p124 = scmp.eq.s32.totalorder %s16, 0
    %p125 = por %p123, %p124
    %s126 = ssub.s32 %s17, %s29
    %s127 = ssub.s32 %s18, %s25
    %s128 = sor.u32 %s126, %s127
    %p129 = scmp.eq.s32.totalorder %s128, 0
    %s131 = sadd.s32 %s130, 1
    %s132 = scalar_select %p129, %s130, %s131
    %p135 = pneg %p129
    %p136 = scmp.eq.s32.totalorder %s10, 1
    %p137 = por %p135, %p136
    %p138 = scmp.ne.s32.totalorder %s130, %s133
    %p139 = scmp.eq.s32.totalorder %s10, 0
    %p140 = por %p138, %p139
    %p141 = scmp.ne.s32.totalorder %s130, %s133
    %p142 = scmp.eq.s32.totalorder %s15, 1
    %p143 = por %p141, %p142
    %p144 = scmp.ne.s32.totalorder %s133, %s134
    %p145 = scmp.eq.s32.totalorder %s15, 0
    %p146 = por %p144, %p145
    %p147 = scmp.ne.s32.totalorder %s133, %s134
    %p148 = scmp.eq.s32.totalorder %s16, 1
    %p149 = por %p147, %p148
    %p151 = scmp.ne.s32.totalorder %s134, %s150
    %p152 = scmp.eq.s32.totalorder %s16, 0
    %p153 = por %p151, %p152
    %p154 = scmp.le.s32.totalorder 1, %s10
    %p155 = scmp.lt.s32.totalorder %s10, 3
    %p156 = pnand %p154, %p155
    %p157 = pneg %p156
    // Predicated region
    $region9: #{feature_extractor_eva_forward.7} parent=5 // pred_check
      _
    $region10: #{feature_extractor_eva_forward.7} parent=5 // pred_check_branch
      %159 = sbr.rel (%p156) target = $region12
    $region11: #{feature_extractor_eva_forward.7} parent=5 // pred_region
      %s160 = ssub.s32 %s10, 1
      // Predicated region
      $region13: #{feature_extractor_eva_forward.7} parent=11 // pred_check
        %p161 = pneg %p71
      $region14: #{feature_extractor_eva_forward.7} parent=11 // pred_check_branch
        %163 = sbr.rel (%p161) target = $region16
      $region15: #{feature_extractor_eva_forward.7} parent=11 // pred_region
        _
      $region16: #{feature_extractor_eva_forward.7} parent=11 // pred_fallthru
        _
      // Predicated region
      $region17: #{feature_extractor_eva_forward.7} parent=11 // pred_check
        %p164 = pneg %p92
      $region18: #{feature_extractor_eva_forward.7} parent=11 // pred_check_branch
        %166 = sbr.rel (%p164) target = $region20
      $region19: #{feature_extractor_eva_forward.7} parent=11 // pred_region
        _
      $region20: #{feature_extractor_eva_forward.7} parent=11 // pred_fallthru
        _
      // Predicated region
      $region21: #{feature_extractor_eva_forward.7} parent=11 // pred_check
        %p167 = pneg %p118
      $region22: #{feature_extractor_eva_forward.7} parent=11 // pred_check_branch
        %169 = sbr.rel (%p167) target = $region24
      $region23: #{feature_extractor_eva_forward.7} parent=11 // pred_region
        %p170 = scmp.lt.s32.totalorder %s20, 0
        %s171 = scalar_select %p170, %s20, 0
        %s172 = smul.addr %s171, 4
        %s173 = scalar_lea.vmem %s3, %s172
      $region24: #{feature_extractor_eva_forward.7} parent=11 // pred_fallthru
        _
    $region12: #{feature_extractor_eva_forward.7} parent=5 // pred_fallthru
      _
    %p174 = scmp.lt.s32.totalorder %s10, 2
    // Predicated region
    $region25: #{feature_extractor_eva_forward.7} parent=5 // pred_check
      %p175 = pneg %p174
    $region26: #{feature_extractor_eva_forward.7} parent=5 // pred_check_branch
      %177 = sbr.rel (%p175) target = $region28
    $region27: #{feature_extractor_eva_forward.7} parent=5 // pred_region
      // Predicated region
      $region29: #{feature_extractor_eva_forward.7} parent=27 // pred_check
        %p178 = pneg %p44
      $region30: #{feature_extractor_eva_forward.7} parent=27 // pred_check_branch
        %180 = sbr.rel (%p178) target = $region32
      $region31: #{feature_extractor_eva_forward.7} parent=27 // pred_region
        %p181 = scmp.lt.s32.totalorder %s17, 1
        %s182 = scalar_select %p181, %s17, 1
        %p183 = scmp.lt.s32.totalorder %s18, 0
        %s184 = scalar_select %p183, %s18, 0
        %s185 = smul.addr %s184, 2
        %s186 = smul.addr %s182, 2
        %s187 = sadd.s32 %s185, %s186
        %s188 = smul.addr %s187, 2
        %s189 = scalar_lea.vmem %s0, %s188
      $region32: #{feature_extractor_eva_forward.7} parent=27 // pred_fallthru
        _
    $region28: #{feature_extractor_eva_forward.7} parent=5 // pred_fallthru
      _
    %p190 = scmp.le.s32.totalorder 1, %s10
    %p191 = scmp.lt.s32.totalorder %s10, 3
    %p192 = pnand %p190, %p191
    %p193 = pneg %p192
    // Predicated region
    $region33: #{feature_extractor_eva_forward.7} parent=5 // pred_check
      _
    $region34: #{feature_extractor_eva_forward.7} parent=5 // pred_check_branch
      %195 = sbr.rel (%p192) target = $region36
    $region35: #{feature_extractor_eva_forward.7} parent=5 // pred_region
      %s196 = ssub.s32 %s10, 1
      %p197 = scmp.lt.s32.totalorder %s19, 1
      %s198 = scalar_select %p197, %s19, 1
      %p199 = scmp.lt.s32.totalorder %s20, 0
      %s200 = scalar_select %p199, %s20, 0
      %s201 = smul.addr %s200, 2
      %s202 = smul.addr %s198, 2
      %s203 = sadd.s32 %s201, %s202
      %s204 = smul.addr %s203, 2
      %s205 = scalar_lea.vmem %s0, %s204
      %p206 = pneg %p50
      %p207 = pneg %p47
      %p208 = pneg %p71
      %p209 = pneg %p68
      %p210 = pneg %p92
      %p211 = pneg %p89
      %p212 = scmp.lt.s32.totalorder %s20, 0
      %s213 = scalar_select %p212, %s20, 0
      %s214 = smul.addr %s213, 4
      %s215 = scalar_lea.vmem %s3, %s214
      %p216 = pneg %p118
      %p217 = pneg %p115
      %p218 = pneg %p146
      %p219 = pneg %p143
      %p220 = scmp.lt.s32.totalorder %s19, 1
      %s221 = scalar_select %p220, %s19, 1
      %p222 = scmp.lt.s32.totalorder %s20, 0
      %s223 = scalar_select %p222, %s20, 0
      %s224 = sadd.s32 %s223, %s221
      %s225 = smul.addr %s224, 2
      %s226 = scalar_lea.vmem %s4, %s225
      %p227 = scmp.lt.s32.totalorder %s19, 1
      %s228 = scalar_select %p227, %s19, 1
      %p229 = scmp.lt.s32.totalorder %s20, 0
      %s230 = scalar_select %p229, %s20, 0
      %s231 = smul.addr %s230, 2
      %s232 = smul.addr %s228, 2
      %s233 = sadd.s32 %s231, %s232
      %s234 = smul.addr %s233, 2
      %s235 = scalar_lea.vmem %s0, %s234
      %p236 = scmp.lt.s32.totalorder %s20, 0
      %s237 = scalar_select %p236, %s20, 0
      %s238 = smul.addr %s237, 4
      %s239 = scalar_lea.vmem %s3, %s238
      %p240 = scmp.lt.s32.totalorder %s19, 1
      %s241 = scalar_select %p240, %s19, 1
      %p242 = scmp.lt.s32.totalorder %s20, 0
      %s243 = scalar_select %p242, %s20, 0
      %s244 = sadd.s32 %s243, %s241
      %s245 = smul.addr %s244, 2
      %s246 = scalar_lea.vmem %s4, %s245
      %v248 = vld [vmem:[%s235] sm:$0xf]
      %v249 = vld [vmem:[%s1] sm:$0xf]
      %v250 = vld [vmem:[%s1 + $0x4] sm:$0xf]
      %v251 = vld [vmem:[%s1 + $0x8] sm:$0xf]
      %v252 = vld [vmem:[%s1 + $0xc] sm:$0xf]
      %v253 = vld [vmem:[%s1 + $0x10] sm:$0xf]
      %v254 = vld [vmem:[%s1 + $0x14] sm:$0xf]
      %v255 = vld [vmem:[%s1 + $0x18] sm:$0xf]
      %v256 = vld [vmem:[%s1 + $0x1c] sm:$0xf]
      %v257 = vld [vmem:[%s1 + $0x20] sm:$0xf]
      %v258 = vld [vmem:[%s1 + $0x24] sm:$0xf]
      %v259 = vld [vmem:[%s1 + $0x28] sm:$0xf]
      %v260 = vld [vmem:[%s1 + $0x2c] sm:$0xf]
      %v261 = vld [vmem:[%s1 + $0x30] sm:$0xf]
      %v262 = vld [vmem:[%s1 + $0x34] sm:$0xf]
      %v263 = vld [vmem:[%s1 + $0x38] sm:$0xf]
      %v264 = vld [vmem:[%s1 + $0x3c] sm:$0xf]
      %v265 = vld [vmem:[%s1 + $0x40] sm:$0xf]
      %v266 = vld [vmem:[%s1 + $0x44] sm:$0xf]
      %v267 = vld [vmem:[%s1 + $0x48] sm:$0xf]
      %v268 = vld [vmem:[%s1 + $0x4c] sm:$0xf]
      %v269 = vld [vmem:[%s1 + $0x50] sm:$0xf]
      %v270 = vld [vmem:[%s1 + $0x54] sm:$0xf]
      %v271 = vld [vmem:[%s1 + $0x58] sm:$0xf]
      %v272 = vld [vmem:[%s1 + $0x5c] sm:$0xf]
      %v273 = vld [vmem:[%s2] sm:$0x1]
      %v275 = vlaneseq
      %v276 = vshrl.u32 %v275, 7
      %v277 = vsub.s32 0, %v276
      %v278 = vrot.slane %v273, %v277
      %v282 = vunpack.c.l.s4 1983009808
      %v283 = vunpack.c.0.s8 %v282
      %v284 = vlaneseq
      %v285 = vshrl.u32 %v284, 7
      %v286 = vsub.s32 %v283, %v285
      %v287 = vrot.slane %v248, %v286
      %v288 = vcombine.high %v287, %v287
      %v314 = vunpack.c.l.b16 %v249
      %v315 = vunpack.c.l.b16 %v250
      %v316 = vunpack.c.l.b16 %v251
      %v317 = vunpack.c.l.b16 %v252
      %v318 = vunpack.c.l.b16 %v253
      %v319 = vunpack.c.l.b16 %v254
      %v320 = vunpack.c.l.b16 %v255
      %v321 = vunpack.c.l.b16 %v256
      %v322 = vunpack.c.l.b16 %v257
      %v323 = vunpack.c.l.b16 %v258
      %v324 = vunpack.c.l.b16 %v259
      %v325 = vunpack.c.l.b16 %v260
      %v326 = vunpack.c.l.b16 %v261
      %v327 = vunpack.c.l.b16 %v262
      %v328 = vunpack.c.l.b16 %v263
      %v329 = vunpack.c.l.b16 %v264
      %v330 = vunpack.c.l.b16 %v265
      %v331 = vunpack.c.l.b16 %v266
      %v332 = vunpack.c.l.b16 %v267
      %v333 = vunpack.c.l.b16 %v268
      %v334 = vunpack.c.l.b16 %v269
      %v335 = vunpack.c.l.b16 %v270
      %v336 = vunpack.c.l.b16 %v271
      %v337 = vunpack.c.l.b16 %v272
      %v338 = vpack.c.b16 %v315, %v314
      %v339 = vpack.c.b16 %v317, %v316
      %v340 = vpack.c.b16 %v319, %v318
      %v341 = vpack.c.b16 %v321, %v320
      %v342 = vpack.c.b16 %v323, %v322
      %v343 = vpack.c.b16 %v325, %v324
      %v344 = vpack.c.b16 %v327, %v326
      %v345 = vpack.c.b16 %v329, %v328
      %v346 = vpack.c.b16 %v331, %v330
      %v347 = vpack.c.b16 %v333, %v332
      %v348 = vpack.c.b16 %v335, %v334
      %v349 = vpack.c.b16 %v337, %v336
      %vm362 = vcmask 523264
      %v364 = vsel %vm362, %v288, 0
      %366 = vmatprep.subr.bf16.mxu0 0
      %367 = vmatpush1.bf16.msra.mxu0 %v338
      %368 = vmatprep.subr.bf16.mxu0 0
      %369 = vmatpush1.bf16.msra.mxu0 %v339
      %370 = vmatprep.subr.bf16.mxu0 0
      %371 = vmatpush1.bf16.msra.mxu0 %v340
      %372 = vmatprep.subr.bf16.mxu0 0
      %373 = vmatpush1.bf16.msra.mxu0 %v341
      %374 = vmatprep.subr.bf16.mxu0 0
      %375 = vmatpush1.bf16.msra.mxu0 %v342
      %376 = vmatprep.subr.bf16.mxu0 0
      %377 = vmatpush1.bf16.msra.mxu0 %v343
      %378 = vmatprep.subr.bf16.mxu0 0
      %379 = vmatpush1.bf16.msra.mxu0 %v344
      %380 = vmatprep.subr.bf16.mxu0 0
      %381 = vmatpush1.bf16.msra.mxu0 %v345
      %382 = vmatprep.subr.bf16.mxu0 0
      %383 = vmatpush1.bf16.msra.mxu0 %v346
      %384 = vmatprep.subr.bf16.mxu0 0
      %385 = vmatpush1.bf16.msra.mxu0 %v347
      %386 = vmatprep.subr.bf16.mxu0 0
      %387 = vmatpush1.bf16.msra.mxu0 %v348
      %388 = vmatprep.subr.bf16.mxu0 0
      %389 = vmatpush1.bf16.msra.mxu0 %v349
      %390 = vmatprep.subr.bf16.mxu0 0
      %391 = vmatpush1.bf16.msra.mxu0 0
      %392 = vmatprep.subr.bf16.mxu0 0
      %393 = vmatpush1.bf16.msra.mxu0 0
      %394 = vmatprep.subr.bf16.mxu0 0
      %395 = vmatpush1.bf16.msra.mxu0 0
      %396 = vmatprep.subr.bf16.mxu0 0
      %397 = vmatpush1.bf16.msra.mxu0 0
      %398 = vmatprep.mubr.bf16.mxu0 %v364
      %399 = vmatmul.mubr.bf16.gmra.mrb[0].mxu0 %v287
      %v400 = vpop.f32.mrb[0].mxu0
      %v401 = vadd.f32 %v278, %v400
      %v402 = vpop.f32.mrb[0].mxu0
      %v403 = vpop.f32.mrb[0].mxu0
      %v404 = vpop.f32.mrb[0].mxu0
      %405 = vdwg.mxu0
      %v406 = vld [vmem:[%s239] sm:$0xf]
      %v407 = vadd.f32 %v401, %v406
      %v408 = vpack.c.bf16 %v407, %v407
      %vm409 = vcmask 254976
      %410 = vst.msk [vmem:[%s246] sm:$0x3] %vm409, %v408
      %p411 = scmp.lt.s32.totalorder %s19, 1
      %s412 = scalar_select %p411, %s19, 1
      %p413 = scmp.lt.s32.totalorder %s20, 0
      %s414 = scalar_select %p413, %s20, 0
      %s415 = sadd.s32 %s414, %s412
      %s416 = smul.addr %s415, 2
      %s417 = scalar_lea.vmem %s4, %s416
      // Predicated region
      $region37: #{feature_extractor_eva_forward.7} parent=35 // pred_check
        %p418 = pneg %p143
      $region38: #{feature_extractor_eva_forward.7} parent=35 // pred_check_branch
        %420 = sbr.rel (%p418) target = $region40
      $region39: #{feature_extractor_eva_forward.7} parent=35 // pred_region
        _
      $region40: #{feature_extractor_eva_forward.7} parent=35 // pred_fallthru
        _
    $region36: #{feature_extractor_eva_forward.7} parent=5 // pred_fallthru
      _
    %p421 = scmp.le.s32.totalorder 2, %s10
    // Predicated region
    $region41: #{feature_extractor_eva_forward.7} parent=5 // pred_check
      %p422 = pneg %p421
    $region42: #{feature_extractor_eva_forward.7} parent=5 // pred_check_branch
      %424 = sbr.rel (%p422) target = $region44
    $region43: #{feature_extractor_eva_forward.7} parent=5 // pred_region
      %s425 = ssub.s32 %s10, 2
      // Predicated region
      $region45: #{feature_extractor_eva_forward.7} parent=43 // pred_check
        %p426 = pneg %p149
      $region46: #{feature_extractor_eva_forward.7} parent=43 // pred_check_branch
        %428 = sbr.rel (%p426) target = $region48
      $region47: #{feature_extractor_eva_forward.7} parent=43 // pred_region
        %p429 = scmp.lt.s32.totalorder %s21, 1
        %s430 = scalar_select %p429, %s21, 1
        %p431 = scmp.lt.s32.totalorder %s22, 0
        %s432 = scalar_select %p431, %s22, 0
        %s433 = sadd.s32 %s432, %s430
        %s434 = smul.addr %s433, 2
        %s435 = scalar_lea.vmem %s4, %s434
      $region48: #{feature_extractor_eva_forward.7} parent=43 // pred_fallthru
        _
    $region44: #{feature_extractor_eva_forward.7} parent=5 // pred_fallthru
      _
  $region6: #{feature_extractor_eva_forward.7} parent=0 // loop_footer
    %s14 = sadd.s32 1, %s10
  $region7: #{feature_extractor_eva_forward.7} parent=0 // loop_footer_branch
    %9 = sbr.rel target = $region3
  $region8: #{feature_extractor_eva_forward.7} parent=0 // loop_exit
    _

// kernel: feature_extractor_eva_forward.8
$region0: #{feature_extractor_eva_forward.8}
  #allocation0 [shape = 'u32[]', space=smem, size = 0x4, offset = 0x4, fixed_abs, tag = 'smem constant byte address 0x4 - core index']
  #allocation1 [shape = 'u32[144,128]{1,0:T(1,128)}', space=vmem, size = 0x12000, scoped, tag = 'internal scratch']
  %s0 = inlined_call_operand.vmem [shape: bf16[2,5,32], index: 0, kind: input, shape index: {}]
  %s1 = inlined_call_operand.vmem [shape: f32[5,32], index: 1, kind: input, shape index: {}]
  %s2 = inlined_call_operand.vmem [shape: f32[5,32], index: 2, kind: input, shape index: {}]
  %s3 = inlined_call_operand.vmem [shape: f32[5,32], index: 3, kind: input, shape index: {}]
  %s4 = inlined_call_operand.vmem [shape: f32[1,32], index: 4, kind: input, shape index: {}]
  %s5 = inlined_call_operand.vmem [shape: f32[1,32], index: 5, kind: input, shape index: {}]
  %s6 = inlined_call_operand.vmem [shape: bf16[32,96], index: 6, kind: input, shape index: {}]
  %s7 = inlined_call_operand.vmem [shape: f32[1,96], index: 7, kind: input, shape index: {}]
  %s8 = inlined_call_operand.vmem [shape: bf16[2,5,32], index: 8, kind: output, shape index: {0}]
  %s9 = inlined_call_operand.vmem [shape: bf16[2,5,32], index: 9, kind: output, shape index: {1}]
  %s10 = inlined_call_operand.vmem [shape: bf16[2,5,32], index: 10, kind: output, shape index: {2}]
  %11 = xla_tuple %s8, %s9, %s10
  %s12 = sld [smem:[#allocation0]]
  $region81: #{feature_extractor_eva_forward.8} parent=0
    _
  %s14 = ssub.s32 1, %s12
  %s15 = scalar_select 0, %s14, %s12
  loop: start=0, step=1, limit=4
  $region2: #{feature_extractor_eva_forward.8} parent=0 // loop_pre_header
    _
  $region3: #{feature_extractor_eva_forward.8} parent=0 // loop_header
    %s17 = sphi 0, %s21
    %p18 = scmp.ge.s32.totalorder %s17, 4
    %s24 = sphi 0, %s36
    %s25 = sphi 0, %s32
    %s26 = sphi 0, %s24
    %s27 = sphi 0, %s25
    %s28 = sphi 0, %s26
    %s29 = sphi 0, %s27
    %s41 = sphi 0, %s43
    %s44 = sphi 0, %s41
    %s45 = sphi 0, %s44
    %s61 = sphi 0, %s45
    %s67 = sphi 0, %s69
    %s70 = sphi 0, %s67
    %s71 = sphi 0, %s70
    %s87 = sphi 0, %s71
    %s93 = sphi 0, %s95
    %s96 = sphi 0, %s93
    %s97 = sphi 0, %s96
    %s113 = sphi 0, %s97
    %s119 = sphi 0, %s121
    %s122 = sphi 0, %s119
    %s123 = sphi 0, %s122
    %s139 = sphi 0, %s123
    %s143 = sphi 0, %s143
    %s145 = sphi 0, %s143
    %s146 = sphi 0, %s145
    %s160 = sphi 0, %s146
    %s164 = sphi 0, %s164
    %s166 = sphi 0, %s164
    %s167 = sphi 0, %s166
    %s181 = sphi 0, %s167
    %s185 = sphi 0, %s185
    %s187 = sphi 0, %s185
    %s188 = sphi 0, %s187
    %s202 = sphi 0, %s188
    %s206 = sphi 0, %s206
    %s208 = sphi 0, %s206
    %s209 = sphi 0, %s208
    %s223 = sphi 0, %s209
    %s231 = sphi 0, %s233
    %s234 = sphi 0, %s231
    %s235 = sphi 0, %s234
    %s251 = sphi 0, %s235
    %s259 = sphi 0, %s261
    %s262 = sphi 0, %s259
    %s263 = sphi 0, %s262
    %s279 = sphi 0, %s263
    %s287 = sphi 0, %s289
    %s290 = sphi 0, %s287
    %s291 = sphi 0, %s290
    %s307 = sphi 0, %s291
  $region4: #{feature_extractor_eva_forward.8} parent=0 // loop_header_branch
    %20 = sbr.rel (%p18) target = $region8
  $region5: #{feature_extractor_eva_forward.8} parent=0 // loop_body
    %s22 = ssub.s32 %s17, 1
    %s23 = ssub.s32 %s17, 2
    %s30 = sadd.s32 1, %s25
    %p31 = scmp.ge.s32.totalorder %s30, 1
    %s32 = scalar_select %p31, 0, %s30
    %s33 = sadd.s32 1, %s24
    %s34 = scalar_select %p31, %s33, %s24
    %p35 = scmp.ge.s32.totalorder %s34, 2
    %s36 = scalar_select %p35, 0, %s34
    %s37 = ssub.s32 %s24, %s36
    %s38 = ssub.s32 %s25, %s32
    %s39 = sor.u32 %s37, %s38
    %p40 = scmp.eq.s32.totalorder %s39, 0
    %s42 = sadd.s32 %s41, 1
    %s43 = scalar_select %p40, %s41, %s42
    %p46 = pneg %p40
    %p47 = scmp.eq.s32.totalorder %s17, 1
    %p48 = por %p46, %p47
    %p49 = scmp.ne.s32.totalorder %s41, %s44
    %p50 = scmp.eq.s32.totalorder %s17, 0
    %p51 = por %p49, %p50
    %p52 = scmp.ne.s32.totalorder %s41, %s44
    %p53 = scmp.eq.s32.totalorder %s22, 1
    %p54 = por %p52, %p53
    %p55 = scmp.ne.s32.totalorder %s44, %s45
    %p56 = scmp.eq.s32.totalorder %s22, 0
    %p57 = por %p55, %p56
    %p58 = scmp.ne.s32.totalorder %s44, %s45
    %p59 = scmp.eq.s32.totalorder %s23, 1
    %p60 = por %p58, %p59
    %p62 = scmp.ne.s32.totalorder %s45, %s61
    %p63 = scmp.eq.s32.totalorder %s23, 0
    %p64 = por %p62, %p63
    %s65 = ssub.s32 %s25, %s32
    %p66 = scmp.eq.s32.totalorder %s65, 0
    %s68 = sadd.s32 %s67, 1
    %s69 = scalar_select %p66, %s67, %s68
    %p72 = pneg %p66
    %p73 = scmp.eq.s32.totalorder %s17, 1
    %p74 = por %p72, %p73
    %p75 = scmp.ne.s32.totalorder %s67, %s70
    %p76 = scmp.eq.s32.totalorder %s17, 0
    %p77 = por %p75, %p76
    %p78 = scmp.ne.s32.totalorder %s67, %s70
    %p79 = scmp.eq.s32.totalorder %s22, 1
    %p80 = por %p78, %p79
    %p81 = scmp.ne.s32.totalorder %s70, %s71
    %p82 = scmp.eq.s32.totalorder %s22, 0
    %p83 = por %p81, %p82
    %p84 = scmp.ne.s32.totalorder %s70, %s71
    %p85 = scmp.eq.s32.totalorder %s23, 1
    %p86 = por %p84, %p85
    %p88 = scmp.ne.s32.totalorder %s71, %s87
    %p89 = scmp.eq.s32.totalorder %s23, 0
    %p90 = por %p88, %p89
    %s91 = ssub.s32 %s25, %s32
    %p92 = scmp.eq.s32.totalorder %s91, 0
    %s94 = sadd.s32 %s93, 1
    %s95 = scalar_select %p92, %s93, %s94
    %p98 = pneg %p92
    %p99 = scmp.eq.s32.totalorder %s17, 1
    %p100 = por %p98, %p99
    %p101 = scmp.ne.s32.totalorder %s93, %s96
    %p102 = scmp.eq.s32.totalorder %s17, 0
    %p103 = por %p101, %p102
    %p104 = scmp.ne.s32.totalorder %s93, %s96
    %p105 = scmp.eq.s32.totalorder %s22, 1
    %p106 = por %p104, %p105
    %p107 = scmp.ne.s32.totalorder %s96, %s97
    %p108 = scmp.eq.s32.totalorder %s22, 0
    %p109 = por %p107, %p108
    %p110 = scmp.ne.s32.totalorder %s96, %s97
    %p111 = scmp.eq.s32.totalorder %s23, 1
    %p112 = por %p110, %p111
    %p114 = scmp.ne.s32.totalorder %s97, %s113
    %p115 = scmp.eq.s32.totalorder %s23, 0
    %p116 = por %p114, %p115
    %s117 = ssub.s32 %s25, %s32
    %p118 = scmp.eq.s32.totalorder %s117, 0
    %s120 = sadd.s32 %s119, 1
    %s121 = scalar_select %p118, %s119, %s120
    %p124 = pneg %p118
    %p125 = scmp.eq.s32.totalorder %s17, 1
    %p126 = por %p124, %p125
    %p127 = scmp.ne.s32.totalorder %s119, %s122
    %p128 = scmp.eq.s32.totalorder %s17, 0
    %p129 = por %p127, %p128
    %p130 = scmp.ne.s32.totalorder %s119, %s122
    %p131 = scmp.eq.s32.totalorder %s22, 1
    %p132 = por %p130, %p131
    %p133 = scmp.ne.s32.totalorder %s122, %s123
    %p134 = scmp.eq.s32.totalorder %s22, 0
    %p135 = por %p133, %p134
    %p136 = scmp.ne.s32.totalorder %s122, %s123
    %p137 = scmp.eq.s32.totalorder %s23, 1
    %p138 = por %p136, %p137
    %p140 = scmp.ne.s32.totalorder %s123, %s139
    %p141 = scmp.eq.s32.totalorder %s23, 0
    %p142 = por %p140, %p141
    %s144 = sadd.s32 %s143, 1
    %p147 = scmp.eq.s32.totalorder %s17, 1
    %p148 = scmp.ne.s32.totalorder %s143, %s145
    %p149 = scmp.eq.s32.totalorder %s17, 0
    %p150 = por %p148, %p149
    %p151 = scmp.ne.s32.totalorder %s143, %s145
    %p152 = scmp.eq.s32.totalorder %s22, 1
    %p153 = por %p151, %p152
    %p154 = scmp.ne.s32.totalorder %s145, %s146
    %p155 = scmp.eq.s32.totalorder %s22, 0
    %p156 = por %p154, %p155
    %p157 = scmp.ne.s32.totalorder %s145, %s146
    %p158 = scmp.eq.s32.totalorder %s23, 1
    %p159 = por %p157, %p158
    %p161 = scmp.ne.s32.totalorder %s146, %s160
    %p162 = scmp.eq.s32.totalorder %s23, 0
    %p163 = por %p161, %p162
    %s165 = sadd.s32 %s164, 1
    %p168 = scmp.eq.s32.totalorder %s17, 1
    %p169 = scmp.ne.s32.totalorder %s164, %s166
    %p170 = scmp.eq.s32.totalorder %s17, 0
    %p171 = por %p169, %p170
    %p172 = scmp.ne.s32.totalorder %s164, %s166
    %p173 = scmp.eq.s32.totalorder %s22, 1
    %p174 = por %p172, %p173
    %p175 = scmp.ne.s32.totalorder %s166, %s167
    %p176 = scmp.eq.s32.totalorder %s22, 0
    %p177 = por %p175, %p176
    %p178 = scmp.ne.s32.totalorder %s166, %s167
    %p179 = scmp.eq.s32.totalorder %s23, 1
    %p180 = por %p178, %p179
    %p182 = scmp.ne.s32.totalorder %s167, %s181
    %p183 = scmp.eq.s32.totalorder %s23, 0
    %p184 = por %p182, %p183
    %s186 = sadd.s32 %s185, 1
    %p189 = scmp.eq.s32.totalorder %s17, 1
    %p190 = scmp.ne.s32.totalorder %s185, %s187
    %p191 = scmp.eq.s32.totalorder %s17, 0
    %p192 = por %p190, %p191
    %p193 = scmp.ne.s32.totalorder %s185, %s187
    %p194 = scmp.eq.s32.totalorder %s22, 1
    %p195 = por %p193, %p194
    %p196 = scmp.ne.s32.totalorder %s187, %s188
    %p197 = scmp.eq.s32.totalorder %s22, 0
    %p198 = por %p196, %p197
    %p199 = scmp.ne.s32.totalorder %s187, %s188
    %p200 = scmp.eq.s32.totalorder %s23, 1
    %p201 = por %p199, %p200
    %p203 = scmp.ne.s32.totalorder %s188, %s202
    %p204 = scmp.eq.s32.totalorder %s23, 0
    %p205 = por %p203, %p204
    %s207 = sadd.s32 %s206, 1
    %p210 = scmp.eq.s32.totalorder %s17, 1
    %p211 = scmp.ne.s32.totalorder %s206, %s208
    %p212 = scmp.eq.s32.totalorder %s17, 0
    %p213 = por %p211, %p212
    %p214 = scmp.ne.s32.totalorder %s206, %s208
    %p215 = scmp.eq.s32.totalorder %s22, 1
    %p216 = por %p214, %p215
    %p217 = scmp.ne.s32.totalorder %s208, %s209
    %p218 = scmp.eq.s32.totalorder %s22, 0
    %p219 = por %p217, %p218
    %p220 = scmp.ne.s32.totalorder %s208, %s209
    %p221 = scmp.eq.s32.totalorder %s23, 1
    %p222 = por %p220, %p221
    %p224 = scmp.ne.s32.totalorder %s209, %s223
    %p225 = scmp.eq.s32.totalorder %s23, 0
    %p226 = por %p224, %p225
    %s227 = ssub.s32 %s24, %s36
    %s228 = ssub.s32 %s25, %s32
    %s229 = sor.u32 %s227, %s228
    %p230 = scmp.eq.s32.totalorder %s229, 0
    %s232 = sadd.s32 %s231, 1
    %s233 = scalar_select %p230, %s231, %s232
    %p236 = pneg %p230
    %p237 = scmp.eq.s32.totalorder %s17, 1
    %p238 = por %p236, %p237
    %p239 = scmp.ne.s32.totalorder %s231, %s234
    %p240 = scmp.eq.s32.totalorder %s17, 0
    %p241 = por %p239, %p240
    %p242 = scmp.ne.s32.totalorder %s231, %s234
    %p243 = scmp.eq.s32.totalorder %s22, 1
    %p244 = por %p242, %p243
    %p245 = scmp.ne.s32.totalorder %s234, %s235
    %p246 = scmp.eq.s32.totalorder %s22, 0
    %p247 = por %p245, %p246
    %p248 = scmp.ne.s32.totalorder %s234, %s235
    %p249 = scmp.eq.s32.totalorder %s23, 1
    %p250 = por %p248, %p249
    %p252 = scmp.ne.s32.totalorder %s235, %s251
    %p253 = scmp.eq.s32.totalorder %s23, 0
    %p254 = por %p252, %p253
    %s255 = ssub.s32 %s24, %s36
    %s256 = ssub.s32 %s25, %s32
    %s257 = sor.u32 %s255, %s256
    %p258 = scmp.eq.s32.totalorder %s257, 0
    %s260 = sadd.s32 %s259, 1
    %s261 = scalar_select %p258, %s259, %s260
    %p264 = pneg %p258
    %p265 = scmp.eq.s32.totalorder %s17, 1
    %p266 = por %p264, %p265
    %p267 = scmp.ne.s32.totalorder %s259, %s262
    %p268 = scmp.eq.s32.totalorder %s17, 0
    %p269 = por %p267, %p268
    %p270 = scmp.ne.s32.totalorder %s259, %s262
    %p271 = scmp.eq.s32.totalorder %s22, 1
    %p272 = por %p270, %p271
    %p273 = scmp.ne.s32.totalorder %s262, %s263
    %p274 = scmp.eq.s32.totalorder %s22, 0
    %p275 = por %p273, %p274
    %p276 = scmp.ne.s32.totalorder %s262, %s263
    %p277 = scmp.eq.s32.totalorder %s23, 1
    %p278 = por %p276, %p277
    %p280 = scmp.ne.s32.totalorder %s263, %s279
    %p281 = scmp.eq.s32.totalorder %s23, 0
    %p282 = por %p280, %p281
    %s283 = ssub.s32 %s24, %s36
    %s284 = ssub.s32 %s25, %s32
    %s285 = sor.u32 %s283, %s284
    %p286 = scmp.eq.s32.totalorder %s285, 0
    %s288 = sadd.s32 %s287, 1
    %s289 = scalar_select %p286, %s287, %s288
    %p292 = pneg %p286
    %p293 = scmp.eq.s32.totalorder %s17, 1
    %p294 = por %p292, %p293
    %p295 = scmp.ne.s32.totalorder %s287, %s290
    %p296 = scmp.eq.s32.totalorder %s17, 0
    %p297 = por %p295, %p296
    %p298 = scmp.ne.s32.totalorder %s287, %s290
    %p299 = scmp.eq.s32.totalorder %s22, 1
    %p300 = por %p298, %p299
    %p301 = scmp.ne.s32.totalorder %s290, %s291
    %p302 = scmp.eq.s32.totalorder %s22, 0
    %p303 = por %p301, %p302
    %p304 = scmp.ne.s32.totalorder %s290, %s291
    %p305 = scmp.eq.s32.totalorder %s23, 1
    %p306 = por %p304, %p305
    %p308 = scmp.ne.s32.totalorder %s291, %s307
    %p309 = scmp.eq.s32.totalorder %s23, 0
    %p310 = por %p308, %p309
    %p311 = scmp.le.s32.totalorder 1, %s17
    %p312 = scmp.lt.s32.totalorder %s17, 3
    %p313 = pnand %p311, %p312
    %p314 = pneg %p313
    // Predicated region
    $region9: #{feature_extractor_eva_forward.8} parent=5 // pred_check
      _
    $region10: #{feature_extractor_eva_forward.8} parent=5 // pred_check_branch
      %316 = sbr.rel (%p313) target = $region12
    $region11: #{feature_extractor_eva_forward.8} parent=5 // pred_region
      %s317 = ssub.s32 %s17, 1
      // Predicated region
      $region13: #{feature_extractor_eva_forward.8} parent=11 // pred_check
        %p318 = pneg %p83
      $region14: #{feature_extractor_eva_forward.8} parent=11 // pred_check_branch
        %320 = sbr.rel (%p318) target = $region16
      $region15: #{feature_extractor_eva_forward.8} parent=11 // pred_region
        %p321 = scmp.lt.s32.totalorder %s27, 0
        %s322 = scalar_select %p321, %s27, 0
        %s323 = smul.addr %s322, 8
        %s324 = scalar_lea.vmem %s1, %s323
      $region16: #{feature_extractor_eva_forward.8} parent=11 // pred_fallthru
        _
      // Predicated region
      $region17: #{feature_extractor_eva_forward.8} parent=11 // pred_check
        %p325 = pneg %p109
      $region18: #{feature_extractor_eva_forward.8} parent=11 // pred_check_branch
        %327 = sbr.rel (%p325) target = $region20
      $region19: #{feature_extractor_eva_forward.8} parent=11 // pred_region
        %p328 = scmp.lt.s32.totalorder %s27, 0
        %s329 = scalar_select %p328, %s27, 0
        %s330 = smul.addr %s329, 8
        %s331 = scalar_lea.vmem %s2, %s330
      $region20: #{feature_extractor_eva_forward.8} parent=11 // pred_fallthru
        _
      // Predicated region
      $region21: #{feature_extractor_eva_forward.8} parent=11 // pred_check
        %p332 = pneg %p135
      $region22: #{feature_extractor_eva_forward.8} parent=11 // pred_check_branch
        %334 = sbr.rel (%p332) target = $region24
      $region23: #{feature_extractor_eva_forward.8} parent=11 // pred_region
        %p335 = scmp.lt.s32.totalorder %s27, 0
        %s336 = scalar_select %p335, %s27, 0
        %s337 = smul.addr %s336, 8
        %s338 = scalar_lea.vmem %s3, %s337
      $region24: #{feature_extractor_eva_forward.8} parent=11 // pred_fallthru
        _
      // Predicated region
      $region25: #{feature_extractor_eva_forward.8} parent=11 // pred_check
        %p339 = pneg %p156
      $region26: #{feature_extractor_eva_forward.8} parent=11 // pred_check_branch
        %341 = sbr.rel (%p339) target = $region28
      $region27: #{feature_extractor_eva_forward.8} parent=11 // pred_region
        _
      $region28: #{feature_extractor_eva_forward.8} parent=11 // pred_fallthru
        _
      // Predicated region
      $region29: #{feature_extractor_eva_forward.8} parent=11 // pred_check
        %p342 = pneg %p177
      $region30: #{feature_extractor_eva_forward.8} parent=11 // pred_check_branch
        %344 = sbr.rel (%p342) target = $region32
      $region31: #{feature_extractor_eva_forward.8} parent=11 // pred_region
        _
      $region32: #{feature_extractor_eva_forward.8} parent=11 // pred_fallthru
        _
      // Predicated region
      $region33: #{feature_extractor_eva_forward.8} parent=11 // pred_check
        %p345 = pneg %p198
      $region34: #{feature_extractor_eva_forward.8} parent=11 // pred_check_branch
        %347 = sbr.rel (%p345) target = $region36
      $region35: #{feature_extractor_eva_forward.8} parent=11 // pred_region
        _
      $region36: #{feature_extractor_eva_forward.8} parent=11 // pred_fallthru
        _
      // Predicated region
      $region37: #{feature_extractor_eva_forward.8} parent=11 // pred_check
        %p348 = pneg %p219
      $region38: #{feature_extractor_eva_forward.8} parent=11 // pred_check_branch
        %350 = sbr.rel (%p348) target = $region40
      $region39: #{feature_extractor_eva_forward.8} parent=11 // pred_region
        _
      $region40: #{feature_extractor_eva_forward.8} parent=11 // pred_fallthru
        _
    $region12: #{feature_extractor_eva_forward.8} parent=5 // pred_fallthru
      _
    %p351 = scmp.lt.s32.totalorder %s17, 2
    // Predicated region
    $region41: #{feature_extractor_eva_forward.8} parent=5 // pred_check
      %p352 = pneg %p351
    $region42: #{feature_extractor_eva_forward.8} parent=5 // pred_check_branch
      %354 = sbr.rel (%p352) target = $region44
    $region43: #{feature_extractor_eva_forward.8} parent=5 // pred_region
      // Predicated region
      $region45: #{feature_extractor_eva_forward.8} parent=43 // pred_check
        %p355 = pneg %p51
      $region46: #{feature_extractor_eva_forward.8} parent=43 // pred_check_branch
        %357 = sbr.rel (%p355) target = $region48
      $region47: #{feature_extractor_eva_forward.8} parent=43 // pred_region
        %p358 = scmp.lt.s32.totalorder %s24, 1
        %s359 = scalar_select %p358, %s24, 1
        %p360 = scmp.lt.s32.totalorder %s25, 0
        %s361 = scalar_select %p360, %s25, 0
        %s362 = sadd.s32 %s361, %s359
        %s363 = smul.addr %s362, 4
        %s364 = scalar_lea.vmem %s0, %s363
      $region48: #{feature_extractor_eva_forward.8} parent=43 // pred_fallthru
        _
    $region44: #{feature_extractor_eva_forward.8} parent=5 // pred_fallthru
      _
    %p365 = scmp.le.s32.totalorder 1, %s17
    %p366 = scmp.lt.s32.totalorder %s17, 3
    %p367 = pnand %p365, %p366
    %p368 = pneg %p367
    // Predicated region
    $region49: #{feature_extractor_eva_forward.8} parent=5 // pred_check
      _
    $region50: #{feature_extractor_eva_forward.8} parent=5 // pred_check_branch
      %370 = sbr.rel (%p367) target = $region52
    $region51: #{feature_extractor_eva_forward.8} parent=5 // pred_region
      %s371 = ssub.s32 %s17, 1
      %p372 = scmp.lt.s32.totalorder %s26, 1
      %s373 = scalar_select %p372, %s26, 1
      %p374 = scmp.lt.s32.totalorder %s27, 0
      %s375 = scalar_select %p374, %s27, 0
      %s376 = sadd.s32 %s375, %s373
      %s377 = smul.addr %s376, 4
      %s378 = scalar_lea.vmem %s0, %s377
      %p379 = pneg %p57
      %p380 = pneg %p54
      %p381 = scmp.lt.s32.totalorder %s27, 0
      %s382 = scalar_select %p381, %s27, 0
      %s383 = smul.addr %s382, 8
      %s384 = scalar_lea.vmem %s1, %s383
      %p385 = pneg %p83
      %p386 = pneg %p80
      %p387 = scmp.lt.s32.totalorder %s27, 0
      %s388 = scalar_select %p387, %s27, 0
      %s389 = smul.addr %s388, 8
      %s390 = scalar_lea.vmem %s2, %s389
      %p391 = pneg %p109
      %p392 = pneg %p106
      %p393 = scmp.lt.s32.totalorder %s27, 0
      %s394 = scalar_select %p393, %s27, 0
      %s395 = smul.addr %s394, 8
      %s396 = scalar_lea.vmem %s3, %s395
      %p397 = pneg %p135
      %p398 = pneg %p132
      %p399 = pneg %p156
      %p400 = pneg %p153
      %p401 = pneg %p177
      %p402 = pneg %p174
      %p403 = pneg %p198
      %p404 = pneg %p195
      %p405 = pneg %p219
      %p406 = pneg %p216
      %p407 = pneg %p247
      %p408 = pneg %p244
      %p409 = scmp.lt.s32.totalorder %s26, 1
      %s410 = scalar_select %p409, %s26, 1
      %p411 = scmp.lt.s32.totalorder %s27, 0
      %s412 = scalar_select %p411, %s27, 0
      %s413 = sadd.s32 %s412, %s410
      %s414 = smul.addr %s413, 4
      %s415 = scalar_lea.vmem %s8, %s414
      %p416 = pneg %p275
      %p417 = pneg %p272
      %p418 = scmp.lt.s32.totalorder %s26, 1
      %s419 = scalar_select %p418, %s26, 1
      %p420 = scmp.lt.s32.totalorder %s27, 0
      %s421 = scalar_select %p420, %s27, 0
      %s422 = sadd.s32 %s421, %s419
      %s423 = smul.addr %s422, 4
      %s424 = scalar_lea.vmem %s9, %s423
      %p425 = pneg %p303
      %p426 = pneg %p300
      %p427 = scmp.lt.s32.totalorder %s26, 1
      %s428 = scalar_select %p427, %s26, 1
      %p429 = scmp.lt.s32.totalorder %s27, 0
      %s430 = scalar_select %p429, %s27, 0
      %s431 = sadd.s32 %s430, %s428
      %s432 = smul.addr %s431, 4
      %s433 = scalar_lea.vmem %s10, %s432
      %p434 = scmp.lt.s32.totalorder %s26, 1
      %s435 = scalar_select %p434, %s26, 1
      %p436 = scmp.lt.s32.totalorder %s27, 0
      %s437 = scalar_select %p436, %s27, 0
      %s438 = sadd.s32 %s437, %s435
      %s439 = smul.addr %s438, 4
      %s440 = scalar_lea.vmem %s0, %s439
      %p441 = scmp.lt.s32.totalorder %s27, 0
      %s442 = scalar_select %p441, %s27, 0
      %s443 = smul.addr %s442, 8
      %s444 = scalar_lea.vmem %s1, %s443
      %p445 = scmp.lt.s32.totalorder %s27, 0
      %s446 = scalar_select %p445, %s27, 0
      %s447 = smul.addr %s446, 8
      %s448 = scalar_lea.vmem %s2, %s447
      %p449 = scmp.lt.s32.totalorder %s27, 0
      %s450 = scalar_select %p449, %s27, 0
      %s451 = smul.addr %s450, 8
      %s452 = scalar_lea.vmem %s3, %s451
      %p453 = scmp.lt.s32.totalorder %s26, 1
      %s454 = scalar_select %p453, %s26, 1
      %p455 = scmp.lt.s32.totalorder %s27, 0
      %s456 = scalar_select %p455, %s27, 0
      %s457 = sadd.s32 %s456, %s454
      %s458 = smul.addr %s457, 4
      %s459 = scalar_lea.vmem %s8, %s458
      %p460 = scmp.lt.s32.totalorder %s26, 1
      %s461 = scalar_select %p460, %s26, 1
      %p462 = scmp.lt.s32.totalorder %s27, 0
      %s463 = scalar_select %p462, %s27, 0
      %s464 = sadd.s32 %s463, %s461
      %s465 = smul.addr %s464, 4
      %s466 = scalar_lea.vmem %s9, %s465
      %p467 = scmp.lt.s32.totalorder %s26, 1
      %s468 = scalar_select %p467, %s26, 1
      %p469 = scmp.lt.s32.totalorder %s27, 0
      %s470 = scalar_select %p469, %s27, 0
      %s471 = sadd.s32 %s470, %s468
      %s472 = smul.addr %s471, 4
      %s473 = scalar_lea.vmem %s10, %s472
      %v475 = vld [vmem:[%s440] sm:$0x7]
      %v476 = vunpack.c.l.bf16 %v475
      %v477 = vld [vmem:[%s4] sm:$0x1]
      %v478 = vld [vmem:[%s5] sm:$0x1]
      %vm479 = vcmask 258048
      %v480 = vsel %vm479, %v476, 0.0
      %481 = vadd.xlane.f32.xlu0 %v480
      %v482 = vpop.xlane.xlu0 %481
      %v483 = vrcp.pop 32.0
      %v484 = vmul.f32 %v482, %v483
      %v485 = vsub.f32 %v476, %v484
      %v486 = vmul.f32 %v485, %v485
      %v487 = vsel %vm479, %v486, 0.0
      %488 = vadd.xlane.f32.xlu0 %v487
      %v489 = vpop.xlane.xlu0 %488
      %v490 = vmul.f32 %v489, %v483
      %v491 = vadd.f32 %v490, 1e-06
      %v492 = vrsqrt.pop %v491
      %v493 = vmul.f32 %v485, %v492
      %v495 = vlaneseq
      %v496 = vshrl.u32 %v495, 7
      %v497 = vsub.s32 0, %v496
      %v498 = vrot.slane %v477, %v497
      %v500 = vmul.f32 %v493, %v498
      %v502 = vlaneseq
      %v503 = vshrl.u32 %v502, 7
      %v504 = vsub.s32 0, %v503
      %v505 = vrot.slane %v478, %v504
      %v507 = vadd.f32 %v500, %v505
      %v508 = vpack.c.bf16 %v507, %v507
      %v509 = vld [vmem:[%s6] sm:$0xf]
      %v510 = vld [vmem:[%s6 + $0x4] sm:$0xf]
      %v511 = vld [vmem:[%s6 + $0x8] sm:$0xf]
      %v512 = vld [vmem:[%s6 + $0xc] sm:$0xf]
      %v513 = vld [vmem:[%s7] sm:$0x1]
      %v515 = vlaneseq
      %v516 = vshrl.u32 %v515, 7
      %v517 = vsub.s32 0, %v516
      %v518 = vrot.slane %v513, %v517
      %v524 = vunpack.c.l.b16 %v509
      %v525 = vunpack.c.l.b16 %v510
      %v526 = vunpack.c.l.b16 %v511
      %v527 = vunpack.c.l.b16 %v512
      %v528 = vpack.c.b16 %v525, %v524
      %v529 = vpack.c.b16 %v527, %v526
      %vm532 = vcmask 261120
      %v534 = vsel %vm532, %v508, 0
      %536 = vmatprep.subr.bf16.mxu0 0
      %537 = vmatpush1.bf16.msra.mxu0 %v528
      %538 = vmatprep.subr.bf16.mxu0 0
      %539 = vmatpush1.bf16.msra.mxu0 %v529
      %540 = vmatprep.subr.bf16.mxu0 0
      %541 = vmatpush1.bf16.msra.mxu0 0
      %542 = vmatprep.subr.bf16.mxu0 0
      %543 = vmatpush1.bf16.msra.mxu0 0
      %544 = vmatprep.subr.bf16.mxu0 0
      %545 = vmatpush1.bf16.msra.mxu0 0
      %546 = vmatprep.subr.bf16.mxu0 0
      %547 = vmatpush1.bf16.msra.mxu0 0
      %548 = vmatprep.subr.bf16.mxu0 0
      %549 = vmatpush1.bf16.msra.mxu0 0
      %550 = vmatprep.subr.bf16.mxu0 0
      %551 = vmatpush1.bf16.msra.mxu0 0
      %552 = vmatprep.subr.bf16.mxu0 0
      %553 = vmatpush1.bf16.msra.mxu0 0
      %554 = vmatprep.subr.bf16.mxu0 0
      %555 = vmatpush1.bf16.msra.mxu0 0
      %556 = vmatprep.subr.bf16.mxu0 0
      %557 = vmatpush1.bf16.msra.mxu0 0
      %558 = vmatprep.subr.bf16.mxu0 0
      %559 = vmatpush1.bf16.msra.mxu0 0
      %560 = vmatprep.subr.bf16.mxu0 0
      %561 = vmatpush1.bf16.msra.mxu0 0
      %562 = vmatprep.subr.bf16.mxu0 0
      %563 = vmatpush1.bf16.msra.mxu0 0
      %564 = vmatprep.subr.bf16.mxu0 0
      %565 = vmatpush1.bf16.msra.mxu0 0
      %566 = vmatprep.subr.bf16.mxu0 0
      %567 = vmatpush1.bf16.msra.mxu0 0
      %568 = vmatprep.mubr.bf16.mxu0 0
      %569 = vmatmul.mubr.bf16.gmra.mrb[0].mxu0 %v534
      %v570 = vpop.f32.mrb[0].mxu0
      %v571 = vadd.f32 %v518, %v570
      %v572 = vpop.f32.mrb[0].mxu0
      %v573 = vpop.f32.mrb[0].mxu0
      %v574 = vpop.f32.mrb[0].mxu0
      %575 = vdwg.mxu0
      %v576 = vld [vmem:[%s444] sm:$0x1f]
      %v577 = vld [vmem:[%s448] sm:$0x1f]
      %v578 = vld [vmem:[%s452] sm:$0x1f]
      %v579 = vmul.f32 %v571, 0.35355338
      %v580 = vmul.f32 %v579, %v576
      %vm581 = vcmask 1047808
      %582 = vrot.lane.b32.xlu0 %v579, 32
      %v583 = vpop.permute.xlu0 %582
      %v584 = vsel %vm581, %v583, %v579
      %585 = vrot.lane.b32.xlu0 %v584, 32
      %v586 = vpop.permute.xlu0 %585
      %v587 = vsel %vm581, %v586, %v579
      %589 = vrot.lane.b32.xlu0 %v577, 1
      %v590 = vpop.permute.xlu0 %589
      %v592 = vmul.f32 %v587, %v590
      %594 = vrot.lane.b32.xlu0 %v592, 127
      %v595 = vpop.permute.xlu0 %594
      %v597 = vadd.f32 %v580, %v595
      %599 = vrot.lane.b32.xlu0 %v578, 31
      %v600 = vpop.permute.xlu0 %599
      %v602 = vmul.f32 %v587, %v600
      %604 = vrot.lane.b32.xlu0 %v602, 97
      %v605 = vpop.permute.xlu0 %604
      %v607 = vadd.f32 %v597, %v605
      %v608 = vpack.c.bf16 %v607, %v607
      %vm609 = vcmask 256000
      %vm610 = vsmask.f32 2304
      %vm611 = vmand %vm609, %vm610
      %v612 = vld [vmem:[%s459] sm:$0x7]
      %v613 = vsel %vm611, %v608, %v612
      %614 = vst [vmem:[%s459] sm:$0x7] %v613
      %616 = vrot.lane.b32.xlu0 %v576, 32
      %v617 = vpop.permute.xlu0 %616
      %v619 = vmul.f32 %v571, %v617
      %621 = vrot.lane.b32.xlu0 %v571, 96
      %v622 = vpop.permute.xlu0 %621
      %624 = vrot.lane.b32.xlu0 %v622, 32
      %v625 = vpop.permute.xlu0 %624
      %v626 = vsel %vm581, %v625, %v622
      %627 = vrot.lane.b32.xlu0 %v626, 32
      %v628 = vpop.permute.xlu0 %627
      %v629 = vsel %vm581, %v628, %v622
      %v630 = vmul.f32 %v629, %v590
      %632 = vrot.lane.b32.xlu0 %v630, 31
      %v633 = vpop.permute.xlu0 %632
      %v635 = vadd.f32 %v619, %v633
      %v636 = vmul.f32 %v629, %v600
      %638 = vrot.lane.b32.xlu0 %v636, 1
      %v639 = vpop.permute.xlu0 %638
      %v641 = vadd.f32 %v635, %v639
      %v642 = vpack.c.bf16 %v641, %v641
      %v644 = vunpack.c.l.b16 %v642
      %v645 = vpack.c.b16 %v644, %v644
      %646 = vrot.lane.b32.xlu0 %v645, 96
      %v647 = vpop.permute.xlu0 %646
      %v649 = vld [vmem:[%s466] sm:$0x7]
      %v650 = vsel %vm611, %v647, %v649
      %651 = vst [vmem:[%s466] sm:$0x7] %v650
      %v652 = vpack.c.bf16 %v571, %v571
      %v654 = vunpack.c.l.b16 %v652
      %v655 = vpack.c.b16 %v654, %v654
      %656 = vrot.lane.b32.xlu0 %v655, 64
      %v657 = vpop.permute.xlu0 %656
      %v659 = vld [vmem:[%s473] sm:$0x7]
      %v660 = vsel %vm611, %v657, %v659
      %661 = vst [vmem:[%s473] sm:$0x7] %v660
      %p662 = scmp.lt.s32.totalorder %s26, 1
      %s663 = scalar_select %p662, %s26, 1
      %p664 = scmp.lt.s32.totalorder %s27, 0
      %s665 = scalar_select %p664, %s27, 0
      %s666 = sadd.s32 %s665, %s663
      %s667 = smul.addr %s666, 4
      %s668 = scalar_lea.vmem %s8, %s667
      %p669 = scmp.lt.s32.totalorder %s26, 1
      %s670 = scalar_select %p669, %s26, 1
      %p671 = scmp.lt.s32.totalorder %s27, 0
      %s672 = scalar_select %p671, %s27, 0
      %s673 = sadd.s32 %s672, %s670
      %s674 = smul.addr %s673, 4
      %s675 = scalar_lea.vmem %s9, %s674
      %p676 = scmp.lt.s32.totalorder %s26, 1
      %s677 = scalar_select %p676, %s26, 1
      %p678 = scmp.lt.s32.totalorder %s27, 0
      %s679 = scalar_select %p678, %s27, 0
      %s680 = sadd.s32 %s679, %s677
      %s681 = smul.addr %s680, 4
      %s682 = scalar_lea.vmem %s10, %s681
      // Predicated region
      $region53: #{feature_extractor_eva_forward.8} parent=51 // pred_check
        %p683 = pneg %p244
      $region54: #{feature_extractor_eva_forward.8} parent=51 // pred_check_branch
        %685 = sbr.rel (%p683) target = $region56
      $region55: #{feature_extractor_eva_forward.8} parent=51 // pred_region
        _
      $region56: #{feature_extractor_eva_forward.8} parent=51 // pred_fallthru
        _
      // Predicated region
      $region57: #{feature_extractor_eva_forward.8} parent=51 // pred_check
        %p686 = pneg %p272
      $region58: #{feature_extractor_eva_forward.8} parent=51 // pred_check_branch
        %688 = sbr.rel (%p686) target = $region60
      $region59: #{feature_extractor_eva_forward.8} parent=51 // pred_region
        _
      $region60: #{feature_extractor_eva_forward.8} parent=51 // pred_fallthru
        _
      // Predicated region
      $region61: #{feature_extractor_eva_forward.8} parent=51 // pred_check
        %p689 = pneg %p300
      $region62: #{feature_extractor_eva_forward.8} parent=51 // pred_check_branch
        %691 = sbr.rel (%p689) target = $region64
      $region63: #{feature_extractor_eva_forward.8} parent=51 // pred_region
        _
      $region64: #{feature_extractor_eva_forward.8} parent=51 // pred_fallthru
        _
    $region52: #{feature_extractor_eva_forward.8} parent=5 // pred_fallthru
      _
    %p692 = scmp.le.s32.totalorder 2, %s17
    // Predicated region
    $region65: #{feature_extractor_eva_forward.8} parent=5 // pred_check
      %p693 = pneg %p692
    $region66: #{feature_extractor_eva_forward.8} parent=5 // pred_check_branch
      %695 = sbr.rel (%p693) target = $region68
    $region67: #{feature_extractor_eva_forward.8} parent=5 // pred_region
      %s696 = ssub.s32 %s17, 2
      // Predicated region
      $region69: #{feature_extractor_eva_forward.8} parent=67 // pred_check
        %p697 = pneg %p250
      $region70: #{feature_extractor_eva_forward.8} parent=67 // pred_check_branch
        %699 = sbr.rel (%p697) target = $region72
      $region71: #{feature_extractor_eva_forward.8} parent=67 // pred_region
        %p700 = scmp.lt.s32.totalorder %s28, 1
        %s701 = scalar_select %p700, %s28, 1
        %p702 = scmp.lt.s32.totalorder %s29, 0
        %s703 = scalar_select %p702, %s29, 0
        %s704 = sadd.s32 %s703, %s701
        %s705 = smul.addr %s704, 4
        %s706 = scalar_lea.vmem %s8, %s705
      $region72: #{feature_extractor_eva_forward.8} parent=67 // pred_fallthru
        _
      // Predicated region
      $region73: #{feature_extractor_eva_forward.8} parent=67 // pred_check
        %p707 = pneg %p278
      $region74: #{feature_extractor_eva_forward.8} parent=67 // pred_check_branch
        %709 = sbr.rel (%p707) target = $region76
      $region75: #{feature_extractor_eva_forward.8} parent=67 // pred_region
        %p710 = scmp.lt.s32.totalorder %s28, 1
        %s711 = scalar_select %p710, %s28, 1
        %p712 = scmp.lt.s32.totalorder %s29, 0
        %s713 = scalar_select %p712, %s29, 0
        %s714 = sadd.s32 %s713, %s711
        %s715 = smul.addr %s714, 4
        %s716 = scalar_lea.vmem %s9, %s715
      $region76: #{feature_extractor_eva_forward.8} parent=67 // pred_fallthru
        _
      // Predicated region
      $region77: #{feature_extractor_eva_forward.8} parent=67 // pred_check
        %p717 = pneg %p306
      $region78: #{feature_extractor_eva_forward.8} parent=67 // pred_check_branch
        %719 = sbr.rel (%p717) target = $region80
      $region79: #{feature_extractor_eva_forward.8} parent=67 // pred_region
        %p720 = scmp.lt.s32.totalorder %s28, 1
        %s721 = scalar_select %p720, %s28, 1
        %p722 = scmp.lt.s32.totalorder %s29, 0
        %s723 = scalar_select %p722, %s29, 0
        %s724 = sadd.s32 %s723, %s721
        %s725 = smul.addr %s724, 4
        %s726 = scalar_lea.vmem %s10, %s725
      $region80: #{feature_extractor_eva_forward.8} parent=67 // pred_fallthru
        _
    $region68: #{feature_extractor_eva_forward.8} parent=5 // pred_fallthru
      _
  $region6: #{feature_extractor_eva_forward.8} parent=0 // loop_footer
    %s21 = sadd.s32 1, %s17
  $region7: #{feature_extractor_eva_forward.8} parent=0 // loop_footer_branch
    %16 = sbr.rel target = $region3
  $region8: #{feature_extractor_eva_forward.8} parent=0 // loop_exit
    _

// kernel: feature_extractor_eva_forward.10
$region0: #{feature_extractor_eva_forward.10}
  #allocation0 [shape = 'u32[]', space=smem, size = 0x4, offset = 0x4, fixed_abs, tag = 'smem constant byte address 0x4 - core index']
  #allocation1 [shape = 'u32[144,128]{1,0:T(1,128)}', space=vmem, size = 0x12000, scoped, tag = 'internal scratch']
  %s0 = inlined_call_operand.vmem [shape: bf16[10,32], index: 0, kind: input, shape index: {}]
  %s1 = inlined_call_operand.vmem [shape: f32[1,32], index: 1, kind: input, shape index: {}]
  %s2 = inlined_call_operand.vmem [shape: f32[1,32], index: 2, kind: input, shape index: {}]
  %s3 = inlined_call_operand.vmem [shape: bf16[32,128], index: 3, kind: input, shape index: {}]
  %s4 = inlined_call_operand.vmem [shape: f32[1,128], index: 4, kind: input, shape index: {}]
  %s5 = inlined_call_operand.vmem [shape: bf16[128,32], index: 5, kind: input, shape index: {}]
  %s6 = inlined_call_operand.vmem [shape: f32[1,32], index: 6, kind: input, shape index: {}]
  %s7 = inlined_call_operand.vmem [shape: f32[1,32], index: 7, kind: input, shape index: {}]
  %s8 = inlined_call_operand.vmem [shape: f32[1,32], index: 8, kind: input, shape index: {}]
  %s9 = inlined_call_operand.vmem [shape: bf16[10,32], index: 9, kind: output, shape index: {0}]
  %s10 = inlined_call_operand.vmem [shape: bf16[10,32], index: 10, kind: output, shape index: {1}]
  %11 = xla_tuple %s9, %s10
  %s12 = sld [smem:[#allocation0]]
  $region54: #{feature_extractor_eva_forward.10} parent=0
    _
  %s14 = ssub.s32 1, %s12
  %s15 = scalar_select 0, %s14, %s12
  // Predicated region
  $region2: #{feature_extractor_eva_forward.10} parent=0 // pred_check
    _
  $region3: #{feature_extractor_eva_forward.10} parent=0 // pred_check_branch
    %17 = sbr.rel (0) target = $region5
  $region4: #{feature_extractor_eva_forward.10} parent=0 // pred_region
    _
  $region5: #{feature_extractor_eva_forward.10} parent=0 // pred_fallthru
    _
  // Predicated region
  $region6: #{feature_extractor_eva_forward.10} parent=0 // pred_check
    _
  $region7: #{feature_extractor_eva_forward.10} parent=0 // pred_check_branch
    %19 = sbr.rel (0) target = $region9
  $region8: #{feature_extractor_eva_forward.10} parent=0 // pred_region
    _
  $region9: #{feature_extractor_eva_forward.10} parent=0 // pred_fallthru
    _
  // Predicated region
  $region10: #{feature_extractor_eva_forward.10} parent=0 // pred_check
    _
  $region11: #{feature_extractor_eva_forward.10} parent=0 // pred_check_branch
    %21 = sbr.rel (0) target = $region13
  $region12: #{feature_extractor_eva_forward.10} parent=0 // pred_region
    _
  $region13: #{feature_extractor_eva_forward.10} parent=0 // pred_fallthru
    _
  // Predicated region
  $region14: #{feature_extractor_eva_forward.10} parent=0 // pred_check
    _
  $region15: #{feature_extractor_eva_forward.10} parent=0 // pred_check_branch
    %23 = sbr.rel (0) target = $region17
  $region16: #{feature_extractor_eva_forward.10} parent=0 // pred_region
    _
  $region17: #{feature_extractor_eva_forward.10} parent=0 // pred_fallthru
    _
  // Predicated region
  $region18: #{feature_extractor_eva_forward.10} parent=0 // pred_check
    _
  $region19: #{feature_extractor_eva_forward.10} parent=0 // pred_check_branch
    %25 = sbr.rel (0) target = $region21
  $region20: #{feature_extractor_eva_forward.10} parent=0 // pred_region
    _
  $region21: #{feature_extractor_eva_forward.10} parent=0 // pred_fallthru
    _
  // Predicated region
  $region22: #{feature_extractor_eva_forward.10} parent=0 // pred_check
    _
  $region23: #{feature_extractor_eva_forward.10} parent=0 // pred_check_branch
    %27 = sbr.rel (0) target = $region25
  $region24: #{feature_extractor_eva_forward.10} parent=0 // pred_region
    _
  $region25: #{feature_extractor_eva_forward.10} parent=0 // pred_fallthru
    _
  // Predicated region
  $region26: #{feature_extractor_eva_forward.10} parent=0 // pred_check
    _
  $region27: #{feature_extractor_eva_forward.10} parent=0 // pred_check_branch
    %29 = sbr.rel (0) target = $region29
  $region28: #{feature_extractor_eva_forward.10} parent=0 // pred_region
    _
  $region29: #{feature_extractor_eva_forward.10} parent=0 // pred_fallthru
    _
  // Predicated region
  $region30: #{feature_extractor_eva_forward.10} parent=0 // pred_check
    _
  $region31: #{feature_extractor_eva_forward.10} parent=0 // pred_check_branch
    %31 = sbr.rel (0) target = $region33
  $region32: #{feature_extractor_eva_forward.10} parent=0 // pred_region
    _
  $region33: #{feature_extractor_eva_forward.10} parent=0 // pred_fallthru
    _
  // Predicated region
  $region34: #{feature_extractor_eva_forward.10} parent=0 // pred_check
    _
  $region35: #{feature_extractor_eva_forward.10} parent=0 // pred_check_branch
    %33 = sbr.rel (0) target = $region37
  $region36: #{feature_extractor_eva_forward.10} parent=0 // pred_region
    _
  $region37: #{feature_extractor_eva_forward.10} parent=0 // pred_fallthru
    _
  %v35 = vld [vmem:[%s0] sm:$0xf]
  %v36 = vld [vmem:[%s0 + $0x4] sm:$0x1]
  %v37 = vunpack.c.l.bf16 %v35
  %v38 = vunpack.c.l.bf16 %v36
  %v39 = vld [vmem:[%s1] sm:$0x1]
  %v40 = vld [vmem:[%s2] sm:$0x1]
  %vm41 = vcmask 261120
  %v42 = vsel %vm41, %v37, 0.0
  %43 = vadd.xlane.f32.xlu0 %v42
  %v44 = vpop.xlane.xlu0 %43
  %vm45 = vcmask 254976
  %v46 = vsel %vm45, %v38, 0.0
  %47 = vadd.xlane.f32.xlu0 %v46
  %v48 = vpop.xlane.xlu0 %47
  %v49 = vrcp.pop 32.0
  %v50 = vmul.f32 %v44, %v49
  %v51 = vmul.f32 %v48, %v49
  %v52 = vsub.f32 %v37, %v50
  %v53 = vsub.f32 %v38, %v51
  %v54 = vmul.f32 %v52, %v52
  %v55 = vmul.f32 %v53, %v53
  %v56 = vsel %vm41, %v54, 0.0
  %57 = vadd.xlane.f32.xlu0 %v56
  %v58 = vpop.xlane.xlu0 %57
  %v59 = vsel %vm45, %v55, 0.0
  %60 = vadd.xlane.f32.xlu0 %v59
  %v61 = vpop.xlane.xlu0 %60
  %v62 = vmul.f32 %v58, %v49
  %v63 = vmul.f32 %v61, %v49
  %v64 = vadd.f32 %v62, 1e-06
  %v65 = vadd.f32 %v63, 1e-06
  %v66 = vrsqrt.pop %v64
  %v67 = vrsqrt.pop %v65
  %v68 = vmul.f32 %v52, %v66
  %v69 = vmul.f32 %v53, %v67
  %v71 = vlaneseq
  %v72 = vshrl.u32 %v71, 7
  %v73 = vsub.s32 0, %v72
  %v74 = vrot.slane %v39, %v73
  %v76 = vmul.f32 %v68, %v74
  %v77 = vmul.f32 %v69, %v74
  %v79 = vlaneseq
  %v80 = vshrl.u32 %v79, 7
  %v81 = vsub.s32 0, %v80
  %v82 = vrot.slane %v40, %v81
  %v84 = vadd.f32 %v76, %v82
  %v85 = vadd.f32 %v77, %v82
  %v86 = vpack.c.bf16 %v85, %v84
  %v87 = vld [vmem:[%s3] sm:$0xf]
  %v88 = vld [vmem:[%s3 + $0x4] sm:$0xf]
  %v89 = vld [vmem:[%s3 + $0x8] sm:$0xf]
  %v90 = vld [vmem:[%s3 + $0xc] sm:$0xf]
  %v91 = vld [vmem:[%s4] sm:$0x1]
  %v93 = vlaneseq
  %v94 = vshrl.u32 %v93, 7
  %v95 = vsub.s32 0, %v94
  %v96 = vrot.slane %v91, %v95
  %v102 = vunpack.c.l.b16 %v87
  %v103 = vunpack.c.l.b16 %v88
  %v104 = vunpack.c.l.b16 %v89
  %v105 = vunpack.c.l.b16 %v90
  %v106 = vpack.c.b16 %v103, %v102
  %v107 = vpack.c.b16 %v105, %v104
  %v111 = vsel %vm41, %v86, 0
  %113 = vmatprep.subr.bf16.mxu0 0
  %114 = vmatpush1.bf16.msra.mxu0 %v106
  %115 = vmatprep.subr.bf16.mxu0 0
  %116 = vmatpush1.bf16.msra.mxu0 %v107
  %117 = vmatprep.subr.bf16.mxu0 0
  %118 = vmatpush1.bf16.msra.mxu0 0
  %119 = vmatprep.subr.bf16.mxu0 0
  %120 = vmatpush1.bf16.msra.mxu0 0
  %121 = vmatprep.subr.bf16.mxu0 0
  %122 = vmatpush1.bf16.msra.mxu0 0
  %123 = vmatprep.subr.bf16.mxu0 0
  %124 = vmatpush1.bf16.msra.mxu0 0
  %125 = vmatprep.subr.bf16.mxu0 0
  %126 = vmatpush1.bf16.msra.mxu0 0
  %127 = vmatprep.subr.bf16.mxu0 0
  %128 = vmatpush1.bf16.msra.mxu0 0
  %129 = vmatprep.subr.bf16.mxu0 0
  %130 = vmatpush1.bf16.msra.mxu0 0
  %131 = vmatprep.subr.bf16.mxu0 0
  %132 = vmatpush1.bf16.msra.mxu0 0
  %133 = vmatprep.subr.bf16.mxu0 0
  %134 = vmatpush1.bf16.msra.mxu0 0
  %135 = vmatprep.subr.bf16.mxu0 0
  %136 = vmatpush1.bf16.msra.mxu0 0
  %137 = vmatprep.subr.bf16.mxu0 0
  %138 = vmatpush1.bf16.msra.mxu0 0
  %139 = vmatprep.subr.bf16.mxu0 0
  %140 = vmatpush1.bf16.msra.mxu0 0
  %141 = vmatprep.subr.bf16.mxu0 0
  %142 = vmatpush1.bf16.msra.mxu0 0
  %143 = vmatprep.subr.bf16.mxu0 0
  %144 = vmatpush1.bf16.msra.mxu0 0
  %145 = vmatprep.mubr.bf16.mxu0 0
  %146 = vmatmul.mubr.bf16.gmra.mrb[0].mxu0 %v111
  %v147 = vpop.f32.mrb[0].mxu0
  %v148 = vadd.f32 %v96, %v147
  %v149 = vpop.f32.mrb[0].mxu0
  %v150 = vpop.f32.mrb[0].mxu0
  %v151 = vadd.f32 %v96, %v150
  %v152 = vpop.f32.mrb[0].mxu0
  %153 = vdwg.mxu0
  %v154 = vmul.f32 %v148, %v148
  %v155 = vmul.f32 %v151, %v151
  %v156 = vmul.f32 %v148, %v154
  %v157 = vmul.f32 %v151, %v155
  %v158 = vmul.f32 %v156, 0.044715
  %v159 = vmul.f32 %v157, 0.044715
  %v160 = vadd.f32 %v148, %v158
  %v161 = vadd.f32 %v151, %v159
  %v162 = vmul.f32 %v160, 0.7978846
  %v163 = vmul.f32 %v161, 0.7978846
  %v164 = vtanh.pop %v162
  %v165 = vtanh.pop %v163
  %v166 = vadd.f32 %v164, 1.0
  %v167 = vadd.f32 %v165, 1.0
  %v168 = vmul.f32 %v166, 0.5
  %v169 = vmul.f32 %v167, 0.5
  %v170 = vmul.f32 %v148, %v168
  %v171 = vmul.f32 %v151, %v169
  %v172 = vpack.c.bf16 %v171, %v170
  %v173 = vld [vmem:[%s5] sm:$0xf]
  %v174 = vld [vmem:[%s5 + $0x4] sm:$0xf]
  %v175 = vld [vmem:[%s5 + $0x8] sm:$0xf]
  %v176 = vld [vmem:[%s5 + $0xc] sm:$0xf]
  %v177 = vld [vmem:[%s5 + $0x10] sm:$0xf]
  %v178 = vld [vmem:[%s5 + $0x14] sm:$0xf]
  %v179 = vld [vmem:[%s5 + $0x18] sm:$0xf]
  %v180 = vld [vmem:[%s5 + $0x1c] sm:$0xf]
  %v181 = vld [vmem:[%s5 + $0x20] sm:$0xf]
  %v182 = vld [vmem:[%s5 + $0x24] sm:$0xf]
  %v183 = vld [vmem:[%s5 + $0x28] sm:$0xf]
  %v184 = vld [vmem:[%s5 + $0x2c] sm:$0xf]
  %v185 = vld [vmem:[%s5 + $0x30] sm:$0xf]
  %v186 = vld [vmem:[%s5 + $0x34] sm:$0xf]
  %v187 = vld [vmem:[%s5 + $0x38] sm:$0xf]
  %v188 = vld [vmem:[%s5 + $0x3c] sm:$0xf]
  %v189 = vld [vmem:[%s6] sm:$0x1]
  %v191 = vlaneseq
  %v192 = vshrl.u32 %v191, 7
  %v193 = vsub.s32 0, %v192
  %v194 = vrot.slane %v189, %v193
  %v212 = vunpack.c.l.b16 %v173
  %v213 = vunpack.c.l.b16 %v174
  %v214 = vunpack.c.l.b16 %v175
  %v215 = vunpack.c.l.b16 %v176
  %v216 = vunpack.c.l.b16 %v177
  %v217 = vunpack.c.l.b16 %v178
  %v218 = vunpack.c.l.b16 %v179
  %v219 = vunpack.c.l.b16 %v180
  %v220 = vunpack.c.l.b16 %v181
  %v221 = vunpack.c.l.b16 %v182
  %v222 = vunpack.c.l.b16 %v183
  %v223 = vunpack.c.l.b16 %v184
  %v224 = vunpack.c.l.b16 %v185
  %v225 = vunpack.c.l.b16 %v186
  %v226 = vunpack.c.l.b16 %v187
  %v227 = vunpack.c.l.b16 %v188
  %v228 = vpack.c.b16 %v213, %v212
  %v229 = vpack.c.b16 %v215, %v214
  %v230 = vpack.c.b16 %v217, %v216
  %v231 = vpack.c.b16 %v219, %v218
  %v232 = vpack.c.b16 %v221, %v220
  %v233 = vpack.c.b16 %v223, %v222
  %v234 = vpack.c.b16 %v225, %v224
  %v235 = vpack.c.b16 %v227, %v226
  %244 = vmatprep.subr.bf16.mxu0 0
  %245 = vmatpush1.bf16.msra.mxu0 %v228
  %246 = vmatprep.subr.bf16.mxu0 0
  %247 = vmatpush1.bf16.msra.mxu0 %v229
  %248 = vmatprep.subr.bf16.mxu0 0
  %249 = vmatpush1.bf16.msra.mxu0 %v230
  %250 = vmatprep.subr.bf16.mxu0 0
  %251 = vmatpush1.bf16.msra.mxu0 %v231
  %252 = vmatprep.subr.bf16.mxu0 0
  %253 = vmatpush1.bf16.msra.mxu0 %v232
  %254 = vmatprep.subr.bf16.mxu0 0
  %255 = vmatpush1.bf16.msra.mxu0 %v233
  %256 = vmatprep.subr.bf16.mxu0 0
  %257 = vmatpush1.bf16.msra.mxu0 %v234
  %258 = vmatprep.subr.bf16.mxu0 0
  %259 = vmatpush1.bf16.msra.mxu0 %v235
  %260 = vmatprep.subr.bf16.mxu0 0
  %261 = vmatpush1.bf16.msra.mxu0 0
  %262 = vmatprep.subr.bf16.mxu0 0
  %263 = vmatpush1.bf16.msra.mxu0 0
  %264 = vmatprep.subr.bf16.mxu0 0
  %265 = vmatpush1.bf16.msra.mxu0 0
  %266 = vmatprep.subr.bf16.mxu0 0
  %267 = vmatpush1.bf16.msra.mxu0 0
  %268 = vmatprep.subr.bf16.mxu0 0
  %269 = vmatpush1.bf16.msra.mxu0 0
  %270 = vmatprep.subr.bf16.mxu0 0
  %271 = vmatpush1.bf16.msra.mxu0 0
  %272 = vmatprep.subr.bf16.mxu0 0
  %273 = vmatpush1.bf16.msra.mxu0 0
  %274 = vmatprep.subr.bf16.mxu0 0
  %275 = vmatpush1.bf16.msra.mxu0 0
  %276 = vmatprep.mubr.bf16.mxu0 0
  %277 = vmatmul.mubr.bf16.gmra.mrb[0].mxu0 %v172
  %v278 = vpop.f32.mrb[0].mxu0
  %v279 = vadd.f32 %v194, %v278
  %v280 = vpop.f32.mrb[0].mxu0
  %v281 = vpop.f32.mrb[0].mxu0
  %v282 = vadd.f32 %v194, %v281
  %v283 = vpop.f32.mrb[0].mxu0
  %284 = vdwg.mxu0
  %v285 = vadd.f32 %v37, %v279
  %v286 = vadd.f32 %v38, %v282
  %v287 = vpack.c.bf16 %v286, %v285
  %v289 = vunpack.c.l.b16 %v287
  %v290 = vunpack.c.h.b16 %v287
  %v291 = vpack.c.b16 %v289, %v289
  %v292 = vpack.c.b16 %v290, %v290
  %vm295 = vcmask 257024
  %296 = vst.msk [vmem:[%s9] sm:$0xf] %vm295, %v291
  %vm297 = vcmask 253952
  %298 = vst.msk [vmem:[%s9 + $0x4] sm:$0x1] %vm297, %v292
  %v299 = vld [vmem:[%s7] sm:$0x1]
  %v300 = vld [vmem:[%s8] sm:$0x1]
  %v301 = vsel %vm41, %v285, 0.0
  %302 = vadd.xlane.f32.xlu0 %v301
  %v303 = vpop.xlane.xlu0 %302
  %v304 = vsel %vm45, %v286, 0.0
  %305 = vadd.xlane.f32.xlu0 %v304
  %v306 = vpop.xlane.xlu0 %305
  %v307 = vmul.f32 %v303, %v49
  %v308 = vmul.f32 %v306, %v49
  %v309 = vsub.f32 %v285, %v307
  %v310 = vsub.f32 %v286, %v308
  %v311 = vmul.f32 %v309, %v309
  %v312 = vmul.f32 %v310, %v310
  %v313 = vsel %vm41, %v311, 0.0
  %314 = vadd.xlane.f32.xlu0 %v313
  %v315 = vpop.xlane.xlu0 %314
  %v316 = vsel %vm45, %v312, 0.0
  %317 = vadd.xlane.f32.xlu0 %v316
  %v318 = vpop.xlane.xlu0 %317
  %v319 = vmul.f32 %v315, %v49
  %v320 = vmul.f32 %v318, %v49
  %v321 = vadd.f32 %v319, 1e-06
  %v322 = vadd.f32 %v320, 1e-06
  %v323 = vrsqrt.pop %v321
  %v324 = vrsqrt.pop %v322
  %v325 = vmul.f32 %v309, %v323
  %v326 = vmul.f32 %v310, %v324
  %v328 = vlaneseq
  %v329 = vshrl.u32 %v328, 7
  %v330 = vsub.s32 0, %v329
  %v331 = vrot.slane %v299, %v330
  %v333 = vmul.f32 %v325, %v331
  %v334 = vmul.f32 %v326, %v331
  %v336 = vlaneseq
  %v337 = vshrl.u32 %v336, 7
  %v338 = vsub.s32 0, %v337
  %v339 = vrot.slane %v300, %v338
  %v341 = vadd.f32 %v333, %v339
  %v342 = vadd.f32 %v334, %v339
  %v343 = vpack.c.bf16 %v342, %v341
  %v345 = vunpack.c.l.b16 %v343
  %v346 = vunpack.c.h.b16 %v343
  %v347 = vpack.c.b16 %v345, %v345
  %v348 = vpack.c.b16 %v346, %v346
  %351 = vst.msk [vmem:[%s10] sm:$0xf] %vm295, %v347
  %352 = vst.msk [vmem:[%s10 + $0x4] sm:$0x1] %vm297, %v348
  // Predicated region
  $region38: #{feature_extractor_eva_forward.10} parent=0 // pred_check
    _
  $region39: #{feature_extractor_eva_forward.10} parent=0 // pred_check_branch
    %354 = sbr.rel (0) target = $region41
  $region40: #{feature_extractor_eva_forward.10} parent=0 // pred_region
    _
  $region41: #{feature_extractor_eva_forward.10} parent=0 // pred_fallthru
    _
  // Predicated region
  $region42: #{feature_extractor_eva_forward.10} parent=0 // pred_check
    _
  $region43: #{feature_extractor_eva_forward.10} parent=0 // pred_check_branch
    %356 = sbr.rel (0) target = $region45
  $region44: #{feature_extractor_eva_forward.10} parent=0 // pred_region
    _
  $region45: #{feature_extractor_eva_forward.10} parent=0 // pred_fallthru
    _
  // Predicated region
  $region46: #{feature_extractor_eva_forward.10} parent=0 // pred_check
    _
  $region47: #{feature_extractor_eva_forward.10} parent=0 // pred_check_branch
    %358 = sbr.rel (0) target = $region49
  $region48: #{feature_extractor_eva_forward.10} parent=0 // pred_region
    _
  $region49: #{feature_extractor_eva_forward.10} parent=0 // pred_fallthru
    _
  // Predicated region
  $region50: #{feature_extractor_eva_forward.10} parent=0 // pred_check
    _
  $region51: #{feature_extractor_eva_forward.10} parent=0 // pred_check_branch
    %360 = sbr.rel (0) target = $region53
  $region52: #{feature_extractor_eva_forward.10} parent=0 // pred_region
    _
  $region53: #{feature_extractor_eva_forward.10} parent=0 // pred_fallthru
    _

// kernel: feature_extractor_eva_forward.9
$region0: #{feature_extractor_eva_forward.9}
  #allocation0 [shape = 'u32[]', space=smem, size = 0x4, offset = 0x4, fixed_abs, tag = 'smem constant byte address 0x4 - core index']
  #allocation1 [shape = 'u32[144,128]{1,0:T(1,128)}', space=vmem, size = 0x12000, scoped, tag = 'internal scratch']
  %s0 = inlined_call_operand.vmem [shape: bf16[2,5,32], index: 0, kind: input, shape index: {}]
  %s1 = inlined_call_operand.vmem [shape: bf16[2,5,32], index: 1, kind: input, shape index: {}]
  %s2 = inlined_call_operand.vmem [shape: bf16[2,5,32], index: 2, kind: input, shape index: {}]
  %s3 = inlined_call_operand.vmem [shape: bf16[2,5,32], index: 3, kind: input, shape index: {}]
  %s4 = inlined_call_operand.vmem [shape: bf16[32,32], index: 4, kind: input, shape index: {}]
  %s5 = inlined_call_operand.vmem [shape: f32[1,32], index: 5, kind: input, shape index: {}]
  %s6 = inlined_call_operand.vmem [shape: bf16[2,5,32], index: 6, kind: output, shape index: {}]
  %s7 = sld [smem:[#allocation0]]
  $region57: #{feature_extractor_eva_forward.9} parent=0
    _
  %s9 = ssub.s32 1, %s7
  %s10 = scalar_select 0, %s9, %s7
  loop: start=0, step=1, limit=4
  $region2: #{feature_extractor_eva_forward.9} parent=0 // loop_pre_header
    _
  $region3: #{feature_extractor_eva_forward.9} parent=0 // loop_header
    %s12 = sphi 0, %s16
    %p13 = scmp.ge.s32.totalorder %s12, 4
    %s19 = sphi 0, %s31
    %s20 = sphi 0, %s27
    %s21 = sphi 0, %s19
    %s22 = sphi 0, %s20
    %s23 = sphi 0, %s21
    %s24 = sphi 0, %s22
    %s36 = sphi 0, %s38
    %s39 = sphi 0, %s36
    %s40 = sphi 0, %s39
    %s56 = sphi 0, %s40
    %s64 = sphi 0, %s66
    %s67 = sphi 0, %s64
    %s68 = sphi 0, %s67
    %s84 = sphi 0, %s68
    %s90 = sphi 0, %s92
    %s93 = sphi 0, %s90
    %s94 = sphi 0, %s93
    %s110 = sphi 0, %s94
    %s116 = sphi 0, %s118
    %s119 = sphi 0, %s116
    %s120 = sphi 0, %s119
    %s136 = sphi 0, %s120
    %s140 = sphi 0, %s140
    %s142 = sphi 0, %s140
    %s143 = sphi 0, %s142
    %s157 = sphi 0, %s143
    %s161 = sphi 0, %s161
    %s163 = sphi 0, %s161
    %s164 = sphi 0, %s163
    %s178 = sphi 0, %s164
    %s186 = sphi 0, %s188
    %s189 = sphi 0, %s186
    %s190 = sphi 0, %s189
    %s206 = sphi 0, %s190
  $region4: #{feature_extractor_eva_forward.9} parent=0 // loop_header_branch
    %15 = sbr.rel (%p13) target = $region8
  $region5: #{feature_extractor_eva_forward.9} parent=0 // loop_body
    %s17 = ssub.s32 %s12, 1
    %s18 = ssub.s32 %s12, 2
    %s25 = sadd.s32 1, %s20
    %p26 = scmp.ge.s32.totalorder %s25, 1
    %s27 = scalar_select %p26, 0, %s25
    %s28 = sadd.s32 1, %s19
    %s29 = scalar_select %p26, %s28, %s19
    %p30 = scmp.ge.s32.totalorder %s29, 2
    %s31 = scalar_select %p30, 0, %s29
    %s32 = ssub.s32 %s19, %s31
    %s33 = ssub.s32 %s20, %s27
    %s34 = sor.u32 %s32, %s33
    %p35 = scmp.eq.s32.totalorder %s34, 0
    %s37 = sadd.s32 %s36, 1
    %s38 = scalar_select %p35, %s36, %s37
    %p41 = pneg %p35
    %p42 = scmp.eq.s32.totalorder %s12, 1
    %p43 = por %p41, %p42
    %p44 = scmp.ne.s32.totalorder %s36, %s39
    %p45 = scmp.eq.s32.totalorder %s12, 0
    %p46 = por %p44, %p45
    %p47 = scmp.ne.s32.totalorder %s36, %s39
    %p48 = scmp.eq.s32.totalorder %s17, 1
    %p49 = por %p47, %p48
    %p50 = scmp.ne.s32.totalorder %s39, %s40
    %p51 = scmp.eq.s32.totalorder %s17, 0
    %p52 = por %p50, %p51
    %p53 = scmp.ne.s32.totalorder %s39, %s40
    %p54 = scmp.eq.s32.totalorder %s18, 1
    %p55 = por %p53, %p54
    %p57 = scmp.ne.s32.totalorder %s40, %s56
    %p58 = scmp.eq.s32.totalorder %s18, 0
    %p59 = por %p57, %p58
    %s60 = ssub.s32 %s19, %s31
    %s61 = ssub.s32 %s20, %s27
    %s62 = sor.u32 %s60, %s61
    %p63 = scmp.eq.s32.totalorder %s62, 0
    %s65 = sadd.s32 %s64, 1
    %s66 = scalar_select %p63, %s64, %s65
    %p69 = pneg %p63
    %p70 = scmp.eq.s32.totalorder %s12, 1
    %p71 = por %p69, %p70
    %p72 = scmp.ne.s32.totalorder %s64, %s67
    %p73 = scmp.eq.s32.totalorder %s12, 0
    %p74 = por %p72, %p73
    %p75 = scmp.ne.s32.totalorder %s64, %s67
    %p76 = scmp.eq.s32.totalorder %s17, 1
    %p77 = por %p75, %p76
    %p78 = scmp.ne.s32.totalorder %s67, %s68
    %p79 = scmp.eq.s32.totalorder %s17, 0
    %p80 = por %p78, %p79
    %p81 = scmp.ne.s32.totalorder %s67, %s68
    %p82 = scmp.eq.s32.totalorder %s18, 1
    %p83 = por %p81, %p82
    %p85 = scmp.ne.s32.totalorder %s68, %s84
    %p86 = scmp.eq.s32.totalorder %s18, 0
    %p87 = por %p85, %p86
    %s88 = ssub.s32 %s19, %s31
    %p89 = scmp.eq.s32.totalorder %s88, 0
    %s91 = sadd.s32 %s90, 1
    %s92 = scalar_select %p89, %s90, %s91
    %p95 = pneg %p89
    %p96 = scmp.eq.s32.totalorder %s12, 1
    %p97 = por %p95, %p96
    %p98 = scmp.ne.s32.totalorder %s90, %s93
    %p99 = scmp.eq.s32.totalorder %s12, 0
    %p100 = por %p98, %p99
    %p101 = scmp.ne.s32.totalorder %s90, %s93
    %p102 = scmp.eq.s32.totalorder %s17, 1
    %p103 = por %p101, %p102
    %p104 = scmp.ne.s32.totalorder %s93, %s94
    %p105 = scmp.eq.s32.totalorder %s17, 0
    %p106 = por %p104, %p105
    %p107 = scmp.ne.s32.totalorder %s93, %s94
    %p108 = scmp.eq.s32.totalorder %s18, 1
    %p109 = por %p107, %p108
    %p111 = scmp.ne.s32.totalorder %s94, %s110
    %p112 = scmp.eq.s32.totalorder %s18, 0
    %p113 = por %p111, %p112
    %s114 = ssub.s32 %s19, %s31
    %p115 = scmp.eq.s32.totalorder %s114, 0
    %s117 = sadd.s32 %s116, 1
    %s118 = scalar_select %p115, %s116, %s117
    %p121 = pneg %p115
    %p122 = scmp.eq.s32.totalorder %s12, 1
    %p123 = por %p121, %p122
    %p124 = scmp.ne.s32.totalorder %s116, %s119
    %p125 = scmp.eq.s32.totalorder %s12, 0
    %p126 = por %p124, %p125
    %p127 = scmp.ne.s32.totalorder %s116, %s119
    %p128 = scmp.eq.s32.totalorder %s17, 1
    %p129 = por %p127, %p128
    %p130 = scmp.ne.s32.totalorder %s119, %s120
    %p131 = scmp.eq.s32.totalorder %s17, 0
    %p132 = por %p130, %p131
    %p133 = scmp.ne.s32.totalorder %s119, %s120
    %p134 = scmp.eq.s32.totalorder %s18, 1
    %p135 = por %p133, %p134
    %p137 = scmp.ne.s32.totalorder %s120, %s136
    %p138 = scmp.eq.s32.totalorder %s18, 0
    %p139 = por %p137, %p138
    %s141 = sadd.s32 %s140, 1
    %p144 = scmp.eq.s32.totalorder %s12, 1
    %p145 = scmp.ne.s32.totalorder %s140, %s142
    %p146 = scmp.eq.s32.totalorder %s12, 0
    %p147 = por %p145, %p146
    %p148 = scmp.ne.s32.totalorder %s140, %s142
    %p149 = scmp.eq.s32.totalorder %s17, 1
    %p150 = por %p148, %p149
    %p151 = scmp.ne.s32.totalorder %s142, %s143
    %p152 = scmp.eq.s32.totalorder %s17, 0
    %p153 = por %p151, %p152
    %p154 = scmp.ne.s32.totalorder %s142, %s143
    %p155 = scmp.eq.s32.totalorder %s18, 1
    %p156 = por %p154, %p155
    %p158 = scmp.ne.s32.totalorder %s143, %s157
    %p159 = scmp.eq.s32.totalorder %s18, 0
    %p160 = por %p158, %p159
    %s162 = sadd.s32 %s161, 1
    %p165 = scmp.eq.s32.totalorder %s12, 1
    %p166 = scmp.ne.s32.totalorder %s161, %s163
    %p167 = scmp.eq.s32.totalorder %s12, 0
    %p168 = por %p166, %p167
    %p169 = scmp.ne.s32.totalorder %s161, %s163
    %p170 = scmp.eq.s32.totalorder %s17, 1
    %p171 = por %p169, %p170
    %p172 = scmp.ne.s32.totalorder %s163, %s164
    %p173 = scmp.eq.s32.totalorder %s17, 0
    %p174 = por %p172, %p173
    %p175 = scmp.ne.s32.totalorder %s163, %s164
    %p176 = scmp.eq.s32.totalorder %s18, 1
    %p177 = por %p175, %p176
    %p179 = scmp.ne.s32.totalorder %s164, %s178
    %p180 = scmp.eq.s32.totalorder %s18, 0
    %p181 = por %p179, %p180
    %s182 = ssub.s32 %s19, %s31
    %s183 = ssub.s32 %s20, %s27
    %s184 = sor.u32 %s182, %s183
    %p185 = scmp.eq.s32.totalorder %s184, 0
    %s187 = sadd.s32 %s186, 1
    %s188 = scalar_select %p185, %s186, %s187
    %p191 = pneg %p185
    %p192 = scmp.eq.s32.totalorder %s12, 1
    %p193 = por %p191, %p192
    %p194 = scmp.ne.s32.totalorder %s186, %s189
    %p195 = scmp.eq.s32.totalorder %s12, 0
    %p196 = por %p194, %p195
    %p197 = scmp.ne.s32.totalorder %s186, %s189
    %p198 = scmp.eq.s32.totalorder %s17, 1
    %p199 = por %p197, %p198
    %p200 = scmp.ne.s32.totalorder %s189, %s190
    %p201 = scmp.eq.s32.totalorder %s17, 0
    %p202 = por %p200, %p201
    %p203 = scmp.ne.s32.totalorder %s189, %s190
    %p204 = scmp.eq.s32.totalorder %s18, 1
    %p205 = por %p203, %p204
    %p207 = scmp.ne.s32.totalorder %s190, %s206
    %p208 = scmp.eq.s32.totalorder %s18, 0
    %p209 = por %p207, %p208
    %p210 = scmp.le.s32.totalorder 1, %s12
    %p211 = scmp.lt.s32.totalorder %s12, 3
    %p212 = pnand %p210, %p211
    %p213 = pneg %p212
    // Predicated region
    $region9: #{feature_extractor_eva_forward.9} parent=5 // pred_check
      _
    $region10: #{feature_extractor_eva_forward.9} parent=5 // pred_check_branch
      %215 = sbr.rel (%p212) target = $region12
    $region11: #{feature_extractor_eva_forward.9} parent=5 // pred_region
      %s216 = ssub.s32 %s12, 1
      // Predicated region
      $region13: #{feature_extractor_eva_forward.9} parent=11 // pred_check
        %p217 = pneg %p153
      $region14: #{feature_extractor_eva_forward.9} parent=11 // pred_check_branch
        %219 = sbr.rel (%p217) target = $region16
      $region15: #{feature_extractor_eva_forward.9} parent=11 // pred_region
        _
      $region16: #{feature_extractor_eva_forward.9} parent=11 // pred_fallthru
        _
      // Predicated region
      $region17: #{feature_extractor_eva_forward.9} parent=11 // pred_check
        %p220 = pneg %p174
      $region18: #{feature_extractor_eva_forward.9} parent=11 // pred_check_branch
        %222 = sbr.rel (%p220) target = $region20
      $region19: #{feature_extractor_eva_forward.9} parent=11 // pred_region
        _
      $region20: #{feature_extractor_eva_forward.9} parent=11 // pred_fallthru
        _
    $region12: #{feature_extractor_eva_forward.9} parent=5 // pred_fallthru
      _
    %p223 = scmp.lt.s32.totalorder %s12, 2
    // Predicated region
    $region21: #{feature_extractor_eva_forward.9} parent=5 // pred_check
      %p224 = pneg %p223
    $region22: #{feature_extractor_eva_forward.9} parent=5 // pred_check_branch
      %226 = sbr.rel (%p224) target = $region24
    $region23: #{feature_extractor_eva_forward.9} parent=5 // pred_region
      // Predicated region
      $region25: #{feature_extractor_eva_forward.9} parent=23 // pred_check
        %p227 = pneg %p46
      $region26: #{feature_extractor_eva_forward.9} parent=23 // pred_check_branch
        %229 = sbr.rel (%p227) target = $region28
      $region27: #{feature_extractor_eva_forward.9} parent=23 // pred_region
        %p230 = scmp.lt.s32.totalorder %s19, 1
        %s231 = scalar_select %p230, %s19, 1
        %p232 = scmp.lt.s32.totalorder %s20, 0
        %s233 = scalar_select %p232, %s20, 0
        %s234 = sadd.s32 %s233, %s231
        %s235 = smul.addr %s234, 4
        %s236 = scalar_lea.vmem %s0, %s235
      $region28: #{feature_extractor_eva_forward.9} parent=23 // pred_fallthru
        _
      // Predicated region
      $region29: #{feature_extractor_eva_forward.9} parent=23 // pred_check
        %p237 = pneg %p74
      $region30: #{feature_extractor_eva_forward.9} parent=23 // pred_check_branch
        %239 = sbr.rel (%p237) target = $region32
      $region31: #{feature_extractor_eva_forward.9} parent=23 // pred_region
        %p240 = scmp.lt.s32.totalorder %s19, 1
        %s241 = scalar_select %p240, %s19, 1
        %p242 = scmp.lt.s32.totalorder %s20, 0
        %s243 = scalar_select %p242, %s20, 0
        %s244 = sadd.s32 %s243, %s241
        %s245 = smul.addr %s244, 4
        %s246 = scalar_lea.vmem %s1, %s245
      $region32: #{feature_extractor_eva_forward.9} parent=23 // pred_fallthru
        _
      // Predicated region
      $region33: #{feature_extractor_eva_forward.9} parent=23 // pred_check
        %p247 = pneg %p100
      $region34: #{feature_extractor_eva_forward.9} parent=23 // pred_check_branch
        %249 = sbr.rel (%p247) target = $region36
      $region35: #{feature_extractor_eva_forward.9} parent=23 // pred_region
        %p250 = scmp.lt.s32.totalorder %s19, 1
        %s251 = scalar_select %p250, %s19, 1
        %s252 = smul.addr %s251, 4
        %s253 = scalar_lea.vmem %s2, %s252
      $region36: #{feature_extractor_eva_forward.9} parent=23 // pred_fallthru
        _
      // Predicated region
      $region37: #{feature_extractor_eva_forward.9} parent=23 // pred_check
        %p254 = pneg %p126
      $region38: #{feature_extractor_eva_forward.9} parent=23 // pred_check_branch
        %256 = sbr.rel (%p254) target = $region40
      $region39: #{feature_extractor_eva_forward.9} parent=23 // pred_region
        %p257 = scmp.lt.s32.totalorder %s19, 1
        %s258 = scalar_select %p257, %s19, 1
        %s259 = smul.addr %s258, 4
        %s260 = scalar_lea.vmem %s3, %s259
      $region40: #{feature_extractor_eva_forward.9} parent=23 // pred_fallthru
        _
    $region24: #{feature_extractor_eva_forward.9} parent=5 // pred_fallthru
      _
    %p261 = scmp.le.s32.totalorder 1, %s12
    %p262 = scmp.lt.s32.totalorder %s12, 3
    %p263 = pnand %p261, %p262
    %p264 = pneg %p263
    // Predicated region
    $region41: #{feature_extractor_eva_forward.9} parent=5 // pred_check
      _
    $region42: #{feature_extractor_eva_forward.9} parent=5 // pred_check_branch
      %266 = sbr.rel (%p263) target = $region44
    $region43: #{feature_extractor_eva_forward.9} parent=5 // pred_region
      %s267 = ssub.s32 %s12, 1
      %p268 = scmp.lt.s32.totalorder %s21, 1
      %s269 = scalar_select %p268, %s21, 1
      %p270 = scmp.lt.s32.totalorder %s22, 0
      %s271 = scalar_select %p270, %s22, 0
      %s272 = sadd.s32 %s271, %s269
      %s273 = smul.addr %s272, 4
      %s274 = scalar_lea.vmem %s0, %s273
      %p275 = pneg %p52
      %p276 = pneg %p49
      %p277 = scmp.lt.s32.totalorder %s21, 1
      %s278 = scalar_select %p277, %s21, 1
      %p279 = scmp.lt.s32.totalorder %s22, 0
      %s280 = scalar_select %p279, %s22, 0
      %s281 = sadd.s32 %s280, %s278
      %s282 = smul.addr %s281, 4
      %s283 = scalar_lea.vmem %s1, %s282
      %p284 = pneg %p80
      %p285 = pneg %p77
      %p286 = scmp.lt.s32.totalorder %s21, 1
      %s287 = scalar_select %p286, %s21, 1
      %s288 = smul.addr %s287, 4
      %s289 = scalar_lea.vmem %s2, %s288
      %p290 = pneg %p106
      %p291 = pneg %p103
      %p292 = scmp.lt.s32.totalorder %s21, 1
      %s293 = scalar_select %p292, %s21, 1
      %s294 = smul.addr %s293, 4
      %s295 = scalar_lea.vmem %s3, %s294
      %p296 = pneg %p132
      %p297 = pneg %p129
      %p298 = pneg %p153
      %p299 = pneg %p150
      %p300 = pneg %p174
      %p301 = pneg %p171
      %p302 = pneg %p202
      %p303 = pneg %p199
      %p304 = scmp.lt.s32.totalorder %s21, 1
      %s305 = scalar_select %p304, %s21, 1
      %p306 = scmp.lt.s32.totalorder %s22, 0
      %s307 = scalar_select %p306, %s22, 0
      %s308 = sadd.s32 %s307, %s305
      %s309 = smul.addr %s308, 4
      %s310 = scalar_lea.vmem %s6, %s309
      %p311 = scmp.lt.s32.totalorder %s21, 1
      %s312 = scalar_select %p311, %s21, 1
      %p313 = scmp.lt.s32.totalorder %s22, 0
      %s314 = scalar_select %p313, %s22, 0
      %s315 = sadd.s32 %s314, %s312
      %s316 = smul.addr %s315, 4
      %s317 = scalar_lea.vmem %s0, %s316
      %p318 = scmp.lt.s32.totalorder %s21, 1
      %s319 = scalar_select %p318, %s21, 1
      %p320 = scmp.lt.s32.totalorder %s22, 0
      %s321 = scalar_select %p320, %s22, 0
      %s322 = sadd.s32 %s321, %s319
      %s323 = smul.addr %s322, 4
      %s324 = scalar_lea.vmem %s1, %s323
      %p325 = scmp.lt.s32.totalorder %s21, 1
      %s326 = scalar_select %p325, %s21, 1
      %s327 = smul.addr %s326, 4
      %s328 = scalar_lea.vmem %s2, %s327
      %p329 = scmp.lt.s32.totalorder %s21, 1
      %s330 = scalar_select %p329, %s21, 1
      %s331 = smul.addr %s330, 4
      %s332 = scalar_lea.vmem %s3, %s331
      %p333 = scmp.lt.s32.totalorder %s21, 1
      %s334 = scalar_select %p333, %s21, 1
      %p335 = scmp.lt.s32.totalorder %s22, 0
      %s336 = scalar_select %p335, %s22, 0
      %s337 = sadd.s32 %s336, %s334
      %s338 = smul.addr %s337, 4
      %s339 = scalar_lea.vmem %s6, %s338
      %v341 = vld [vmem:[%s324] sm:$0x7]
      %343 = vrot.lane.b32.xlu0 %v341, 120
      %v344 = vpop.permute.xlu0 %343
      %345 = vrot.lane.b32.xlu0 %v341, 112
      %v346 = vpop.permute.xlu0 %345
      %347 = vrot.lane.b32.xlu0 %v341, 104
      %v348 = vpop.permute.xlu0 %347
      %v350 = vunpack.c.l.s4 1983009808
      %v351 = vunpack.c.0.s8 %v350
      %v352 = vlaneseq
      %v353 = vshrl.u32 %v352, 7
      %v354 = vsub.s32 %v351, %v353
      %v355 = vrot.slane %v341, %v354
      %v358 = vunpack.c.l.s4 1983009808
      %v359 = vunpack.c.0.s8 %v358
      %v360 = vlaneseq
      %v361 = vshrl.u32 %v360, 7
      %v362 = vsub.s32 %v359, %v361
      %v363 = vrot.slane %v346, %v362
      %v364 = vcombine.low %v355, %v363
      %v365 = vcombine.high %v355, %v363
      %v367 = vunpack.c.l.s4 1934713408
      %v368 = vunpack.c.0.s8 %v367
      %v369 = vlaneseq
      %v370 = vshrl.u32 %v369, 7
      %v371 = vsub.s32 %v368, %v370
      %v372 = vrot.slane %v364, %v371
      %v373 = vcombine.high %v372, 0
      %v375 = vunpack.c.l.s4 1934713408
      %v376 = vunpack.c.0.s8 %v375
      %v377 = vlaneseq
      %v378 = vshrl.u32 %v377, 7
      %v379 = vsub.s32 %v376, %v378
      %v380 = vrot.slane %v365, %v379
      %v383 = vunpack.c.l.s4 1983009808
      %v384 = vunpack.c.0.s8 %v383
      %v385 = vlaneseq
      %v386 = vshrl.u32 %v385, 7
      %v387 = vsub.s32 %v384, %v386
      %v388 = vrot.slane %v344, %v387
      %v391 = vunpack.c.l.s4 1983009808
      %v392 = vunpack.c.0.s8 %v391
      %v393 = vlaneseq
      %v394 = vshrl.u32 %v393, 7
      %v395 = vsub.s32 %v392, %v394
      %v396 = vrot.slane %v348, %v395
      %v397 = vcombine.low %v388, %v396
      %v398 = vcombine.high %v388, %v396
      %v400 = vunpack.c.l.s4 1934713408
      %v401 = vunpack.c.0.s8 %v400
      %v402 = vlaneseq
      %v403 = vshrl.u32 %v402, 7
      %v404 = vsub.s32 %v401, %v403
      %v405 = vrot.slane %v397, %v404
      %v406 = vcombine.high %v405, 0
      %v408 = vunpack.c.l.s4 1934713408
      %v409 = vunpack.c.0.s8 %v408
      %v410 = vlaneseq
      %v411 = vshrl.u32 %v410, 7
      %v412 = vsub.s32 %v409, %v411
      %v413 = vrot.slane %v398, %v412
      %v416 = vpack.i.b16 %v405, %v372
      %v418 = vshrl.u32 %v372, 16
      %v419 = vshrl.u32 %v405, 16
      %v420 = vpack.i.b16 %v419, %v418
      %v423 = vpack.i.b16 %v406, %v373
      %v424 = vshrl.u32 %v373, 16
      %v425 = vshrl.u32 %v406, 16
      %v426 = vpack.i.b16 %v425, %v424
      %v429 = vpack.i.b16 %v413, %v380
      %v431 = vld [vmem:[%s328] sm:$0x7]
      %433 = vrot.lane.b32.xlu0 %v431, 120
      %v434 = vpop.permute.xlu0 %433
      %435 = vrot.lane.b32.xlu0 %v431, 112
      %v436 = vpop.permute.xlu0 %435
      %437 = vrot.lane.b32.xlu0 %v431, 104
      %v438 = vpop.permute.xlu0 %437
      %v440 = vunpack.c.l.s4 1983009808
      %v441 = vunpack.c.0.s8 %v440
      %v442 = vlaneseq
      %v443 = vshrl.u32 %v442, 7
      %v444 = vsub.s32 %v441, %v443
      %v445 = vrot.slane %v431, %v444
      %v448 = vunpack.c.l.s4 1983009808
      %v449 = vunpack.c.0.s8 %v448
      %v450 = vlaneseq
      %v451 = vshrl.u32 %v450, 7
      %v452 = vsub.s32 %v449, %v451
      %v453 = vrot.slane %v436, %v452
      %v454 = vcombine.low %v445, %v453
      %v455 = vcombine.high %v445, %v453
      %v457 = vunpack.c.l.s4 1934713408
      %v458 = vunpack.c.0.s8 %v457
      %v459 = vlaneseq
      %v460 = vshrl.u32 %v459, 7
      %v461 = vsub.s32 %v458, %v460
      %v462 = vrot.slane %v454, %v461
      %v463 = vcombine.high %v462, 0
      %v465 = vunpack.c.l.s4 1934713408
      %v466 = vunpack.c.0.s8 %v465
      %v467 = vlaneseq
      %v468 = vshrl.u32 %v467, 7
      %v469 = vsub.s32 %v466, %v468
      %v470 = vrot.slane %v455, %v469
      %v473 = vunpack.c.l.s4 1983009808
      %v474 = vunpack.c.0.s8 %v473
      %v475 = vlaneseq
      %v476 = vshrl.u32 %v475, 7
      %v477 = vsub.s32 %v474, %v476
      %v478 = vrot.slane %v434, %v477
      %v481 = vunpack.c.l.s4 1983009808
      %v482 = vunpack.c.0.s8 %v481
      %v483 = vlaneseq
      %v484 = vshrl.u32 %v483, 7
      %v485 = vsub.s32 %v482, %v484
      %v486 = vrot.slane %v438, %v485
      %v487 = vcombine.low %v478, %v486
      %v488 = vcombine.high %v478, %v486
      %v490 = vunpack.c.l.s4 1934713408
      %v491 = vunpack.c.0.s8 %v490
      %v492 = vlaneseq
      %v493 = vshrl.u32 %v492, 7
      %v494 = vsub.s32 %v491, %v493
      %v495 = vrot.slane %v487, %v494
      %v496 = vcombine.high %v495, 0
      %v498 = vunpack.c.l.s4 1934713408
      %v499 = vunpack.c.0.s8 %v498
      %v500 = vlaneseq
      %v501 = vshrl.u32 %v500, 7
      %v502 = vsub.s32 %v499, %v501
      %v503 = vrot.slane %v488, %v502
      %v506 = vpack.i.b16 %v495, %v462
      %v508 = vshrl.u32 %v462, 16
      %v509 = vshrl.u32 %v495, 16
      %v510 = vpack.i.b16 %v509, %v508
      %v514 = vpack.i.b16 %v496, %v463
      %v516 = vshrl.u32 %v463, 16
      %v517 = vshrl.u32 %v496, 16
      %v518 = vpack.i.b16 %v517, %v516
      %v522 = vpack.i.b16 %v503, %v470
      %v524 = vld [vmem:[%s332] sm:$0x7]
      %526 = vrot.lane.b32.xlu0 %v524, 120
      %v527 = vpop.permute.xlu0 %526
      %528 = vrot.lane.b32.xlu0 %v524, 112
      %v529 = vpop.permute.xlu0 %528
      %530 = vrot.lane.b32.xlu0 %v524, 104
      %v531 = vpop.permute.xlu0 %530
      %v533 = vunpack.c.l.s4 1983009808
      %v534 = vunpack.c.0.s8 %v533
      %v535 = vlaneseq
      %v536 = vshrl.u32 %v535, 7
      %v537 = vsub.s32 %v534, %v536
      %v538 = vrot.slane %v524, %v537
      %v541 = vunpack.c.l.s4 1983009808
      %v542 = vunpack.c.0.s8 %v541
      %v543 = vlaneseq
      %v544 = vshrl.u32 %v543, 7
      %v545 = vsub.s32 %v542, %v544
      %v546 = vrot.slane %v529, %v545
      %v547 = vcombine.low %v538, %v546
      %v548 = vcombine.high %v538, %v546
      %v550 = vunpack.c.l.s4 1934713408
      %v551 = vunpack.c.0.s8 %v550
      %v552 = vlaneseq
      %v553 = vshrl.u32 %v552, 7
      %v554 = vsub.s32 %v551, %v553
      %v555 = vrot.slane %v547, %v554
      %v556 = vcombine.high %v555, 0
      %v558 = vunpack.c.l.s4 1934713408
      %v559 = vunpack.c.0.s8 %v558
      %v560 = vlaneseq
      %v561 = vshrl.u32 %v560, 7
      %v562 = vsub.s32 %v559, %v561
      %v563 = vrot.slane %v548, %v562
      %v566 = vunpack.c.l.s4 1983009808
      %v567 = vunpack.c.0.s8 %v566
      %v568 = vlaneseq
      %v569 = vshrl.u32 %v568, 7
      %v570 = vsub.s32 %v567, %v569
      %v571 = vrot.slane %v527, %v570
      %v574 = vunpack.c.l.s4 1983009808
      %v575 = vunpack.c.0.s8 %v574
      %v576 = vlaneseq
      %v577 = vshrl.u32 %v576, 7
      %v578 = vsub.s32 %v575, %v577
      %v579 = vrot.slane %v531, %v578
      %v580 = vcombine.low %v571, %v579
      %v581 = vcombine.high %v571, %v579
      %v583 = vunpack.c.l.s4 1934713408
      %v584 = vunpack.c.0.s8 %v583
      %v585 = vlaneseq
      %v586 = vshrl.u32 %v585, 7
      %v587 = vsub.s32 %v584, %v586
      %v588 = vrot.slane %v580, %v587
      %v589 = vcombine.high %v588, 0
      %v591 = vunpack.c.l.s4 1934713408
      %v592 = vunpack.c.0.s8 %v591
      %v593 = vlaneseq
      %v594 = vshrl.u32 %v593, 7
      %v595 = vsub.s32 %v592, %v594
      %v596 = vrot.slane %v581, %v595
      %v599 = vpack.i.b16 %v588, %v555
      %v601 = vshrl.u32 %v555, 16
      %v602 = vshrl.u32 %v588, 16
      %v603 = vpack.i.b16 %v602, %v601
      %v607 = vpack.i.b16 %v589, %v556
      %v609 = vshrl.u32 %v556, 16
      %v610 = vshrl.u32 %v589, 16
      %v611 = vpack.i.b16 %v610, %v609
      %v615 = vpack.i.b16 %v596, %v563
      %v617 = vcombine.low %v416, %v429
      %v619 = vunpack.c.l.s4 1983009808
      %v620 = vunpack.c.0.s8 %v619
      %v621 = vlaneseq
      %v622 = vshrl.u32 %v621, 7
      %v623 = vsub.s32 %v620, %v622
      %v624 = vrot.slane %v617, %v623
      %v626 = vcombine.low %v624, %v423
      %v628 = vunpack.c.l.s4 1934713408
      %v629 = vunpack.c.0.s8 %v628
      %v630 = vlaneseq
      %v631 = vshrl.u32 %v630, 7
      %v632 = vsub.s32 %v629, %v631
      %v633 = vrot.slane %v626, %v632
      %v634 = vcombine.high %v633, 0
      %v637 = vcombine.low %v420, %v426
      %v639 = vunpack.c.l.s4 1934713408
      %v640 = vunpack.c.0.s8 %v639
      %v641 = vlaneseq
      %v642 = vshrl.u32 %v641, 7
      %v643 = vsub.s32 %v640, %v642
      %v644 = vrot.slane %v637, %v643
      %v645 = vcombine.high %v644, 0
      %v648 = vpack.i.b16 %v644, %v633
      %v649 = vshrl.u32 %v633, 16
      %v650 = vshrl.u32 %v644, 16
      %v651 = vpack.i.b16 %v650, %v649
      %v654 = vpack.i.b16 %v645, %v634
      %v655 = vshrl.u32 %v634, 16
      %v656 = vshrl.u32 %v645, 16
      %v657 = vpack.i.b16 %v656, %v655
      %658 = vxpose.xlu0.c.b16.start [1/8] %v506, 128
      %659 = vxpose.xlu0.c.b16.cont [2/8] 0, 128
      %660 = vxpose.xlu0.c.b16.cont [3/8] 0, 128
      %661 = vxpose.xlu0.c.b16.cont [4/8] 0, 128
      %662 = vxpose.xlu0.c.b16.cont [5/8] 0, 128
      %663 = vxpose.xlu0.c.b16.cont [6/8] 0, 128
      %664 = vxpose.xlu0.c.b16.cont [7/8] 0, 128
      %665 = vxpose.xlu0.c.b16.end [8/8] 0, 128
      %v666 = vpop.trf.xlu0
      %v667 = vpop.trf.xlu0
      %v668 = vpop.trf.xlu0
      %v669 = vpop.trf.xlu0
      %v670 = vpop.trf.xlu0
      %v671 = vpop.trf.xlu0
      %v672 = vpop.trf.xlu0
      %v673 = vpop.trf.xlu0
      %674 = vxpose.xlu0.c.b16.start [1/8] %v510, 128
      %675 = vxpose.xlu0.c.b16.cont [2/8] 0, 128
      %676 = vxpose.xlu0.c.b16.cont [3/8] 0, 128
      %677 = vxpose.xlu0.c.b16.cont [4/8] 0, 128
      %678 = vxpose.xlu0.c.b16.cont [5/8] 0, 128
      %679 = vxpose.xlu0.c.b16.cont [6/8] 0, 128
      %680 = vxpose.xlu0.c.b16.cont [7/8] 0, 128
      %681 = vxpose.xlu0.c.b16.end [8/8] 0, 128
      %v682 = vpop.trf.xlu0
      %v683 = vpop.trf.xlu0
      %v684 = vpop.trf.xlu0
      %v685 = vpop.trf.xlu0
      %v686 = vpop.trf.xlu0
      %v687 = vpop.trf.xlu0
      %v688 = vpop.trf.xlu0
      %v689 = vpop.trf.xlu0
      %690 = vxpose.xlu0.c.b16.start [1/8] %v514, 128
      %691 = vxpose.xlu0.c.b16.cont [2/8] 0, 128
      %692 = vxpose.xlu0.c.b16.cont [3/8] 0, 128
      %693 = vxpose.xlu0.c.b16.cont [4/8] 0, 128
      %694 = vxpose.xlu0.c.b16.cont [5/8] 0, 128
      %695 = vxpose.xlu0.c.b16.cont [6/8] 0, 128
      %696 = vxpose.xlu0.c.b16.cont [7/8] 0, 128
      %697 = vxpose.xlu0.c.b16.end [8/8] 0, 128
      %v698 = vpop.trf.xlu0
      %v699 = vpop.trf.xlu0
      %v700 = vpop.trf.xlu0
      %v701 = vpop.trf.xlu0
      %v702 = vpop.trf.xlu0
      %v703 = vpop.trf.xlu0
      %v704 = vpop.trf.xlu0
      %v705 = vpop.trf.xlu0
      %706 = vxpose.xlu0.c.b16.start [1/8] %v518, 128
      %707 = vxpose.xlu0.c.b16.cont [2/8] 0, 128
      %708 = vxpose.xlu0.c.b16.cont [3/8] 0, 128
      %709 = vxpose.xlu0.c.b16.cont [4/8] 0, 128
      %710 = vxpose.xlu0.c.b16.cont [5/8] 0, 128
      %711 = vxpose.xlu0.c.b16.cont [6/8] 0, 128
      %712 = vxpose.xlu0.c.b16.cont [7/8] 0, 128
      %713 = vxpose.xlu0.c.b16.end [8/8] 0, 128
      %v714 = vpop.trf.xlu0
      %v715 = vpop.trf.xlu0
      %v716 = vpop.trf.xlu0
      %v717 = vpop.trf.xlu0
      %v718 = vpop.trf.xlu0
      %v719 = vpop.trf.xlu0
      %v720 = vpop.trf.xlu0
      %v721 = vpop.trf.xlu0
      %722 = vxpose.xlu0.c.b16.start [1/8] %v522, 128
      %723 = vxpose.xlu0.c.b16.cont [2/8] 0, 128
      %724 = vxpose.xlu0.c.b16.cont [3/8] 0, 128
      %725 = vxpose.xlu0.c.b16.cont [4/8] 0, 128
      %726 = vxpose.xlu0.c.b16.cont [5/8] 0, 128
      %727 = vxpose.xlu0.c.b16.cont [6/8] 0, 128
      %728 = vxpose.xlu0.c.b16.cont [7/8] 0, 128
      %729 = vxpose.xlu0.c.b16.end [8/8] 0, 128
      %v730 = vpop.trf.xlu0
      %v731 = vpop.trf.xlu0
      %v732 = vpop.trf.xlu0
      %v733 = vpop.trf.xlu0
      %v734 = vpop.trf.xlu0
      %v735 = vpop.trf.xlu0
      %v736 = vpop.trf.xlu0
      %v737 = vpop.trf.xlu0
      %v738 = vcombine.low %v666, %v730
      %v740 = vunpack.c.l.s4 1983009808
      %v741 = vunpack.c.0.s8 %v740
      %v742 = vlaneseq
      %v743 = vshrl.u32 %v742, 7
      %v744 = vsub.s32 %v741, %v743
      %v745 = vrot.slane %v738, %v744
      %v747 = vunpack.c.l.s4 1983009808
      %v748 = vunpack.c.0.s8 %v747
      %v749 = vlaneseq
      %v750 = vshrl.u32 %v749, 7
      %v751 = vsub.s32 %v748, %v750
      %v752 = vrot.slane %v698, %v751
      %v753 = vcombine.low %v745, %v752
      %v754 = vcombine.high %v745, %v752
      %v756 = vunpack.c.l.s4 1934713408
      %v757 = vunpack.c.0.s8 %v756
      %v758 = vlaneseq
      %v759 = vshrl.u32 %v758, 7
      %v760 = vsub.s32 %v757, %v759
      %v761 = vrot.slane %v753, %v760
      %v763 = vunpack.c.l.s4 1934713408
      %v764 = vunpack.c.0.s8 %v763
      %v765 = vlaneseq
      %v766 = vshrl.u32 %v765, 7
      %v767 = vsub.s32 %v764, %v766
      %v768 = vrot.slane %v754, %v767
      %v769 = vcombine.high %v761, 0
      %v770 = vcombine.high %v768, 0
      %v772 = vunpack.c.l.s4 1983009808
      %v773 = vunpack.c.0.s8 %v772
      %v774 = vlaneseq
      %v775 = vshrl.u32 %v774, 7
      %v776 = vsub.s32 %v773, %v775
      %v777 = vrot.slane %v682, %v776
      %v779 = vunpack.c.l.s4 1983009808
      %v780 = vunpack.c.0.s8 %v779
      %v781 = vlaneseq
      %v782 = vshrl.u32 %v781, 7
      %v783 = vsub.s32 %v780, %v782
      %v784 = vrot.slane %v714, %v783
      %v785 = vcombine.low %v777, %v784
      %v786 = vcombine.high %v777, %v784
      %v788 = vunpack.c.l.s4 1934713408
      %v789 = vunpack.c.0.s8 %v788
      %v790 = vlaneseq
      %v791 = vshrl.u32 %v790, 7
      %v792 = vsub.s32 %v789, %v791
      %v793 = vrot.slane %v785, %v792
      %v795 = vunpack.c.l.s4 1934713408
      %v796 = vunpack.c.0.s8 %v795
      %v797 = vlaneseq
      %v798 = vshrl.u32 %v797, 7
      %v799 = vsub.s32 %v796, %v798
      %v800 = vrot.slane %v786, %v799
      %v801 = vcombine.high %v793, 0
      %v802 = vcombine.high %v800, 0
      %v805 = vpack.i.b16 %v793, %v761
      %v807 = vshrl.u32 %v761, 16
      %v808 = vshrl.u32 %v793, 16
      %v809 = vpack.i.b16 %v808, %v807
      %v813 = vpack.i.b16 %v801, %v769
      %v815 = vshrl.u32 %v769, 16
      %v816 = vshrl.u32 %v801, 16
      %v817 = vpack.i.b16 %v816, %v815
      %v821 = vpack.i.b16 %v800, %v768
      %v823 = vshrl.u32 %v768, 16
      %v824 = vshrl.u32 %v800, 16
      %v825 = vpack.i.b16 %v824, %v823
      %v829 = vpack.i.b16 %v802, %v770
      %v831 = vshrl.u32 %v770, 16
      %v832 = vshrl.u32 %v802, 16
      %v833 = vpack.i.b16 %v832, %v831
      %835 = vxpose.xlu0.c.b16.start [1/8] %v805, 128
      %836 = vxpose.xlu0.c.b16.cont [2/8] 0, 128
      %837 = vxpose.xlu0.c.b16.cont [3/8] 0, 128
      %838 = vxpose.xlu0.c.b16.cont [4/8] 0, 128
      %839 = vxpose.xlu0.c.b16.cont [5/8] 0, 128
      %840 = vxpose.xlu0.c.b16.cont [6/8] 0, 128
      %841 = vxpose.xlu0.c.b16.cont [7/8] 0, 128
      %842 = vxpose.xlu0.c.b16.end [8/8] 0, 128
      %v843 = vpop.trf.xlu0
      %v844 = vpop.trf.xlu0
      %v845 = vpop.trf.xlu0
      %v846 = vpop.trf.xlu0
      %v847 = vpop.trf.xlu0
      %v848 = vpop.trf.xlu0
      %v849 = vpop.trf.xlu0
      %v850 = vpop.trf.xlu0
      %851 = vxpose.xlu0.c.b16.start [1/8] %v809, 128
      %852 = vxpose.xlu0.c.b16.cont [2/8] 0, 128
      %853 = vxpose.xlu0.c.b16.cont [3/8] 0, 128
      %854 = vxpose.xlu0.c.b16.cont [4/8] 0, 128
      %855 = vxpose.xlu0.c.b16.cont [5/8] 0, 128
      %856 = vxpose.xlu0.c.b16.cont [6/8] 0, 128
      %857 = vxpose.xlu0.c.b16.cont [7/8] 0, 128
      %858 = vxpose.xlu0.c.b16.end [8/8] 0, 128
      %v859 = vpop.trf.xlu0
      %v860 = vpop.trf.xlu0
      %v861 = vpop.trf.xlu0
      %v862 = vpop.trf.xlu0
      %v863 = vpop.trf.xlu0
      %v864 = vpop.trf.xlu0
      %v865 = vpop.trf.xlu0
      %v866 = vpop.trf.xlu0
      %867 = vxpose.xlu0.c.b16.start [1/8] %v813, 128
      %868 = vxpose.xlu0.c.b16.cont [2/8] 0, 128
      %869 = vxpose.xlu0.c.b16.cont [3/8] 0, 128
      %870 = vxpose.xlu0.c.b16.cont [4/8] 0, 128
      %871 = vxpose.xlu0.c.b16.cont [5/8] 0, 128
      %872 = vxpose.xlu0.c.b16.cont [6/8] 0, 128
      %873 = vxpose.xlu0.c.b16.cont [7/8] 0, 128
      %874 = vxpose.xlu0.c.b16.end [8/8] 0, 128
      %v875 = vpop.trf.xlu0
      %v876 = vpop.trf.xlu0
      %v877 = vpop.trf.xlu0
      %v878 = vpop.trf.xlu0
      %v879 = vpop.trf.xlu0
      %v880 = vpop.trf.xlu0
      %v881 = vpop.trf.xlu0
      %v882 = vpop.trf.xlu0
      %883 = vxpose.xlu0.c.b16.start [1/8] %v817, 128
      %884 = vxpose.xlu0.c.b16.cont [2/8] 0, 128
      %885 = vxpose.xlu0.c.b16.cont [3/8] 0, 128
      %886 = vxpose.xlu0.c.b16.cont [4/8] 0, 128
      %887 = vxpose.xlu0.c.b16.cont [5/8] 0, 128
      %888 = vxpose.xlu0.c.b16.cont [6/8] 0, 128
      %889 = vxpose.xlu0.c.b16.cont [7/8] 0, 128
      %890 = vxpose.xlu0.c.b16.end [8/8] 0, 128
      %v891 = vpop.trf.xlu0
      %v892 = vpop.trf.xlu0
      %v893 = vpop.trf.xlu0
      %v894 = vpop.trf.xlu0
      %v895 = vpop.trf.xlu0
      %v896 = vpop.trf.xlu0
      %v897 = vpop.trf.xlu0
      %v898 = vpop.trf.xlu0
      %899 = vxpose.xlu0.c.b16.start [1/8] %v821, 128
      %900 = vxpose.xlu0.c.b16.cont [2/8] 0, 128
      %901 = vxpose.xlu0.c.b16.cont [3/8] 0, 128
      %902 = vxpose.xlu0.c.b16.cont [4/8] 0, 128
      %903 = vxpose.xlu0.c.b16.cont [5/8] 0, 128
      %904 = vxpose.xlu0.c.b16.cont [6/8] 0, 128
      %905 = vxpose.xlu0.c.b16.cont [7/8] 0, 128
      %906 = vxpose.xlu0.c.b16.end [8/8] 0, 128
      %v907 = vpop.trf.xlu0
      %v908 = vpop.trf.xlu0
      %v909 = vpop.trf.xlu0
      %v910 = vpop.trf.xlu0
      %v911 = vpop.trf.xlu0
      %v912 = vpop.trf.xlu0
      %v913 = vpop.trf.xlu0
      %v914 = vpop.trf.xlu0
      %915 = vxpose.xlu0.c.b16.start [1/8] %v825, 128
      %916 = vxpose.xlu0.c.b16.cont [2/8] 0, 128
      %917 = vxpose.xlu0.c.b16.cont [3/8] 0, 128
      %918 = vxpose.xlu0.c.b16.cont [4/8] 0, 128
      %919 = vxpose.xlu0.c.b16.cont [5/8] 0, 128
      %920 = vxpose.xlu0.c.b16.cont [6/8] 0, 128
      %921 = vxpose.xlu0.c.b16.cont [7/8] 0, 128
      %922 = vxpose.xlu0.c.b16.end [8/8] 0, 128
      %v923 = vpop.trf.xlu0
      %v924 = vpop.trf.xlu0
      %v925 = vpop.trf.xlu0
      %v926 = vpop.trf.xlu0
      %v927 = vpop.trf.xlu0
      %v928 = vpop.trf.xlu0
      %v929 = vpop.trf.xlu0
      %v930 = vpop.trf.xlu0
      %931 = vxpose.xlu0.c.b16.start [1/8] %v829, 128
      %932 = vxpose.xlu0.c.b16.cont [2/8] 0, 128
      %933 = vxpose.xlu0.c.b16.cont [3/8] 0, 128
      %934 = vxpose.xlu0.c.b16.cont [4/8] 0, 128
      %935 = vxpose.xlu0.c.b16.cont [5/8] 0, 128
      %936 = vxpose.xlu0.c.b16.cont [6/8] 0, 128
      %937 = vxpose.xlu0.c.b16.cont [7/8] 0, 128
      %938 = vxpose.xlu0.c.b16.end [8/8] 0, 128
      %v939 = vpop.trf.xlu0
      %v940 = vpop.trf.xlu0
      %v941 = vpop.trf.xlu0
      %v942 = vpop.trf.xlu0
      %v943 = vpop.trf.xlu0
      %v944 = vpop.trf.xlu0
      %v945 = vpop.trf.xlu0
      %v946 = vpop.trf.xlu0
      %947 = vxpose.xlu0.c.b16.start [1/8] %v833, 128
      %948 = vxpose.xlu0.c.b16.cont [2/8] 0, 128
      %949 = vxpose.xlu0.c.b16.cont [3/8] 0, 128
      %950 = vxpose.xlu0.c.b16.cont [4/8] 0, 128
      %951 = vxpose.xlu0.c.b16.cont [5/8] 0, 128
      %952 = vxpose.xlu0.c.b16.cont [6/8] 0, 128
      %953 = vxpose.xlu0.c.b16.cont [7/8] 0, 128
      %954 = vxpose.xlu0.c.b16.end [8/8] 0, 128
      %v955 = vpop.trf.xlu0
      %v956 = vpop.trf.xlu0
      %v957 = vpop.trf.xlu0
      %v958 = vpop.trf.xlu0
      %v959 = vpop.trf.xlu0
      %v960 = vpop.trf.xlu0
      %v961 = vpop.trf.xlu0
      %v962 = vpop.trf.xlu0
      %v963 = vcombine.low %v843, %v907
      %v965 = vunpack.c.l.s4 1983009808
      %v966 = vunpack.c.0.s8 %v965
      %v967 = vlaneseq
      %v968 = vshrl.u32 %v967, 7
      %v969 = vsub.s32 %v966, %v968
      %v970 = vrot.slane %v963, %v969
      %v971 = vcombine.low %v875, %v939
      %v973 = vunpack.c.l.s4 1983009808
      %v974 = vunpack.c.0.s8 %v973
      %v975 = vlaneseq
      %v976 = vshrl.u32 %v975, 7
      %v977 = vsub.s32 %v974, %v976
      %v978 = vrot.slane %v971, %v977
      %v979 = vcombine.low %v970, %v978
      %v981 = vunpack.c.l.s4 1934713408
      %v982 = vunpack.c.0.s8 %v981
      %v983 = vlaneseq
      %v984 = vshrl.u32 %v983, 7
      %v985 = vsub.s32 %v982, %v984
      %v986 = vrot.slane %v979, %v985
      %v987 = vcombine.high %v986, 0
      %v988 = vcombine.low %v859, %v923
      %v990 = vunpack.c.l.s4 1983009808
      %v991 = vunpack.c.0.s8 %v990
      %v992 = vlaneseq
      %v993 = vshrl.u32 %v992, 7
      %v994 = vsub.s32 %v991, %v993
      %v995 = vrot.slane %v988, %v994
      %v996 = vcombine.low %v891, %v955
      %v998 = vunpack.c.l.s4 1983009808
      %v999 = vunpack.c.0.s8 %v998
      %v1000 = vlaneseq
      %v1001 = vshrl.u32 %v1000, 7
      %v1002 = vsub.s32 %v999, %v1001
      %v1003 = vrot.slane %v996, %v1002
      %v1004 = vcombine.low %v995, %v1003
      %v1006 = vunpack.c.l.s4 1934713408
      %v1007 = vunpack.c.0.s8 %v1006
      %v1008 = vlaneseq
      %v1009 = vshrl.u32 %v1008, 7
      %v1010 = vsub.s32 %v1007, %v1009
      %v1011 = vrot.slane %v1004, %v1010
      %v1012 = vcombine.high %v1011, 0
      %v1015 = vpack.i.b16 %v1011, %v986
      %v1016 = vshrl.u32 %v986, 16
      %v1017 = vshrl.u32 %v1011, 16
      %v1018 = vpack.i.b16 %v1017, %v1016
      %v1021 = vpack.i.b16 %v1012, %v987
      %v1022 = vshrl.u32 %v987, 16
      %v1023 = vshrl.u32 %v1012, 16
      %v1024 = vpack.i.b16 %v1023, %v1022
      %vm1025 = vcmask 64512
      %v1027 = vsel %vm1025, %v648, 0
      %vm1029 = vcmask 1043456
      %v1031 = vsel %vm1029, %v1015, 0
      %1033 = vmatprep.subr.bf16.mxu0 0
      %1034 = vmatpush1.bf16.msra.mxu0 %v1031
      %1035 = vmatprep.subr.bf16.mxu0 0
      %1036 = vmatpush1.bf16.msra.mxu0 0
      %1037 = vmatprep.subr.bf16.mxu0 0
      %1038 = vmatpush1.bf16.msra.mxu0 0
      %1039 = vmatprep.subr.bf16.mxu0 0
      %1040 = vmatpush1.bf16.msra.mxu0 0
      %1041 = vmatprep.subr.bf16.mxu0 0
      %1042 = vmatpush1.bf16.msra.mxu0 0
      %1043 = vmatprep.subr.bf16.mxu0 0
      %1044 = vmatpush1.bf16.msra.mxu0 0
      %1045 = vmatprep.subr.bf16.mxu0 0
      %1046 = vmatpush1.bf16.msra.mxu0 0
      %1047 = vmatprep.subr.bf16.mxu0 0
      %1048 = vmatpush1.bf16.msra.mxu0 0
      %1049 = vmatprep.subr.bf16.mxu0 0
      %1050 = vmatpush1.bf16.msra.mxu0 0
      %1051 = vmatprep.subr.bf16.mxu0 0
      %1052 = vmatpush1.bf16.msra.mxu0 0
      %1053 = vmatprep.subr.bf16.mxu0 0
      %1054 = vmatpush1.bf16.msra.mxu0 0
      %1055 = vmatprep.subr.bf16.mxu0 0
      %1056 = vmatpush1.bf16.msra.mxu0 0
      %1057 = vmatprep.subr.bf16.mxu0 0
      %1058 = vmatpush1.bf16.msra.mxu0 0
      %1059 = vmatprep.subr.bf16.mxu0 0
      %1060 = vmatpush1.bf16.msra.mxu0 0
      %1061 = vmatprep.subr.bf16.mxu0 0
      %1062 = vmatpush1.bf16.msra.mxu0 0
      %1063 = vmatprep.subr.bf16.mxu0 0
      %1064 = vmatpush1.bf16.msra.mxu0 0
      %1065 = vmatprep.mubr.bf16.mxu0 0
      %1066 = vmatmul.mubr.bf16.gmra.mrb[0].mxu0 %v1027
      %v1067 = vpop.f32.mrb[0].mxu0
      %v1068 = vadd.f32 0.0, %v1067
      %v1069 = vpop.f32.mrb[0].mxu0
      %v1070 = vpop.f32.mrb[0].mxu0
      %v1071 = vpop.f32.mrb[0].mxu0
      %1072 = vdwg.mxu0
      %v1074 = vsel %vm1025, %v651, 0
      %v1077 = vsel %vm1029, %v1018, 0
      %1079 = vmatprep.subr.bf16.mxu0 0
      %1080 = vmatpush1.bf16.msra.mxu0 %v1077
      %1081 = vmatprep.subr.bf16.mxu0 0
      %1082 = vmatpush1.bf16.msra.mxu0 0
      %1083 = vmatprep.subr.bf16.mxu0 0
      %1084 = vmatpush1.bf16.msra.mxu0 0
      %1085 = vmatprep.subr.bf16.mxu0 0
      %1086 = vmatpush1.bf16.msra.mxu0 0
      %1087 = vmatprep.subr.bf16.mxu0 0
      %1088 = vmatpush1.bf16.msra.mxu0 0
      %1089 = vmatprep.subr.bf16.mxu0 0
      %1090 = vmatpush1.bf16.msra.mxu0 0
      %1091 = vmatprep.subr.bf16.mxu0 0
      %1092 = vmatpush1.bf16.msra.mxu0 0
      %1093 = vmatprep.subr.bf16.mxu0 0
      %1094 = vmatpush1.bf16.msra.mxu0 0
      %1095 = vmatprep.subr.bf16.mxu0 0
      %1096 = vmatpush1.bf16.msra.mxu0 0
      %1097 = vmatprep.subr.bf16.mxu0 0
      %1098 = vmatpush1.bf16.msra.mxu0 0
      %1099 = vmatprep.subr.bf16.mxu0 0
      %1100 = vmatpush1.bf16.msra.mxu0 0
      %1101 = vmatprep.subr.bf16.mxu0 0
      %1102 = vmatpush1.bf16.msra.mxu0 0
      %1103 = vmatprep.subr.bf16.mxu0 0
      %1104 = vmatpush1.bf16.msra.mxu0 0
      %1105 = vmatprep.subr.bf16.mxu0 0
      %1106 = vmatpush1.bf16.msra.mxu0 0
      %1107 = vmatprep.subr.bf16.mxu0 0
      %1108 = vmatpush1.bf16.msra.mxu0 0
      %1109 = vmatprep.subr.bf16.mxu0 0
      %1110 = vmatpush1.bf16.msra.mxu0 0
      %1111 = vmatprep.mubr.bf16.mxu0 0
      %1112 = vmatmul.mubr.bf16.gmra.mrb[0].mxu0 %v1074
      %v1113 = vpop.f32.mrb[0].mxu0
      %v1114 = vadd.f32 0.0, %v1113
      %v1115 = vpop.f32.mrb[0].mxu0
      %v1116 = vpop.f32.mrb[0].mxu0
      %v1117 = vpop.f32.mrb[0].mxu0
      %1118 = vdwg.mxu0
      %v1120 = vsel %vm1025, %v654, 0
      %v1123 = vsel %vm1029, %v1021, 0
      %1125 = vmatprep.subr.bf16.mxu0 0
      %1126 = vmatpush1.bf16.msra.mxu0 %v1123
      %1127 = vmatprep.subr.bf16.mxu0 0
      %1128 = vmatpush1.bf16.msra.mxu0 0
      %1129 = vmatprep.subr.bf16.mxu0 0
      %1130 = vmatpush1.bf16.msra.mxu0 0
      %1131 = vmatprep.subr.bf16.mxu0 0
      %1132 = vmatpush1.bf16.msra.mxu0 0
      %1133 = vmatprep.subr.bf16.mxu0 0
      %1134 = vmatpush1.bf16.msra.mxu0 0
      %1135 = vmatprep.subr.bf16.mxu0 0
      %1136 = vmatpush1.bf16.msra.mxu0 0
      %1137 = vmatprep.subr.bf16.mxu0 0
      %1138 = vmatpush1.bf16.msra.mxu0 0
      %1139 = vmatprep.subr.bf16.mxu0 0
      %1140 = vmatpush1.bf16.msra.mxu0 0
      %1141 = vmatprep.subr.bf16.mxu0 0
      %1142 = vmatpush1.bf16.msra.mxu0 0
      %1143 = vmatprep.subr.bf16.mxu0 0
      %1144 = vmatpush1.bf16.msra.mxu0 0
      %1145 = vmatprep.subr.bf16.mxu0 0
      %1146 = vmatpush1.bf16.msra.mxu0 0
      %1147 = vmatprep.subr.bf16.mxu0 0
      %1148 = vmatpush1.bf16.msra.mxu0 0
      %1149 = vmatprep.subr.bf16.mxu0 0
      %1150 = vmatpush1.bf16.msra.mxu0 0
      %1151 = vmatprep.subr.bf16.mxu0 0
      %1152 = vmatpush1.bf16.msra.mxu0 0
      %1153 = vmatprep.subr.bf16.mxu0 0
      %1154 = vmatpush1.bf16.msra.mxu0 0
      %1155 = vmatprep.subr.bf16.mxu0 0
      %1156 = vmatpush1.bf16.msra.mxu0 0
      %1157 = vmatprep.mubr.bf16.mxu0 0
      %1158 = vmatmul.mubr.bf16.gmra.mrb[0].mxu0 %v1120
      %v1159 = vpop.f32.mrb[0].mxu0
      %v1160 = vadd.f32 0.0, %v1159
      %v1161 = vpop.f32.mrb[0].mxu0
      %v1162 = vpop.f32.mrb[0].mxu0
      %v1163 = vpop.f32.mrb[0].mxu0
      %1164 = vdwg.mxu0
      %v1166 = vsel %vm1025, %v657, 0
      %v1169 = vsel %vm1029, %v1024, 0
      %1171 = vmatprep.subr.bf16.mxu0 0
      %1172 = vmatpush1.bf16.msra.mxu0 %v1169
      %1173 = vmatprep.subr.bf16.mxu0 0
      %1174 = vmatpush1.bf16.msra.mxu0 0
      %1175 = vmatprep.subr.bf16.mxu0 0
      %1176 = vmatpush1.bf16.msra.mxu0 0
      %1177 = vmatprep.subr.bf16.mxu0 0
      %1178 = vmatpush1.bf16.msra.mxu0 0
      %1179 = vmatprep.subr.bf16.mxu0 0
      %1180 = vmatpush1.bf16.msra.mxu0 0
      %1181 = vmatprep.subr.bf16.mxu0 0
      %1182 = vmatpush1.bf16.msra.mxu0 0
      %1183 = vmatprep.subr.bf16.mxu0 0
      %1184 = vmatpush1.bf16.msra.mxu0 0
      %1185 = vmatprep.subr.bf16.mxu0 0
      %1186 = vmatpush1.bf16.msra.mxu0 0
      %1187 = vmatprep.subr.bf16.mxu0 0
      %1188 = vmatpush1.bf16.msra.mxu0 0
      %1189 = vmatprep.subr.bf16.mxu0 0
      %1190 = vmatpush1.bf16.msra.mxu0 0
      %1191 = vmatprep.subr.bf16.mxu0 0
      %1192 = vmatpush1.bf16.msra.mxu0 0
      %1193 = vmatprep.subr.bf16.mxu0 0
      %1194 = vmatpush1.bf16.msra.mxu0 0
      %1195 = vmatprep.subr.bf16.mxu0 0
      %1196 = vmatpush1.bf16.msra.mxu0 0
      %1197 = vmatprep.subr.bf16.mxu0 0
      %1198 = vmatpush1.bf16.msra.mxu0 0
      %1199 = vmatprep.subr.bf16.mxu0 0
      %1200 = vmatpush1.bf16.msra.mxu0 0
      %1201 = vmatprep.subr.bf16.mxu0 0
      %1202 = vmatpush1.bf16.msra.mxu0 0
      %1203 = vmatprep.mubr.bf16.mxu0 0
      %1204 = vmatmul.mubr.bf16.gmra.mrb[0].mxu0 %v1166
      %v1205 = vpop.f32.mrb[0].mxu0
      %v1206 = vadd.f32 0.0, %v1205
      %v1207 = vpop.f32.mrb[0].mxu0
      %v1208 = vpop.f32.mrb[0].mxu0
      %v1209 = vpop.f32.mrb[0].mxu0
      %1210 = vdwg.mxu0
      %vm1211 = vcmask 36864
      %v1212 = vsel %vm1211, %v1068, -inf
      %1213 = vmax.xlane.f32.xlu0 %v1212
      %v1214 = vpop.xlane.xlu0 %1213
      %v1215 = vsel %vm1211, %v1114, -inf
      %1216 = vmax.xlane.f32.xlu0 %v1215
      %v1217 = vpop.xlane.xlu0 %1216
      %v1218 = vsel %vm1211, %v1160, -inf
      %1219 = vmax.xlane.f32.xlu0 %v1218
      %v1220 = vpop.xlane.xlu0 %1219
      %v1221 = vsel %vm1211, %v1206, -inf
      %1222 = vmax.xlane.f32.xlu0 %v1221
      %v1223 = vpop.xlane.xlu0 %1222
      %v1224 = vsub.f32 %v1068, %v1214
      %v1225 = vsub.f32 %v1114, %v1217
      %v1226 = vsub.f32 %v1160, %v1220
      %v1227 = vsub.f32 %v1206, %v1223
      %v1228 = vpack.c.bf16 %v1224, %v1224
      %v1229 = vpack.c.bf16 %v1225, %v1225
      %v1230 = vpack.c.bf16 %v1226, %v1226
      %v1231 = vpack.c.bf16 %v1227, %v1227
      %v1233 = vmul.bf16 %v1228, 1069105081
      %v1234 = vpow.bf16.pop %v1233
      %v1236 = vmul.bf16 %v1229, 1069105081
      %v1237 = vpow.bf16.pop %v1236
      %v1239 = vmul.bf16 %v1230, 1069105081
      %v1240 = vpow.bf16.pop %v1239
      %v1242 = vmul.bf16 %v1231, 1069105081
      %v1243 = vpow.bf16.pop %v1242
      %v1244 = vunpack.c.l.bf16 %v1234
      %v1245 = vunpack.c.l.bf16 %v1237
      %v1246 = vunpack.c.l.bf16 %v1240
      %v1247 = vunpack.c.l.bf16 %v1243
      %v1248 = vsel %vm1211, %v1244, 0.0
      %1249 = vadd.xlane.f32.xlu0 %v1248
      %v1250 = vpop.xlane.xlu0 %1249
      %v1251 = vsel %vm1211, %v1245, 0.0
      %1252 = vadd.xlane.f32.xlu0 %v1251
      %v1253 = vpop.xlane.xlu0 %1252
      %v1254 = vsel %vm1211, %v1246, 0.0
      %1255 = vadd.xlane.f32.xlu0 %v1254
      %v1256 = vpop.xlane.xlu0 %1255
      %v1257 = vsel %vm1211, %v1247, 0.0
      %1258 = vadd.xlane.f32.xlu0 %v1257
      %v1259 = vpop.xlane.xlu0 %1258
      %1260 = vxpose.xlu0.c.b16.start [1/8] %v599, 128
      %1261 = vxpose.xlu0.c.b16.cont [2/8] 0, 128
      %1262 = vxpose.xlu0.c.b16.cont [3/8] 0, 128
      %1263 = vxpose.xlu0.c.b16.cont [4/8] 0, 128
      %1264 = vxpose.xlu0.c.b16.cont [5/8] 0, 128
      %1265 = vxpose.xlu0.c.b16.cont [6/8] 0, 128
      %1266 = vxpose.xlu0.c.b16.cont [7/8] 0, 128
      %1267 = vxpose.xlu0.c.b16.end [8/8] 0, 128
      %v1268 = vpop.trf.xlu0
      %v1269 = vpop.trf.xlu0
      %v1270 = vpop.trf.xlu0
      %v1271 = vpop.trf.xlu0
      %v1272 = vpop.trf.xlu0
      %v1273 = vpop.trf.xlu0
      %v1274 = vpop.trf.xlu0
      %v1275 = vpop.trf.xlu0
      %1276 = vxpose.xlu0.c.b16.start [1/8] %v603, 128
      %1277 = vxpose.xlu0.c.b16.cont [2/8] 0, 128
      %1278 = vxpose.xlu0.c.b16.cont [3/8] 0, 128
      %1279 = vxpose.xlu0.c.b16.cont [4/8] 0, 128
      %1280 = vxpose.xlu0.c.b16.cont [5/8] 0, 128
      %1281 = vxpose.xlu0.c.b16.cont [6/8] 0, 128
      %1282 = vxpose.xlu0.c.b16.cont [7/8] 0, 128
      %1283 = vxpose.xlu0.c.b16.end [8/8] 0, 128
      %v1284 = vpop.trf.xlu0
      %v1285 = vpop.trf.xlu0
      %v1286 = vpop.trf.xlu0
      %v1287 = vpop.trf.xlu0
      %v1288 = vpop.trf.xlu0
      %v1289 = vpop.trf.xlu0
      %v1290 = vpop.trf.xlu0
      %v1291 = vpop.trf.xlu0
      %1292 = vxpose.xlu0.c.b16.start [1/8] %v607, 128
      %1293 = vxpose.xlu0.c.b16.cont [2/8] 0, 128
      %1294 = vxpose.xlu0.c.b16.cont [3/8] 0, 128
      %1295 = vxpose.xlu0.c.b16.cont [4/8] 0, 128
      %1296 = vxpose.xlu0.c.b16.cont [5/8] 0, 128
      %1297 = vxpose.xlu0.c.b16.cont [6/8] 0, 128
      %1298 = vxpose.xlu0.c.b16.cont [7/8] 0, 128
      %1299 = vxpose.xlu0.c.b16.end [8/8] 0, 128
      %v1300 = vpop.trf.xlu0
      %v1301 = vpop.trf.xlu0
      %v1302 = vpop.trf.xlu0
      %v1303 = vpop.trf.xlu0
      %v1304 = vpop.trf.xlu0
      %v1305 = vpop.trf.xlu0
      %v1306 = vpop.trf.xlu0
      %v1307 = vpop.trf.xlu0
      %1308 = vxpose.xlu0.c.b16.start [1/8] %v611, 128
      %1309 = vxpose.xlu0.c.b16.cont [2/8] 0, 128
      %1310 = vxpose.xlu0.c.b16.cont [3/8] 0, 128
      %1311 = vxpose.xlu0.c.b16.cont [4/8] 0, 128
      %1312 = vxpose.xlu0.c.b16.cont [5/8] 0, 128
      %1313 = vxpose.xlu0.c.b16.cont [6/8] 0, 128
      %1314 = vxpose.xlu0.c.b16.cont [7/8] 0, 128
      %1315 = vxpose.xlu0.c.b16.end [8/8] 0, 128
      %v1316 = vpop.trf.xlu0
      %v1317 = vpop.trf.xlu0
      %v1318 = vpop.trf.xlu0
      %v1319 = vpop.trf.xlu0
      %v1320 = vpop.trf.xlu0
      %v1321 = vpop.trf.xlu0
      %v1322 = vpop.trf.xlu0
      %v1323 = vpop.trf.xlu0
      %1324 = vxpose.xlu0.c.b16.start [1/8] %v615, 128
      %1325 = vxpose.xlu0.c.b16.cont [2/8] 0, 128
      %1326 = vxpose.xlu0.c.b16.cont [3/8] 0, 128
      %1327 = vxpose.xlu0.c.b16.cont [4/8] 0, 128
      %1328 = vxpose.xlu0.c.b16.cont [5/8] 0, 128
      %1329 = vxpose.xlu0.c.b16.cont [6/8] 0, 128
      %1330 = vxpose.xlu0.c.b16.cont [7/8] 0, 128
      %1331 = vxpose.xlu0.c.b16.end [8/8] 0, 128
      %v1332 = vpop.trf.xlu0
      %v1333 = vpop.trf.xlu0
      %v1334 = vpop.trf.xlu0
      %v1335 = vpop.trf.xlu0
      %v1336 = vpop.trf.xlu0
      %v1337 = vpop.trf.xlu0
      %v1338 = vpop.trf.xlu0
      %v1339 = vpop.trf.xlu0
      %v1340 = vcombine.low %v1268, %v1332
      %v1342 = vunpack.c.l.s4 1983009808
      %v1343 = vunpack.c.0.s8 %v1342
      %v1344 = vlaneseq
      %v1345 = vshrl.u32 %v1344, 7
      %v1346 = vsub.s32 %v1343, %v1345
      %v1347 = vrot.slane %v1340, %v1346
      %v1349 = vunpack.c.l.s4 1983009808
      %v1350 = vunpack.c.0.s8 %v1349
      %v1351 = vlaneseq
      %v1352 = vshrl.u32 %v1351, 7
      %v1353 = vsub.s32 %v1350, %v1352
      %v1354 = vrot.slane %v1300, %v1353
      %v1355 = vcombine.low %v1347, %v1354
      %v1356 = vcombine.high %v1347, %v1354
      %v1358 = vunpack.c.l.s4 1934713408
      %v1359 = vunpack.c.0.s8 %v1358
      %v1360 = vlaneseq
      %v1361 = vshrl.u32 %v1360, 7
      %v1362 = vsub.s32 %v1359, %v1361
      %v1363 = vrot.slane %v1355, %v1362
      %v1365 = vunpack.c.l.s4 1934713408
      %v1366 = vunpack.c.0.s8 %v1365
      %v1367 = vlaneseq
      %v1368 = vshrl.u32 %v1367, 7
      %v1369 = vsub.s32 %v1366, %v1368
      %v1370 = vrot.slane %v1356, %v1369
      %v1371 = vcombine.high %v1363, 0
      %v1372 = vcombine.high %v1370, 0
      %v1374 = vunpack.c.l.s4 1983009808
      %v1375 = vunpack.c.0.s8 %v1374
      %v1376 = vlaneseq
      %v1377 = vshrl.u32 %v1376, 7
      %v1378 = vsub.s32 %v1375, %v1377
      %v1379 = vrot.slane %v1284, %v1378
      %v1381 = vunpack.c.l.s4 1983009808
      %v1382 = vunpack.c.0.s8 %v1381
      %v1383 = vlaneseq
      %v1384 = vshrl.u32 %v1383, 7
      %v1385 = vsub.s32 %v1382, %v1384
      %v1386 = vrot.slane %v1316, %v1385
      %v1387 = vcombine.low %v1379, %v1386
      %v1388 = vcombine.high %v1379, %v1386
      %v1390 = vunpack.c.l.s4 1934713408
      %v1391 = vunpack.c.0.s8 %v1390
      %v1392 = vlaneseq
      %v1393 = vshrl.u32 %v1392, 7
      %v1394 = vsub.s32 %v1391, %v1393
      %v1395 = vrot.slane %v1387, %v1394
      %v1397 = vunpack.c.l.s4 1934713408
      %v1398 = vunpack.c.0.s8 %v1397
      %v1399 = vlaneseq
      %v1400 = vshrl.u32 %v1399, 7
      %v1401 = vsub.s32 %v1398, %v1400
      %v1402 = vrot.slane %v1388, %v1401
      %v1403 = vcombine.high %v1395, 0
      %v1404 = vcombine.high %v1402, 0
      %v1407 = vpack.i.b16 %v1395, %v1363
      %v1409 = vshrl.u32 %v1363, 16
      %v1410 = vshrl.u32 %v1395, 16
      %v1411 = vpack.i.b16 %v1410, %v1409
      %v1415 = vpack.i.b16 %v1403, %v1371
      %v1417 = vshrl.u32 %v1371, 16
      %v1418 = vshrl.u32 %v1403, 16
      %v1419 = vpack.i.b16 %v1418, %v1417
      %v1423 = vpack.i.b16 %v1402, %v1370
      %v1425 = vshrl.u32 %v1370, 16
      %v1426 = vshrl.u32 %v1402, 16
      %v1427 = vpack.i.b16 %v1426, %v1425
      %v1431 = vpack.i.b16 %v1404, %v1372
      %v1433 = vshrl.u32 %v1372, 16
      %v1434 = vshrl.u32 %v1404, 16
      %v1435 = vpack.i.b16 %v1434, %v1433
      %1437 = vxpose.xlu0.c.b16.start [1/8] %v1407, 128
      %1438 = vxpose.xlu0.c.b16.cont [2/8] 0, 128
      %1439 = vxpose.xlu0.c.b16.cont [3/8] 0, 128
      %1440 = vxpose.xlu0.c.b16.cont [4/8] 0, 128
      %1441 = vxpose.xlu0.c.b16.cont [5/8] 0, 128
      %1442 = vxpose.xlu0.c.b16.cont [6/8] 0, 128
      %1443 = vxpose.xlu0.c.b16.cont [7/8] 0, 128
      %1444 = vxpose.xlu0.c.b16.end [8/8] 0, 128
      %v1445 = vpop.trf.xlu0
      %v1446 = vpop.trf.xlu0
      %v1447 = vpop.trf.xlu0
      %v1448 = vpop.trf.xlu0
      %v1449 = vpop.trf.xlu0
      %v1450 = vpop.trf.xlu0
      %v1451 = vpop.trf.xlu0
      %v1452 = vpop.trf.xlu0
      %1453 = vxpose.xlu0.c.b16.start [1/8] %v1411, 128
      %1454 = vxpose.xlu0.c.b16.cont [2/8] 0, 128
      %1455 = vxpose.xlu0.c.b16.cont [3/8] 0, 128
      %1456 = vxpose.xlu0.c.b16.cont [4/8] 0, 128
      %1457 = vxpose.xlu0.c.b16.cont [5/8] 0, 128
      %1458 = vxpose.xlu0.c.b16.cont [6/8] 0, 128
      %1459 = vxpose.xlu0.c.b16.cont [7/8] 0, 128
      %1460 = vxpose.xlu0.c.b16.end [8/8] 0, 128
      %v1461 = vpop.trf.xlu0
      %v1462 = vpop.trf.xlu0
      %v1463 = vpop.trf.xlu0
      %v1464 = vpop.trf.xlu0
      %v1465 = vpop.trf.xlu0
      %v1466 = vpop.trf.xlu0
      %v1467 = vpop.trf.xlu0
      %v1468 = vpop.trf.xlu0
      %1469 = vxpose.xlu0.c.b16.start [1/8] %v1415, 128
      %1470 = vxpose.xlu0.c.b16.cont [2/8] 0, 128
      %1471 = vxpose.xlu0.c.b16.cont [3/8] 0, 128
      %1472 = vxpose.xlu0.c.b16.cont [4/8] 0, 128
      %1473 = vxpose.xlu0.c.b16.cont [5/8] 0, 128
      %1474 = vxpose.xlu0.c.b16.cont [6/8] 0, 128
      %1475 = vxpose.xlu0.c.b16.cont [7/8] 0, 128
      %1476 = vxpose.xlu0.c.b16.end [8/8] 0, 128
      %v1477 = vpop.trf.xlu0
      %v1478 = vpop.trf.xlu0
      %v1479 = vpop.trf.xlu0
      %v1480 = vpop.trf.xlu0
      %v1481 = vpop.trf.xlu0
      %v1482 = vpop.trf.xlu0
      %v1483 = vpop.trf.xlu0
      %v1484 = vpop.trf.xlu0
      %1485 = vxpose.xlu0.c.b16.start [1/8] %v1419, 128
      %1486 = vxpose.xlu0.c.b16.cont [2/8] 0, 128
      %1487 = vxpose.xlu0.c.b16.cont [3/8] 0, 128
      %1488 = vxpose.xlu0.c.b16.cont [4/8] 0, 128
      %1489 = vxpose.xlu0.c.b16.cont [5/8] 0, 128
      %1490 = vxpose.xlu0.c.b16.cont [6/8] 0, 128
      %1491 = vxpose.xlu0.c.b16.cont [7/8] 0, 128
      %1492 = vxpose.xlu0.c.b16.end [8/8] 0, 128
      %v1493 = vpop.trf.xlu0
      %v1494 = vpop.trf.xlu0
      %v1495 = vpop.trf.xlu0
      %v1496 = vpop.trf.xlu0
      %v1497 = vpop.trf.xlu0
      %v1498 = vpop.trf.xlu0
      %v1499 = vpop.trf.xlu0
      %v1500 = vpop.trf.xlu0
      %1501 = vxpose.xlu0.c.b16.start [1/8] %v1423, 128
      %1502 = vxpose.xlu0.c.b16.cont [2/8] 0, 128
      %1503 = vxpose.xlu0.c.b16.cont [3/8] 0, 128
      %1504 = vxpose.xlu0.c.b16.cont [4/8] 0, 128
      %1505 = vxpose.xlu0.c.b16.cont [5/8] 0, 128
      %1506 = vxpose.xlu0.c.b16.cont [6/8] 0, 128
      %1507 = vxpose.xlu0.c.b16.cont [7/8] 0, 128
      %1508 = vxpose.xlu0.c.b16.end [8/8] 0, 128
      %v1509 = vpop.trf.xlu0
      %v1510 = vpop.trf.xlu0
      %v1511 = vpop.trf.xlu0
      %v1512 = vpop.trf.xlu0
      %v1513 = vpop.trf.xlu0
      %v1514 = vpop.trf.xlu0
      %v1515 = vpop.trf.xlu0
      %v1516 = vpop.trf.xlu0
      %1517 = vxpose.xlu0.c.b16.start [1/8] %v1427, 128
      %1518 = vxpose.xlu0.c.b16.cont [2/8] 0, 128
      %1519 = vxpose.xlu0.c.b16.cont [3/8] 0, 128
      %1520 = vxpose.xlu0.c.b16.cont [4/8] 0, 128
      %1521 = vxpose.xlu0.c.b16.cont [5/8] 0, 128
      %1522 = vxpose.xlu0.c.b16.cont [6/8] 0, 128
      %1523 = vxpose.xlu0.c.b16.cont [7/8] 0, 128
      %1524 = vxpose.xlu0.c.b16.end [8/8] 0, 128
      %v1525 = vpop.trf.xlu0
      %v1526 = vpop.trf.xlu0
      %v1527 = vpop.trf.xlu0
      %v1528 = vpop.trf.xlu0
      %v1529 = vpop.trf.xlu0
      %v1530 = vpop.trf.xlu0
      %v1531 = vpop.trf.xlu0
      %v1532 = vpop.trf.xlu0
      %1533 = vxpose.xlu0.c.b16.start [1/8] %v1431, 128
      %1534 = vxpose.xlu0.c.b16.cont [2/8] 0, 128
      %1535 = vxpose.xlu0.c.b16.cont [3/8] 0, 128
      %1536 = vxpose.xlu0.c.b16.cont [4/8] 0, 128
      %1537 = vxpose.xlu0.c.b16.cont [5/8] 0, 128
      %1538 = vxpose.xlu0.c.b16.cont [6/8] 0, 128
      %1539 = vxpose.xlu0.c.b16.cont [7/8] 0, 128
      %1540 = vxpose.xlu0.c.b16.end [8/8] 0, 128
      %v1541 = vpop.trf.xlu0
      %v1542 = vpop.trf.xlu0
      %v1543 = vpop.trf.xlu0
      %v1544 = vpop.trf.xlu0
      %v1545 = vpop.trf.xlu0
      %v1546 = vpop.trf.xlu0
      %v1547 = vpop.trf.xlu0
      %v1548 = vpop.trf.xlu0
      %1549 = vxpose.xlu0.c.b16.start [1/8] %v1435, 128
      %1550 = vxpose.xlu0.c.b16.cont [2/8] 0, 128
      %1551 = vxpose.xlu0.c.b16.cont [3/8] 0, 128
      %1552 = vxpose.xlu0.c.b16.cont [4/8] 0, 128
      %1553 = vxpose.xlu0.c.b16.cont [5/8] 0, 128
      %1554 = vxpose.xlu0.c.b16.cont [6/8] 0, 128
      %1555 = vxpose.xlu0.c.b16.cont [7/8] 0, 128
      %1556 = vxpose.xlu0.c.b16.end [8/8] 0, 128
      %v1557 = vpop.trf.xlu0
      %v1558 = vpop.trf.xlu0
      %v1559 = vpop.trf.xlu0
      %v1560 = vpop.trf.xlu0
      %v1561 = vpop.trf.xlu0
      %v1562 = vpop.trf.xlu0
      %v1563 = vpop.trf.xlu0
      %v1564 = vpop.trf.xlu0
      %v1565 = vcombine.low %v1445, %v1509
      %v1567 = vunpack.c.l.s4 1983009808
      %v1568 = vunpack.c.0.s8 %v1567
      %v1569 = vlaneseq
      %v1570 = vshrl.u32 %v1569, 7
      %v1571 = vsub.s32 %v1568, %v1570
      %v1572 = vrot.slane %v1565, %v1571
      %v1573 = vcombine.low %v1477, %v1541
      %v1575 = vunpack.c.l.s4 1983009808
      %v1576 = vunpack.c.0.s8 %v1575
      %v1577 = vlaneseq
      %v1578 = vshrl.u32 %v1577, 7
      %v1579 = vsub.s32 %v1576, %v1578
      %v1580 = vrot.slane %v1573, %v1579
      %v1581 = vcombine.low %v1572, %v1580
      %v1583 = vunpack.c.l.s4 1934713408
      %v1584 = vunpack.c.0.s8 %v1583
      %v1585 = vlaneseq
      %v1586 = vshrl.u32 %v1585, 7
      %v1587 = vsub.s32 %v1584, %v1586
      %v1588 = vrot.slane %v1581, %v1587
      %v1589 = vcombine.high %v1588, 0
      %v1590 = vcombine.low %v1461, %v1525
      %v1592 = vunpack.c.l.s4 1983009808
      %v1593 = vunpack.c.0.s8 %v1592
      %v1594 = vlaneseq
      %v1595 = vshrl.u32 %v1594, 7
      %v1596 = vsub.s32 %v1593, %v1595
      %v1597 = vrot.slane %v1590, %v1596
      %v1598 = vcombine.low %v1493, %v1557
      %v1600 = vunpack.c.l.s4 1983009808
      %v1601 = vunpack.c.0.s8 %v1600
      %v1602 = vlaneseq
      %v1603 = vshrl.u32 %v1602, 7
      %v1604 = vsub.s32 %v1601, %v1603
      %v1605 = vrot.slane %v1598, %v1604
      %v1606 = vcombine.low %v1597, %v1605
      %v1608 = vunpack.c.l.s4 1934713408
      %v1609 = vunpack.c.0.s8 %v1608
      %v1610 = vlaneseq
      %v1611 = vshrl.u32 %v1610, 7
      %v1612 = vsub.s32 %v1609, %v1611
      %v1613 = vrot.slane %v1606, %v1612
      %v1614 = vcombine.high %v1613, 0
      %v1617 = vpack.i.b16 %v1613, %v1588
      %v1618 = vshrl.u32 %v1588, 16
      %v1619 = vshrl.u32 %v1613, 16
      %v1620 = vpack.i.b16 %v1619, %v1618
      %v1623 = vpack.i.b16 %v1614, %v1589
      %v1624 = vshrl.u32 %v1589, 16
      %v1625 = vshrl.u32 %v1614, 16
      %v1626 = vpack.i.b16 %v1625, %v1624
      %vm1627 = vcmask 39936
      %v1629 = vsel %vm1627, %v1617, 0
      %v1632 = vsel %vm1627, %v1234, 0
      %1634 = vmatprep.subr.bf16.mxu0 0
      %1635 = vmatpush1.bf16.xpose.msra.mxu0 %v1632
      %1636 = vmatprep.subr.bf16.mxu0 0
      %1637 = vmatpush1.bf16.xpose.msra.mxu0 0
      %1638 = vmatprep.subr.bf16.mxu0 0
      %1639 = vmatpush1.bf16.xpose.msra.mxu0 0
      %1640 = vmatprep.subr.bf16.mxu0 0
      %1641 = vmatpush1.bf16.xpose.msra.mxu0 0
      %1642 = vmatprep.subr.bf16.mxu0 0
      %1643 = vmatpush1.bf16.xpose.msra.mxu0 0
      %1644 = vmatprep.subr.bf16.mxu0 0
      %1645 = vmatpush1.bf16.xpose.msra.mxu0 0
      %1646 = vmatprep.subr.bf16.mxu0 0
      %1647 = vmatpush1.bf16.xpose.msra.mxu0 0
      %1648 = vmatprep.subr.bf16.mxu0 0
      %1649 = vmatpush1.bf16.xpose.msra.mxu0 0
      %1650 = vmatprep.subr.bf16.mxu0 0
      %1651 = vmatpush1.bf16.xpose.msra.mxu0 0
      %1652 = vmatprep.subr.bf16.mxu0 0
      %1653 = vmatpush1.bf16.xpose.msra.mxu0 0
      %1654 = vmatprep.subr.bf16.mxu0 0
      %1655 = vmatpush1.bf16.xpose.msra.mxu0 0
      %1656 = vmatprep.subr.bf16.mxu0 0
      %1657 = vmatpush1.bf16.xpose.msra.mxu0 0
      %1658 = vmatprep.subr.bf16.mxu0 0
      %1659 = vmatpush1.bf16.xpose.msra.mxu0 0
      %1660 = vmatprep.subr.bf16.mxu0 0
      %1661 = vmatpush1.bf16.xpose.msra.mxu0 0
      %1662 = vmatprep.subr.bf16.mxu0 0
      %1663 = vmatpush1.bf16.xpose.msra.mxu0 0
      %1664 = vmatprep.subr.bf16.mxu0 0
      %1665 = vmatpush1.bf16.xpose.msra.mxu0 0
      %1666 = vmatprep.mubr.bf16.mxu0 0
      %1667 = vmatmul.mubr.bf16.gmra.mrb[0].mxu0 %v1629
      %v1668 = vpop.f32.mrb[0].mxu0
      %v1669 = vadd.f32 0.0, %v1668
      %v1670 = vpop.f32.mrb[0].mxu0
      %v1671 = vpop.f32.mrb[0].mxu0
      %v1672 = vpop.f32.mrb[0].mxu0
      %1673 = vdwg.mxu0
      %v1675 = vsel %vm1627, %v1620, 0
      %v1678 = vsel %vm1627, %v1237, 0
      %1680 = vmatprep.subr.bf16.mxu0 0
      %1681 = vmatpush1.bf16.xpose.msra.mxu0 %v1678
      %1682 = vmatprep.subr.bf16.mxu0 0
      %1683 = vmatpush1.bf16.xpose.msra.mxu0 0
      %1684 = vmatprep.subr.bf16.mxu0 0
      %1685 = vmatpush1.bf16.xpose.msra.mxu0 0
      %1686 = vmatprep.subr.bf16.mxu0 0
      %1687 = vmatpush1.bf16.xpose.msra.mxu0 0
      %1688 = vmatprep.subr.bf16.mxu0 0
      %1689 = vmatpush1.bf16.xpose.msra.mxu0 0
      %1690 = vmatprep.subr.bf16.mxu0 0
      %1691 = vmatpush1.bf16.xpose.msra.mxu0 0
      %1692 = vmatprep.subr.bf16.mxu0 0
      %1693 = vmatpush1.bf16.xpose.msra.mxu0 0
      %1694 = vmatprep.subr.bf16.mxu0 0
      %1695 = vmatpush1.bf16.xpose.msra.mxu0 0
      %1696 = vmatprep.subr.bf16.mxu0 0
      %1697 = vmatpush1.bf16.xpose.msra.mxu0 0
      %1698 = vmatprep.subr.bf16.mxu0 0
      %1699 = vmatpush1.bf16.xpose.msra.mxu0 0
      %1700 = vmatprep.subr.bf16.mxu0 0
      %1701 = vmatpush1.bf16.xpose.msra.mxu0 0
      %1702 = vmatprep.subr.bf16.mxu0 0
      %1703 = vmatpush1.bf16.xpose.msra.mxu0 0
      %1704 = vmatprep.subr.bf16.mxu0 0
      %1705 = vmatpush1.bf16.xpose.msra.mxu0 0
      %1706 = vmatprep.subr.bf16.mxu0 0
      %1707 = vmatpush1.bf16.xpose.msra.mxu0 0
      %1708 = vmatprep.subr.bf16.mxu0 0
      %1709 = vmatpush1.bf16.xpose.msra.mxu0 0
      %1710 = vmatprep.subr.bf16.mxu0 0
      %1711 = vmatpush1.bf16.xpose.msra.mxu0 0
      %1712 = vmatprep.mubr.bf16.mxu0 0
      %1713 = vmatmul.mubr.bf16.gmra.mrb[0].mxu0 %v1675
      %v1714 = vpop.f32.mrb[0].mxu0
      %v1715 = vadd.f32 0.0, %v1714
      %v1716 = vpop.f32.mrb[0].mxu0
      %v1717 = vpop.f32.mrb[0].mxu0
      %v1718 = vpop.f32.mrb[0].mxu0
      %1719 = vdwg.mxu0
      %v1721 = vsel %vm1627, %v1623, 0
      %v1724 = vsel %vm1627, %v1240, 0
      %1726 = vmatprep.subr.bf16.mxu0 0
      %1727 = vmatpush1.bf16.xpose.msra.mxu0 %v1724
      %1728 = vmatprep.subr.bf16.mxu0 0
      %1729 = vmatpush1.bf16.xpose.msra.mxu0 0
      %1730 = vmatprep.subr.bf16.mxu0 0
      %1731 = vmatpush1.bf16.xpose.msra.mxu0 0
      %1732 = vmatprep.subr.bf16.mxu0 0
      %1733 = vmatpush1.bf16.xpose.msra.mxu0 0
      %1734 = vmatprep.subr.bf16.mxu0 0
      %1735 = vmatpush1.bf16.xpose.msra.mxu0 0
      %1736 = vmatprep.subr.bf16.mxu0 0
      %1737 = vmatpush1.bf16.xpose.msra.mxu0 0
      %1738 = vmatprep.subr.bf16.mxu0 0
      %1739 = vmatpush1.bf16.xpose.msra.mxu0 0
      %1740 = vmatprep.subr.bf16.mxu0 0
      %1741 = vmatpush1.bf16.xpose.msra.mxu0 0
      %1742 = vmatprep.subr.bf16.mxu0 0
      %1743 = vmatpush1.bf16.xpose.msra.mxu0 0
      %1744 = vmatprep.subr.bf16.mxu0 0
      %1745 = vmatpush1.bf16.xpose.msra.mxu0 0
      %1746 = vmatprep.subr.bf16.mxu0 0
      %1747 = vmatpush1.bf16.xpose.msra.mxu0 0
      %1748 = vmatprep.subr.bf16.mxu0 0
      %1749 = vmatpush1.bf16.xpose.msra.mxu0 0
      %1750 = vmatprep.subr.bf16.mxu0 0
      %1751 = vmatpush1.bf16.xpose.msra.mxu0 0
      %1752 = vmatprep.subr.bf16.mxu0 0
      %1753 = vmatpush1.bf16.xpose.msra.mxu0 0
      %1754 = vmatprep.subr.bf16.mxu0 0
      %1755 = vmatpush1.bf16.xpose.msra.mxu0 0
      %1756 = vmatprep.subr.bf16.mxu0 0
      %1757 = vmatpush1.bf16.xpose.msra.mxu0 0
      %1758 = vmatprep.mubr.bf16.mxu0 0
      %1759 = vmatmul.mubr.bf16.gmra.mrb[0].mxu0 %v1721
      %v1760 = vpop.f32.mrb[0].mxu0
      %v1761 = vadd.f32 0.0, %v1760
      %v1762 = vpop.f32.mrb[0].mxu0
      %v1763 = vpop.f32.mrb[0].mxu0
      %v1764 = vpop.f32.mrb[0].mxu0
      %1765 = vdwg.mxu0
      %v1767 = vsel %vm1627, %v1626, 0
      %v1770 = vsel %vm1627, %v1243, 0
      %1772 = vmatprep.subr.bf16.mxu0 0
      %1773 = vmatpush1.bf16.xpose.msra.mxu0 %v1770
      %1774 = vmatprep.subr.bf16.mxu0 0
      %1775 = vmatpush1.bf16.xpose.msra.mxu0 0
      %1776 = vmatprep.subr.bf16.mxu0 0
      %1777 = vmatpush1.bf16.xpose.msra.mxu0 0
      %1778 = vmatprep.subr.bf16.mxu0 0
      %1779 = vmatpush1.bf16.xpose.msra.mxu0 0
      %1780 = vmatprep.subr.bf16.mxu0 0
      %1781 = vmatpush1.bf16.xpose.msra.mxu0 0
      %1782 = vmatprep.subr.bf16.mxu0 0
      %1783 = vmatpush1.bf16.xpose.msra.mxu0 0
      %1784 = vmatprep.subr.bf16.mxu0 0
      %1785 = vmatpush1.bf16.xpose.msra.mxu0 0
      %1786 = vmatprep.subr.bf16.mxu0 0
      %1787 = vmatpush1.bf16.xpose.msra.mxu0 0
      %1788 = vmatprep.subr.bf16.mxu0 0
      %1789 = vmatpush1.bf16.xpose.msra.mxu0 0
      %1790 = vmatprep.subr.bf16.mxu0 0
      %1791 = vmatpush1.bf16.xpose.msra.mxu0 0
      %1792 = vmatprep.subr.bf16.mxu0 0
      %1793 = vmatpush1.bf16.xpose.msra.mxu0 0
      %1794 = vmatprep.subr.bf16.mxu0 0
      %1795 = vmatpush1.bf16.xpose.msra.mxu0 0
      %1796 = vmatprep.subr.bf16.mxu0 0
      %1797 = vmatpush1.bf16.xpose.msra.mxu0 0
      %1798 = vmatprep.subr.bf16.mxu0 0
      %1799 = vmatpush1.bf16.xpose.msra.mxu0 0
      %1800 = vmatprep.subr.bf16.mxu0 0
      %1801 = vmatpush1.bf16.xpose.msra.mxu0 0
      %1802 = vmatprep.subr.bf16.mxu0 0
      %1803 = vmatpush1.bf16.xpose.msra.mxu0 0
      %1804 = vmatprep.mubr.bf16.mxu0 0
      %1805 = vmatmul.mubr.bf16.gmra.mrb[0].mxu0 %v1767
      %v1806 = vpop.f32.mrb[0].mxu0
      %v1807 = vadd.f32 0.0, %v1806
      %v1808 = vpop.f32.mrb[0].mxu0
      %v1809 = vpop.f32.mrb[0].mxu0
      %v1810 = vpop.f32.mrb[0].mxu0
      %1811 = vdwg.mxu0
      %1812 = vxpose.xlu0.b32.start [1/16] %v1669, 128
      %1813 = vxpose.xlu0.b32.cont [2/16] 0.0, 128
      %1814 = vxpose.xlu0.b32.cont [3/16] 0.0, 128
      %1815 = vxpose.xlu0.b32.cont [4/16] 0.0, 128
      %1816 = vxpose.xlu0.b32.cont [5/16] 0.0, 128
      %1817 = vxpose.xlu0.b32.cont [6/16] 0.0, 128
      %1818 = vxpose.xlu0.b32.cont [7/16] 0.0, 128
      %1819 = vxpose.xlu0.b32.cont [8/16] 0.0, 128
      %1820 = vxpose.xlu0.b32.cont [9/16] 0.0, 128
      %1821 = vxpose.xlu0.b32.cont [10/16] 0.0, 128
      %1822 = vxpose.xlu0.b32.cont [11/16] 0.0, 128
      %1823 = vxpose.xlu0.b32.cont [12/16] 0.0, 128
      %1824 = vxpose.xlu0.b32.cont [13/16] 0.0, 128
      %1825 = vxpose.xlu0.b32.cont [14/16] 0.0, 128
      %1826 = vxpose.xlu0.b32.cont [15/16] 0.0, 128
      %1827 = vxpose.xlu0.b32.end [16/16] 0.0, 128
      %v1828 = vpop.trf.xlu0
      %v1829 = vpop.trf.xlu0
      %v1830 = vpop.trf.xlu0
      %v1831 = vpop.trf.xlu0
      %v1832 = vpop.trf.xlu0
      %v1833 = vpop.trf.xlu0
      %v1834 = vpop.trf.xlu0
      %v1835 = vpop.trf.xlu0
      %v1836 = vpop.trf.xlu0
      %v1837 = vpop.trf.xlu0
      %v1838 = vpop.trf.xlu0
      %v1839 = vpop.trf.xlu0
      %v1840 = vpop.trf.xlu0
      %v1841 = vpop.trf.xlu0
      %v1842 = vpop.trf.xlu0
      %v1843 = vpop.trf.xlu0
      %1844 = vxpose.xlu0.b32.start [1/16] %v1715, 128
      %1845 = vxpose.xlu0.b32.cont [2/16] 0.0, 128
      %1846 = vxpose.xlu0.b32.cont [3/16] 0.0, 128
      %1847 = vxpose.xlu0.b32.cont [4/16] 0.0, 128
      %1848 = vxpose.xlu0.b32.cont [5/16] 0.0, 128
      %1849 = vxpose.xlu0.b32.cont [6/16] 0.0, 128
      %1850 = vxpose.xlu0.b32.cont [7/16] 0.0, 128
      %1851 = vxpose.xlu0.b32.cont [8/16] 0.0, 128
      %1852 = vxpose.xlu0.b32.cont [9/16] 0.0, 128
      %1853 = vxpose.xlu0.b32.cont [10/16] 0.0, 128
      %1854 = vxpose.xlu0.b32.cont [11/16] 0.0, 128
      %1855 = vxpose.xlu0.b32.cont [12/16] 0.0, 128
      %1856 = vxpose.xlu0.b32.cont [13/16] 0.0, 128
      %1857 = vxpose.xlu0.b32.cont [14/16] 0.0, 128
      %1858 = vxpose.xlu0.b32.cont [15/16] 0.0, 128
      %1859 = vxpose.xlu0.b32.end [16/16] 0.0, 128
      %v1860 = vpop.trf.xlu0
      %v1861 = vpop.trf.xlu0
      %v1862 = vpop.trf.xlu0
      %v1863 = vpop.trf.xlu0
      %v1864 = vpop.trf.xlu0
      %v1865 = vpop.trf.xlu0
      %v1866 = vpop.trf.xlu0
      %v1867 = vpop.trf.xlu0
      %v1868 = vpop.trf.xlu0
      %v1869 = vpop.trf.xlu0
      %v1870 = vpop.trf.xlu0
      %v1871 = vpop.trf.xlu0
      %v1872 = vpop.trf.xlu0
      %v1873 = vpop.trf.xlu0
      %v1874 = vpop.trf.xlu0
      %v1875 = vpop.trf.xlu0
      %1876 = vxpose.xlu0.b32.start [1/16] %v1761, 128
      %1877 = vxpose.xlu0.b32.cont [2/16] 0.0, 128
      %1878 = vxpose.xlu0.b32.cont [3/16] 0.0, 128
      %1879 = vxpose.xlu0.b32.cont [4/16] 0.0, 128
      %1880 = vxpose.xlu0.b32.cont [5/16] 0.0, 128
      %1881 = vxpose.xlu0.b32.cont [6/16] 0.0, 128
      %1882 = vxpose.xlu0.b32.cont [7/16] 0.0, 128
      %1883 = vxpose.xlu0.b32.cont [8/16] 0.0, 128
      %1884 = vxpose.xlu0.b32.cont [9/16] 0.0, 128
      %1885 = vxpose.xlu0.b32.cont [10/16] 0.0, 128
      %1886 = vxpose.xlu0.b32.cont [11/16] 0.0, 128
      %1887 = vxpose.xlu0.b32.cont [12/16] 0.0, 128
      %1888 = vxpose.xlu0.b32.cont [13/16] 0.0, 128
      %1889 = vxpose.xlu0.b32.cont [14/16] 0.0, 128
      %1890 = vxpose.xlu0.b32.cont [15/16] 0.0, 128
      %1891 = vxpose.xlu0.b32.end [16/16] 0.0, 128
      %v1892 = vpop.trf.xlu0
      %v1893 = vpop.trf.xlu0
      %v1894 = vpop.trf.xlu0
      %v1895 = vpop.trf.xlu0
      %v1896 = vpop.trf.xlu0
      %v1897 = vpop.trf.xlu0
      %v1898 = vpop.trf.xlu0
      %v1899 = vpop.trf.xlu0
      %v1900 = vpop.trf.xlu0
      %v1901 = vpop.trf.xlu0
      %v1902 = vpop.trf.xlu0
      %v1903 = vpop.trf.xlu0
      %v1904 = vpop.trf.xlu0
      %v1905 = vpop.trf.xlu0
      %v1906 = vpop.trf.xlu0
      %v1907 = vpop.trf.xlu0
      %1908 = vxpose.xlu0.b32.start [1/16] %v1807, 128
      %1909 = vxpose.xlu0.b32.cont [2/16] 0.0, 128
      %1910 = vxpose.xlu0.b32.cont [3/16] 0.0, 128
      %1911 = vxpose.xlu0.b32.cont [4/16] 0.0, 128
      %1912 = vxpose.xlu0.b32.cont [5/16] 0.0, 128
      %1913 = vxpose.xlu0.b32.cont [6/16] 0.0, 128
      %1914 = vxpose.xlu0.b32.cont [7/16] 0.0, 128
      %1915 = vxpose.xlu0.b32.cont [8/16] 0.0, 128
      %1916 = vxpose.xlu0.b32.cont [9/16] 0.0, 128
      %1917 = vxpose.xlu0.b32.cont [10/16] 0.0, 128
      %1918 = vxpose.xlu0.b32.cont [11/16] 0.0, 128
      %1919 = vxpose.xlu0.b32.cont [12/16] 0.0, 128
      %1920 = vxpose.xlu0.b32.cont [13/16] 0.0, 128
      %1921 = vxpose.xlu0.b32.cont [14/16] 0.0, 128
      %1922 = vxpose.xlu0.b32.cont [15/16] 0.0, 128
      %1923 = vxpose.xlu0.b32.end [16/16] 0.0, 128
      %v1924 = vpop.trf.xlu0
      %v1925 = vpop.trf.xlu0
      %v1926 = vpop.trf.xlu0
      %v1927 = vpop.trf.xlu0
      %v1928 = vpop.trf.xlu0
      %v1929 = vpop.trf.xlu0
      %v1930 = vpop.trf.xlu0
      %v1931 = vpop.trf.xlu0
      %v1932 = vpop.trf.xlu0
      %v1933 = vpop.trf.xlu0
      %v1934 = vpop.trf.xlu0
      %v1935 = vpop.trf.xlu0
      %v1936 = vpop.trf.xlu0
      %v1937 = vpop.trf.xlu0
      %v1938 = vpop.trf.xlu0
      %v1939 = vpop.trf.xlu0
      %v1940 = vcombine.low %v1828, %v1892
      %v1941 = vcombine.high %v1828, %v1892
      %v1943 = vunpack.c.l.s4 1983009808
      %v1944 = vunpack.c.0.s8 %v1943
      %v1945 = vlaneseq
      %v1946 = vshrl.u32 %v1945, 7
      %v1947 = vsub.s32 %v1944, %v1946
      %v1948 = vrot.slane %v1940, %v1947
      %v1950 = vunpack.c.l.s4 1983009808
      %v1951 = vunpack.c.0.s8 %v1950
      %v1952 = vlaneseq
      %v1953 = vshrl.u32 %v1952, 7
      %v1954 = vsub.s32 %v1951, %v1953
      %v1955 = vrot.slane %v1941, %v1954
      %v1956 = vcombine.low %v1860, %v1924
      %v1957 = vcombine.high %v1860, %v1924
      %v1959 = vunpack.c.l.s4 1983009808
      %v1960 = vunpack.c.0.s8 %v1959
      %v1961 = vlaneseq
      %v1962 = vshrl.u32 %v1961, 7
      %v1963 = vsub.s32 %v1960, %v1962
      %v1964 = vrot.slane %v1956, %v1963
      %v1966 = vunpack.c.l.s4 1983009808
      %v1967 = vunpack.c.0.s8 %v1966
      %v1968 = vlaneseq
      %v1969 = vshrl.u32 %v1968, 7
      %v1970 = vsub.s32 %v1967, %v1969
      %v1971 = vrot.slane %v1957, %v1970
      %v1972 = vcombine.low %v1948, %v1964
      %v1973 = vcombine.high %v1948, %v1964
      %v1975 = vunpack.c.l.s4 1934713408
      %v1976 = vunpack.c.0.s8 %v1975
      %v1977 = vlaneseq
      %v1978 = vshrl.u32 %v1977, 7
      %v1979 = vsub.s32 %v1976, %v1978
      %v1980 = vrot.slane %v1972, %v1979
      %v1982 = vunpack.c.l.s4 1934713408
      %v1983 = vunpack.c.0.s8 %v1982
      %v1984 = vlaneseq
      %v1985 = vshrl.u32 %v1984, 7
      %v1986 = vsub.s32 %v1983, %v1985
      %v1987 = vrot.slane %v1973, %v1986
      %v1988 = vcombine.low %v1955, %v1971
      %v1989 = vcombine.high %v1980, 0.0
      %v1990 = vcombine.high %v1987, 0.0
      %v1992 = vunpack.c.l.s4 1934713408
      %v1993 = vunpack.c.0.s8 %v1992
      %v1994 = vlaneseq
      %v1995 = vshrl.u32 %v1994, 7
      %v1996 = vsub.s32 %v1993, %v1995
      %v1997 = vrot.slane %v1988, %v1996
      %v1998 = vrcp.pop %v1250
      %v1999 = vrcp.pop %v1253
      %v2000 = vrcp.pop %v1256
      %v2001 = vrcp.pop %v1259
      %v2006 = vlaneseq
      %v2007 = vand.u32 %v2006, 127
      %v2008 = vlaneseq
      %v2009 = vshrl.u32 %v2008, 7
      %v2010 = vsub.s32 %v2007, %v2009
      %v2011 = vrot.slane %v1998, %v2010
      %v2012 = vlaneseq
      %v2013 = vshrl.u32 %v2012, 7
      %v2014 = vsub.s32 %v2007, %v2013
      %v2015 = vrot.slane %v1999, %v2014
      %v2016 = vlaneseq
      %v2017 = vshrl.u32 %v2016, 7
      %v2018 = vsub.s32 %v2007, %v2017
      %v2019 = vrot.slane %v2000, %v2018
      %v2020 = vlaneseq
      %v2021 = vshrl.u32 %v2020, 7
      %v2022 = vsub.s32 %v2007, %v2021
      %v2023 = vrot.slane %v2001, %v2022
      %vm2024 = vcmask 1041409
      %v2025 = vsel %vm2024, %v2015, %v2011
      %vm2026 = vcmask 1042434
      %v2027 = vsel %vm2026, %v2019, %v2025
      %vm2028 = vcmask 1043459
      %v2029 = vsel %vm2028, %v2023, %v2027
      %2031 = vxpose.xlu0.b32.start [1/16] %v2029, 128
      %2032 = vxpose.xlu0.b32.cont [2/16] 0.0, 128
      %2033 = vxpose.xlu0.b32.cont [3/16] 0.0, 128
      %2034 = vxpose.xlu0.b32.cont [4/16] 0.0, 128
      %2035 = vxpose.xlu0.b32.cont [5/16] 0.0, 128
      %2036 = vxpose.xlu0.b32.cont [6/16] 0.0, 128
      %2037 = vxpose.xlu0.b32.cont [7/16] 0.0, 128
      %2038 = vxpose.xlu0.b32.cont [8/16] 0.0, 128
      %2039 = vxpose.xlu0.b32.cont [9/16] 0.0, 128
      %2040 = vxpose.xlu0.b32.cont [10/16] 0.0, 128
      %2041 = vxpose.xlu0.b32.cont [11/16] 0.0, 128
      %2042 = vxpose.xlu0.b32.cont [12/16] 0.0, 128
      %2043 = vxpose.xlu0.b32.cont [13/16] 0.0, 128
      %2044 = vxpose.xlu0.b32.cont [14/16] 0.0, 128
      %2045 = vxpose.xlu0.b32.cont [15/16] 0.0, 128
      %2046 = vxpose.xlu0.b32.end [16/16] 0.0, 128
      %v2047 = vpop.trf.xlu0
      %v2048 = vpop.trf.xlu0
      %v2049 = vpop.trf.xlu0
      %v2050 = vpop.trf.xlu0
      %v2051 = vpop.trf.xlu0
      %v2052 = vpop.trf.xlu0
      %v2053 = vpop.trf.xlu0
      %v2054 = vpop.trf.xlu0
      %v2055 = vpop.trf.xlu0
      %v2056 = vpop.trf.xlu0
      %v2057 = vpop.trf.xlu0
      %v2058 = vpop.trf.xlu0
      %v2059 = vpop.trf.xlu0
      %v2060 = vpop.trf.xlu0
      %v2061 = vpop.trf.xlu0
      %v2062 = vpop.trf.xlu0
      %v2063 = vlaneseq
      %v2064 = vshrl.u32 %v2063, 7
      %v2065 = vsub.s32 0, %v2064
      %v2066 = vrot.slane %v2047, %v2065
      %2068 = vbcast.lane.b32.xlu0 %v2066, 256
      %v2069 = vpop.permute.xlu0 %2068
      %v2070 = vlaneseq
      %v2071 = vshrl.u32 %v2070, 7
      %v2072 = vsub.s32 1, %v2071
      %v2073 = vrot.slane %v2047, %v2072
      %2075 = vbcast.lane.b32.xlu0 %v2073, 256
      %v2076 = vpop.permute.xlu0 %2075
      %v2077 = vlaneseq
      %v2078 = vshrl.u32 %v2077, 7
      %v2079 = vsub.s32 2, %v2078
      %v2080 = vrot.slane %v2047, %v2079
      %2082 = vbcast.lane.b32.xlu0 %v2080, 256
      %v2083 = vpop.permute.xlu0 %2082
      %v2084 = vlaneseq
      %v2085 = vshrl.u32 %v2084, 7
      %v2086 = vsub.s32 3, %v2085
      %v2087 = vrot.slane %v2047, %v2086
      %2089 = vbcast.lane.b32.xlu0 %v2087, 256
      %v2090 = vpop.permute.xlu0 %2089
      %v2091 = vlaneseq
      %v2092 = vshrl.u32 %v2091, 7
      %v2093 = vsub.s32 4, %v2092
      %v2094 = vrot.slane %v2047, %v2093
      %2096 = vbcast.lane.b32.xlu0 %v2094, 256
      %v2097 = vpop.permute.xlu0 %2096
      %v2098 = vmul.f32 %v1980, %v2069
      %v2099 = vmul.f32 %v1989, %v2076
      %v2100 = vmul.f32 %v1987, %v2083
      %v2101 = vmul.f32 %v1990, %v2090
      %v2102 = vcombine.low %v2098, %v2100
      %v2104 = vunpack.c.l.s4 1983009808
      %v2105 = vunpack.c.0.s8 %v2104
      %v2106 = vlaneseq
      %v2107 = vshrl.u32 %v2106, 7
      %v2108 = vsub.s32 %v2105, %v2107
      %v2109 = vrot.slane %v2102, %v2108
      %v2110 = vcombine.low %v2099, %v2101
      %v2112 = vunpack.c.l.s4 1983009808
      %v2113 = vunpack.c.0.s8 %v2112
      %v2114 = vlaneseq
      %v2115 = vshrl.u32 %v2114, 7
      %v2116 = vsub.s32 %v2113, %v2115
      %v2117 = vrot.slane %v2110, %v2116
      %v2118 = vmul.f32 %v1997, %v2097
      %v2120 = vunpack.c.l.s4 1983009808
      %v2121 = vunpack.c.0.s8 %v2120
      %v2122 = vlaneseq
      %v2123 = vshrl.u32 %v2122, 7
      %v2124 = vsub.s32 %v2121, %v2123
      %v2125 = vrot.slane %v2118, %v2124
      %v2126 = vcombine.low %v2109, %v2117
      %v2127 = vcombine.high %v2109, %v2117
      %v2129 = vunpack.c.l.s4 1934713408
      %v2130 = vunpack.c.0.s8 %v2129
      %v2131 = vlaneseq
      %v2132 = vshrl.u32 %v2131, 7
      %v2133 = vsub.s32 %v2130, %v2132
      %v2134 = vrot.slane %v2126, %v2133
      %v2136 = vunpack.c.l.s4 1934713408
      %v2137 = vunpack.c.0.s8 %v2136
      %v2138 = vlaneseq
      %v2139 = vshrl.u32 %v2138, 7
      %v2140 = vsub.s32 %v2137, %v2139
      %v2141 = vrot.slane %v2127, %v2140
      %v2142 = vcombine.high %v2125, 0.0
      %v2144 = vunpack.c.l.s4 1934713408
      %v2145 = vunpack.c.0.s8 %v2144
      %v2146 = vlaneseq
      %v2147 = vshrl.u32 %v2146, 7
      %v2148 = vsub.s32 %v2145, %v2147
      %v2149 = vrot.slane %v2125, %v2148
      %v2151 = vunpack.c.l.s4 1934713408
      %v2152 = vunpack.c.0.s8 %v2151
      %v2153 = vlaneseq
      %v2154 = vshrl.u32 %v2153, 7
      %v2155 = vsub.s32 %v2152, %v2154
      %v2156 = vrot.slane %v2142, %v2155
      %v2157 = vcombine.low %v2134, %v2149
      %v2158 = vcombine.high %v2134, %v2149
      %v2159 = vcombine.low %v2141, %v2156
      %v2160 = vcombine.high %v2141, %v2156
      %2162 = vrot.lane.b32.xlu0 %v2158, 8
      %v2163 = vpop.permute.xlu0 %2162
      %2166 = vrot.lane.b32.xlu0 %v2159, 16
      %v2167 = vpop.permute.xlu0 %2166
      %2170 = vrot.lane.b32.xlu0 %v2160, 24
      %v2171 = vpop.permute.xlu0 %2170
      %v2173 = vsel %vm1025, %v2157, %v2163
      %vm2174 = vcmask 130048
      %v2175 = vsel %vm2174, %v2173, %v2167
      %vm2176 = vcmask 195584
      %v2177 = vsel %vm2176, %v2175, %v2171
      %v2178 = vpack.c.bf16 %v2177, %v2177
      %v2179 = vld [vmem:[%s317] sm:$0x7]
      %v2180 = vunpack.c.l.bf16 %v2179
      %v2181 = vld [vmem:[%s4] sm:$0xf]
      %v2182 = vld [vmem:[%s4 + $0x4] sm:$0xf]
      %v2183 = vld [vmem:[%s4 + $0x8] sm:$0xf]
      %v2184 = vld [vmem:[%s4 + $0xc] sm:$0xf]
      %v2189 = vunpack.c.l.b16 %v2181
      %v2190 = vunpack.c.l.b16 %v2182
      %v2191 = vunpack.c.l.b16 %v2183
      %v2192 = vunpack.c.l.b16 %v2184
      %v2193 = vpack.c.b16 %v2190, %v2189
      %v2194 = vpack.c.b16 %v2192, %v2191
      %vm2197 = vcmask 261120
      %v2199 = vsel %vm2197, %v2178, 0
      %2201 = vmatprep.subr.bf16.mxu0 0
      %2202 = vmatpush1.bf16.msra.mxu0 %v2193
      %2203 = vmatprep.subr.bf16.mxu0 0
      %2204 = vmatpush1.bf16.msra.mxu0 %v2194
      %2205 = vmatprep.subr.bf16.mxu0 0
      %2206 = vmatpush1.bf16.msra.mxu0 0
      %2207 = vmatprep.subr.bf16.mxu0 0
      %2208 = vmatpush1.bf16.msra.mxu0 0
      %2209 = vmatprep.subr.bf16.mxu0 0
      %2210 = vmatpush1.bf16.msra.mxu0 0
      %2211 = vmatprep.subr.bf16.mxu0 0
      %2212 = vmatpush1.bf16.msra.mxu0 0
      %2213 = vmatprep.subr.bf16.mxu0 0
      %2214 = vmatpush1.bf16.msra.mxu0 0
      %2215 = vmatprep.subr.bf16.mxu0 0
      %2216 = vmatpush1.bf16.msra.mxu0 0
      %2217 = vmatprep.subr.bf16.mxu0 0
      %2218 = vmatpush1.bf16.msra.mxu0 0
      %2219 = vmatprep.subr.bf16.mxu0 0
      %2220 = vmatpush1.bf16.msra.mxu0 0
      %2221 = vmatprep.subr.bf16.mxu0 0
      %2222 = vmatpush1.bf16.msra.mxu0 0
      %2223 = vmatprep.subr.bf16.mxu0 0
      %2224 = vmatpush1.bf16.msra.mxu0 0
      %2225 = vmatprep.subr.bf16.mxu0 0
      %2226 = vmatpush1.bf16.msra.mxu0 0
      %2227 = vmatprep.subr.bf16.mxu0 0
      %2228 = vmatpush1.bf16.msra.mxu0 0
      %2229 = vmatprep.subr.bf16.mxu0 0
      %2230 = vmatpush1.bf16.msra.mxu0 0
      %2231 = vmatprep.subr.bf16.mxu0 0
      %2232 = vmatpush1.bf16.msra.mxu0 0
      %2233 = vmatprep.mubr.bf16.mxu0 0
      %2234 = vmatmul.mubr.bf16.gmra.mrb[0].mxu0 %v2199
      %v2235 = vpop.f32.mrb[0].mxu0
      %v2236 = vadd.f32 0.0, %v2235
      %v2237 = vpop.f32.mrb[0].mxu0
      %v2238 = vpop.f32.mrb[0].mxu0
      %v2239 = vpop.f32.mrb[0].mxu0
      %2240 = vdwg.mxu0
      %v2241 = vadd.f32 %v2180, %v2236
      %v2242 = vld [vmem:[%s5] sm:$0x1]
      %v2244 = vlaneseq
      %v2245 = vshrl.u32 %v2244, 7
      %v2246 = vsub.s32 0, %v2245
      %v2247 = vrot.slane %v2242, %v2246
      %v2249 = vadd.f32 %v2241, %v2247
      %v2250 = vpack.c.bf16 %v2249, %v2249
      %vm2251 = vcmask 256000
      %vm2252 = vsmask.f32 2304
      %vm2253 = vmand %vm2251, %vm2252
      %v2254 = vld [vmem:[%s339] sm:$0x7]
      %v2255 = vsel %vm2253, %v2250, %v2254
      %2256 = vst [vmem:[%s339] sm:$0x7] %v2255
      %p2257 = scmp.lt.s32.totalorder %s21, 1
      %s2258 = scalar_select %p2257, %s21, 1
      %p2259 = scmp.lt.s32.totalorder %s22, 0
      %s2260 = scalar_select %p2259, %s22, 0
      %s2261 = sadd.s32 %s2260, %s2258
      %s2262 = smul.addr %s2261, 4
      %s2263 = scalar_lea.vmem %s6, %s2262
      // Predicated region
      $region45: #{feature_extractor_eva_forward.9} parent=43 // pred_check
        %p2264 = pneg %p199
      $region46: #{feature_extractor_eva_forward.9} parent=43 // pred_check_branch
        %2266 = sbr.rel (%p2264) target = $region48
      $region47: #{feature_extractor_eva_forward.9} parent=43 // pred_region
        _
      $region48: #{feature_extractor_eva_forward.9} parent=43 // pred_fallthru
        _
    $region44: #{feature_extractor_eva_forward.9} parent=5 // pred_fallthru
      _
    %p2267 = scmp.le.s32.totalorder 2, %s12
    // Predicated region
    $region49: #{feature_extractor_eva_forward.9} parent=5 // pred_check
      %p2268 = pneg %p2267
    $region50: #{feature_extractor_eva_forward.9} parent=5 // pred_check_branch
      %2270 = sbr.rel (%p2268) target = $region52
    $region51: #{feature_extractor_eva_forward.9} parent=5 // pred_region
      %s2271 = ssub.s32 %s12, 2
      // Predicated region
      $region53: #{feature_extractor_eva_forward.9} parent=51 // pred_check
        %p2272 = pneg %p205
      $region54: #{feature_extractor_eva_forward.9} parent=51 // pred_check_branch
        %2274 = sbr.rel (%p2272) target = $region56
      $region55: #{feature_extractor_eva_forward.9} parent=51 // pred_region
        %p2275 = scmp.lt.s32.totalorder %s23, 1
        %s2276 = scalar_select %p2275, %s23, 1
        %p2277 = scmp.lt.s32.totalorder %s24, 0
        %s2278 = scalar_select %p2277, %s24, 0
        %s2279 = sadd.s32 %s2278, %s2276
        %s2280 = smul.addr %s2279, 4
        %s2281 = scalar_lea.vmem %s6, %s2280
      $region56: #{feature_extractor_eva_forward.9} parent=51 // pred_fallthru
        _
    $region52: #{feature_extractor_eva_forward.9} parent=5 // pred_fallthru
      _
  $region6: #{feature_extractor_eva_forward.9} parent=0 // loop_footer
    %s16 = sadd.s32 1, %s12
  $region7: #{feature_extractor_eva_forward.9} parent=0 // loop_footer_branch
    %11 = sbr.rel target = $region3
  $region8: #{feature_extractor_eva_forward.9} parent=0 // loop_exit
    _

// kernel: feature_extractor_eva_forward.13
$region0: #{feature_extractor_eva_forward.13}
  #allocation0 [shape = 'u32[]', space=smem, size = 0x4, offset = 0x4, fixed_abs, tag = 'smem constant byte address 0x4 - core index']
  #allocation1 [shape = 'u32[144,128]{1,0:T(1,128)}', space=vmem, size = 0x12000, scoped, tag = 'internal scratch']
  %s0 = inlined_call_operand.vmem [shape: bf16[10,32], index: 0, kind: input, shape index: {}]
  %s1 = inlined_call_operand.vmem [shape: f32[1,32], index: 1, kind: input, shape index: {}]
  %s2 = inlined_call_operand.vmem [shape: f32[1,32], index: 2, kind: input, shape index: {}]
  %s3 = inlined_call_operand.vmem [shape: bf16[32,128], index: 3, kind: input, shape index: {}]
  %s4 = inlined_call_operand.vmem [shape: f32[1,128], index: 4, kind: input, shape index: {}]
  %s5 = inlined_call_operand.vmem [shape: bf16[128,32], index: 5, kind: input, shape index: {}]
  %s6 = inlined_call_operand.vmem [shape: f32[1,32], index: 6, kind: input, shape index: {}]
  %s7 = inlined_call_operand.vmem [shape: f32[1,32], index: 7, kind: input, shape index: {}]
  %s8 = inlined_call_operand.vmem [shape: f32[1,32], index: 8, kind: input, shape index: {}]
  %s9 = inlined_call_operand.hbm [shape: bf16[10,32], index: 9, kind: output, shape index: {0}]
  %s10 = inlined_call_operand.vmem [shape: bf16[10,32], index: 10, kind: output, shape index: {1}]
  %11 = xla_tuple %s9, %s10
  %s12 = sld [smem:[#allocation0]]
  $region54: #{feature_extractor_eva_forward.13} parent=0
    _
  %s14 = ssub.s32 1, %s12
  %s15 = scalar_select 0, %s14, %s12
  $region1: #{feature_extractor_eva_forward.13} parent=0
    #allocation2 [shape = 'u8[4096]{0}', space=vmem, size = 0x1000, scoped, tag = 'output window, operand 0, single buffered']
    #allocation3 [shape = 's32[1]{0}', space=sflag, size = 0x4, scoped, tag = 'scoped memory for feature_extractor_eva_forward.13']
    %16 = vsyncpa [#allocation3], 0
    // Predicated region
    $region2: #{feature_extractor_eva_forward.13} parent=1 // pred_check
      _
    $region3: #{feature_extractor_eva_forward.13} parent=1 // pred_check_branch
      %18 = sbr.rel (0) target = $region5
    $region4: #{feature_extractor_eva_forward.13} parent=1 // pred_region
      _
    $region5: #{feature_extractor_eva_forward.13} parent=1 // pred_fallthru
      _
    // Predicated region
    $region6: #{feature_extractor_eva_forward.13} parent=1 // pred_check
      _
    $region7: #{feature_extractor_eva_forward.13} parent=1 // pred_check_branch
      %20 = sbr.rel (0) target = $region9
    $region8: #{feature_extractor_eva_forward.13} parent=1 // pred_region
      _
    $region9: #{feature_extractor_eva_forward.13} parent=1 // pred_fallthru
      _
    // Predicated region
    $region10: #{feature_extractor_eva_forward.13} parent=1 // pred_check
      _
    $region11: #{feature_extractor_eva_forward.13} parent=1 // pred_check_branch
      %22 = sbr.rel (0) target = $region13
    $region12: #{feature_extractor_eva_forward.13} parent=1 // pred_region
      _
    $region13: #{feature_extractor_eva_forward.13} parent=1 // pred_fallthru
      _
    // Predicated region
    $region14: #{feature_extractor_eva_forward.13} parent=1 // pred_check
      _
    $region15: #{feature_extractor_eva_forward.13} parent=1 // pred_check_branch
      %24 = sbr.rel (0) target = $region17
    $region16: #{feature_extractor_eva_forward.13} parent=1 // pred_region
      _
    $region17: #{feature_extractor_eva_forward.13} parent=1 // pred_fallthru
      _
    // Predicated region
    $region18: #{feature_extractor_eva_forward.13} parent=1 // pred_check
      _
    $region19: #{feature_extractor_eva_forward.13} parent=1 // pred_check_branch
      %26 = sbr.rel (0) target = $region21
    $region20: #{feature_extractor_eva_forward.13} parent=1 // pred_region
      _
    $region21: #{feature_extractor_eva_forward.13} parent=1 // pred_fallthru
      _
    // Predicated region
    $region22: #{feature_extractor_eva_forward.13} parent=1 // pred_check
      _
    $region23: #{feature_extractor_eva_forward.13} parent=1 // pred_check_branch
      %28 = sbr.rel (0) target = $region25
    $region24: #{feature_extractor_eva_forward.13} parent=1 // pred_region
      _
    $region25: #{feature_extractor_eva_forward.13} parent=1 // pred_fallthru
      _
    // Predicated region
    $region26: #{feature_extractor_eva_forward.13} parent=1 // pred_check
      _
    $region27: #{feature_extractor_eva_forward.13} parent=1 // pred_check_branch
      %30 = sbr.rel (0) target = $region29
    $region28: #{feature_extractor_eva_forward.13} parent=1 // pred_region
      _
    $region29: #{feature_extractor_eva_forward.13} parent=1 // pred_fallthru
      _
    // Predicated region
    $region30: #{feature_extractor_eva_forward.13} parent=1 // pred_check
      _
    $region31: #{feature_extractor_eva_forward.13} parent=1 // pred_check_branch
      %32 = sbr.rel (0) target = $region33
    $region32: #{feature_extractor_eva_forward.13} parent=1 // pred_region
      _
    $region33: #{feature_extractor_eva_forward.13} parent=1 // pred_fallthru
      _
    // Predicated region
    $region34: #{feature_extractor_eva_forward.13} parent=1 // pred_check
      _
    $region35: #{feature_extractor_eva_forward.13} parent=1 // pred_check_branch
      %34 = sbr.rel (0) target = $region37
    $region36: #{feature_extractor_eva_forward.13} parent=1 // pred_region
      _
    $region37: #{feature_extractor_eva_forward.13} parent=1 // pred_fallthru
      _
    %v36 = vld [vmem:[%s0] sm:$0xf]
    %v37 = vld [vmem:[%s0 + $0x4] sm:$0x1]
    %v38 = vunpack.c.l.bf16 %v36
    %v39 = vunpack.c.l.bf16 %v37
    %v40 = vld [vmem:[%s1] sm:$0x1]
    %v41 = vld [vmem:[%s2] sm:$0x1]
    %vm42 = vcmask 261120
    %v43 = vsel %vm42, %v38, 0.0
    %44 = vadd.xlane.f32.xlu0 %v43
    %v45 = vpop.xlane.xlu0 %44
    %vm46 = vcmask 254976
    %v47 = vsel %vm46, %v39, 0.0
    %48 = vadd.xlane.f32.xlu0 %v47
    %v49 = vpop.xlane.xlu0 %48
    %v50 = vrcp.pop 32.0
    %v51 = vmul.f32 %v45, %v50
    %v52 = vmul.f32 %v49, %v50
    %v53 = vsub.f32 %v38, %v51
    %v54 = vsub.f32 %v39, %v52
    %v55 = vmul.f32 %v53, %v53
    %v56 = vmul.f32 %v54, %v54
    %v57 = vsel %vm42, %v55, 0.0
    %58 = vadd.xlane.f32.xlu0 %v57
    %v59 = vpop.xlane.xlu0 %58
    %v60 = vsel %vm46, %v56, 0.0
    %61 = vadd.xlane.f32.xlu0 %v60
    %v62 = vpop.xlane.xlu0 %61
    %v63 = vmul.f32 %v59, %v50
    %v64 = vmul.f32 %v62, %v50
    %v65 = vadd.f32 %v63, 1e-06
    %v66 = vadd.f32 %v64, 1e-06
    %v67 = vrsqrt.pop %v65
    %v68 = vrsqrt.pop %v66
    %v69 = vmul.f32 %v53, %v67
    %v70 = vmul.f32 %v54, %v68
    %v72 = vlaneseq
    %v73 = vshrl.u32 %v72, 7
    %v74 = vsub.s32 0, %v73
    %v75 = vrot.slane %v40, %v74
    %v77 = vmul.f32 %v69, %v75
    %v78 = vmul.f32 %v70, %v75
    %v80 = vlaneseq
    %v81 = vshrl.u32 %v80, 7
    %v82 = vsub.s32 0, %v81
    %v83 = vrot.slane %v41, %v82
    %v85 = vadd.f32 %v77, %v83
    %v86 = vadd.f32 %v78, %v83
    %v87 = vpack.c.bf16 %v86, %v85
    %v88 = vld [vmem:[%s3] sm:$0xf]
    %v89 = vld [vmem:[%s3 + $0x4] sm:$0xf]
    %v90 = vld [vmem:[%s3 + $0x8] sm:$0xf]
    %v91 = vld [vmem:[%s3 + $0xc] sm:$0xf]
    %v92 = vld [vmem:[%s4] sm:$0x1]
    %v94 = vlaneseq
    %v95 = vshrl.u32 %v94, 7
    %v96 = vsub.s32 0, %v95
    %v97 = vrot.slane %v92, %v96
    %v103 = vunpack.c.l.b16 %v88
    %v104 = vunpack.c.l.b16 %v89
    %v105 = vunpack.c.l.b16 %v90
    %v106 = vunpack.c.l.b16 %v91
    %v107 = vpack.c.b16 %v104, %v103
    %v108 = vpack.c.b16 %v106, %v105
    %v112 = vsel %vm42, %v87, 0
    %114 = vmatprep.subr.bf16.mxu0 0
    %115 = vmatpush1.bf16.msra.mxu0 %v107
    %116 = vmatprep.subr.bf16.mxu0 0
    %117 = vmatpush1.bf16.msra.mxu0 %v108
    %118 = vmatprep.subr.bf16.mxu0 0
    %119 = vmatpush1.bf16.msra.mxu0 0
    %120 = vmatprep.subr.bf16.mxu0 0
    %121 = vmatpush1.bf16.msra.mxu0 0
    %122 = vmatprep.subr.bf16.mxu0 0
    %123 = vmatpush1.bf16.msra.mxu0 0
    %124 = vmatprep.subr.bf16.mxu0 0
    %125 = vmatpush1.bf16.msra.mxu0 0
    %126 = vmatprep.subr.bf16.mxu0 0
    %127 = vmatpush1.bf16.msra.mxu0 0
    %128 = vmatprep.subr.bf16.mxu0 0
    %129 = vmatpush1.bf16.msra.mxu0 0
    %130 = vmatprep.subr.bf16.mxu0 0
    %131 = vmatpush1.bf16.msra.mxu0 0
    %132 = vmatprep.subr.bf16.mxu0 0
    %133 = vmatpush1.bf16.msra.mxu0 0
    %134 = vmatprep.subr.bf16.mxu0 0
    %135 = vmatpush1.bf16.msra.mxu0 0
    %136 = vmatprep.subr.bf16.mxu0 0
    %137 = vmatpush1.bf16.msra.mxu0 0
    %138 = vmatprep.subr.bf16.mxu0 0
    %139 = vmatpush1.bf16.msra.mxu0 0
    %140 = vmatprep.subr.bf16.mxu0 0
    %141 = vmatpush1.bf16.msra.mxu0 0
    %142 = vmatprep.subr.bf16.mxu0 0
    %143 = vmatpush1.bf16.msra.mxu0 0
    %144 = vmatprep.subr.bf16.mxu0 0
    %145 = vmatpush1.bf16.msra.mxu0 0
    %146 = vmatprep.mubr.bf16.mxu0 0
    %147 = vmatmul.mubr.bf16.gmra.mrb[0].mxu0 %v112
    %v148 = vpop.f32.mrb[0].mxu0
    %v149 = vadd.f32 %v97, %v148
    %v150 = vpop.f32.mrb[0].mxu0
    %v151 = vpop.f32.mrb[0].mxu0
    %v152 = vadd.f32 %v97, %v151
    %v153 = vpop.f32.mrb[0].mxu0
    %154 = vdwg.mxu0
    %v155 = vmul.f32 %v149, %v149
    %v156 = vmul.f32 %v152, %v152
    %v157 = vmul.f32 %v149, %v155
    %v158 = vmul.f32 %v152, %v156
    %v159 = vmul.f32 %v157, 0.044715
    %v160 = vmul.f32 %v158, 0.044715
    %v161 = vadd.f32 %v149, %v159
    %v162 = vadd.f32 %v152, %v160
    %v163 = vmul.f32 %v161, 0.7978846
    %v164 = vmul.f32 %v162, 0.7978846
    %v165 = vtanh.pop %v163
    %v166 = vtanh.pop %v164
    %v167 = vadd.f32 %v165, 1.0
    %v168 = vadd.f32 %v166, 1.0
    %v169 = vmul.f32 %v167, 0.5
    %v170 = vmul.f32 %v168, 0.5
    %v171 = vmul.f32 %v149, %v169
    %v172 = vmul.f32 %v152, %v170
    %v173 = vpack.c.bf16 %v172, %v171
    %v174 = vld [vmem:[%s5] sm:$0xf]
    %v175 = vld [vmem:[%s5 + $0x4] sm:$0xf]
    %v176 = vld [vmem:[%s5 + $0x8] sm:$0xf]
    %v177 = vld [vmem:[%s5 + $0xc] sm:$0xf]
    %v178 = vld [vmem:[%s5 + $0x10] sm:$0xf]
    %v179 = vld [vmem:[%s5 + $0x14] sm:$0xf]
    %v180 = vld [vmem:[%s5 + $0x18] sm:$0xf]
    %v181 = vld [vmem:[%s5 + $0x1c] sm:$0xf]
    %v182 = vld [vmem:[%s5 + $0x20] sm:$0xf]
    %v183 = vld [vmem:[%s5 + $0x24] sm:$0xf]
    %v184 = vld [vmem:[%s5 + $0x28] sm:$0xf]
    %v185 = vld [vmem:[%s5 + $0x2c] sm:$0xf]
    %v186 = vld [vmem:[%s5 + $0x30] sm:$0xf]
    %v187 = vld [vmem:[%s5 + $0x34] sm:$0xf]
    %v188 = vld [vmem:[%s5 + $0x38] sm:$0xf]
    %v189 = vld [vmem:[%s5 + $0x3c] sm:$0xf]
    %v190 = vld [vmem:[%s6] sm:$0x1]
    %v192 = vlaneseq
    %v193 = vshrl.u32 %v192, 7
    %v194 = vsub.s32 0, %v193
    %v195 = vrot.slane %v190, %v194
    %v213 = vunpack.c.l.b16 %v174
    %v214 = vunpack.c.l.b16 %v175
    %v215 = vunpack.c.l.b16 %v176
    %v216 = vunpack.c.l.b16 %v177
    %v217 = vunpack.c.l.b16 %v178
    %v218 = vunpack.c.l.b16 %v179
    %v219 = vunpack.c.l.b16 %v180
    %v220 = vunpack.c.l.b16 %v181
    %v221 = vunpack.c.l.b16 %v182
    %v222 = vunpack.c.l.b16 %v183
    %v223 = vunpack.c.l.b16 %v184
    %v224 = vunpack.c.l.b16 %v185
    %v225 = vunpack.c.l.b16 %v186
    %v226 = vunpack.c.l.b16 %v187
    %v227 = vunpack.c.l.b16 %v188
    %v228 = vunpack.c.l.b16 %v189
    %v229 = vpack.c.b16 %v214, %v213
    %v230 = vpack.c.b16 %v216, %v215
    %v231 = vpack.c.b16 %v218, %v217
    %v232 = vpack.c.b16 %v220, %v219
    %v233 = vpack.c.b16 %v222, %v221
    %v234 = vpack.c.b16 %v224, %v223
    %v235 = vpack.c.b16 %v226, %v225
    %v236 = vpack.c.b16 %v228, %v227
    %245 = vmatprep.subr.bf16.mxu0 0
    %246 = vmatpush1.bf16.msra.mxu0 %v229
    %247 = vmatprep.subr.bf16.mxu0 0
    %248 = vmatpush1.bf16.msra.mxu0 %v230
    %249 = vmatprep.subr.bf16.mxu0 0
    %250 = vmatpush1.bf16.msra.mxu0 %v231
    %251 = vmatprep.subr.bf16.mxu0 0
    %252 = vmatpush1.bf16.msra.mxu0 %v232
    %253 = vmatprep.subr.bf16.mxu0 0
    %254 = vmatpush1.bf16.msra.mxu0 %v233
    %255 = vmatprep.subr.bf16.mxu0 0
    %256 = vmatpush1.bf16.msra.mxu0 %v234
    %257 = vmatprep.subr.bf16.mxu0 0
    %258 = vmatpush1.bf16.msra.mxu0 %v235
    %259 = vmatprep.subr.bf16.mxu0 0
    %260 = vmatpush1.bf16.msra.mxu0 %v236
    %261 = vmatprep.subr.bf16.mxu0 0
    %262 = vmatpush1.bf16.msra.mxu0 0
    %263 = vmatprep.subr.bf16.mxu0 0
    %264 = vmatpush1.bf16.msra.mxu0 0
    %265 = vmatprep.subr.bf16.mxu0 0
    %266 = vmatpush1.bf16.msra.mxu0 0
    %267 = vmatprep.subr.bf16.mxu0 0
    %268 = vmatpush1.bf16.msra.mxu0 0
    %269 = vmatprep.subr.bf16.mxu0 0
    %270 = vmatpush1.bf16.msra.mxu0 0
    %271 = vmatprep.subr.bf16.mxu0 0
    %272 = vmatpush1.bf16.msra.mxu0 0
    %273 = vmatprep.subr.bf16.mxu0 0
    %274 = vmatpush1.bf16.msra.mxu0 0
    %275 = vmatprep.subr.bf16.mxu0 0
    %276 = vmatpush1.bf16.msra.mxu0 0
    %277 = vmatprep.mubr.bf16.mxu0 0
    %278 = vmatmul.mubr.bf16.gmra.mrb[0].mxu0 %v173
    %v279 = vpop.f32.mrb[0].mxu0
    %v280 = vadd.f32 %v195, %v279
    %v281 = vpop.f32.mrb[0].mxu0
    %v282 = vpop.f32.mrb[0].mxu0
    %v283 = vadd.f32 %v195, %v282
    %v284 = vpop.f32.mrb[0].mxu0
    %285 = vdwg.mxu0
    %v286 = vadd.f32 %v38, %v280
    %v287 = vadd.f32 %v39, %v283
    %v288 = vpack.c.bf16 %v287, %v286
    %v290 = vunpack.c.l.b16 %v288
    %v291 = vunpack.c.h.b16 %v288
    %v292 = vpack.c.b16 %v290, %v290
    %v293 = vpack.c.b16 %v291, %v291
    %vm296 = vcmask 257024
    %297 = vst.msk [vmem:[#allocation2] sm:$0xf] %vm296, %v292
    %vm298 = vcmask 253952
    %299 = vst.msk [vmem:[#allocation2 + $0x4] sm:$0x1] %vm298, %v293
    %v300 = vld [vmem:[%s7] sm:$0x1]
    %v301 = vld [vmem:[%s8] sm:$0x1]
    %v302 = vsel %vm42, %v286, 0.0
    %303 = vadd.xlane.f32.xlu0 %v302
    %v304 = vpop.xlane.xlu0 %303
    %v305 = vsel %vm46, %v287, 0.0
    %306 = vadd.xlane.f32.xlu0 %v305
    %v307 = vpop.xlane.xlu0 %306
    %v308 = vmul.f32 %v304, %v50
    %v309 = vmul.f32 %v307, %v50
    %v310 = vsub.f32 %v286, %v308
    %v311 = vsub.f32 %v287, %v309
    %v312 = vmul.f32 %v310, %v310
    %v313 = vmul.f32 %v311, %v311
    %v314 = vsel %vm42, %v312, 0.0
    %315 = vadd.xlane.f32.xlu0 %v314
    %v316 = vpop.xlane.xlu0 %315
    %v317 = vsel %vm46, %v313, 0.0
    %318 = vadd.xlane.f32.xlu0 %v317
    %v319 = vpop.xlane.xlu0 %318
    %v320 = vmul.f32 %v316, %v50
    %v321 = vmul.f32 %v319, %v50
    %v322 = vadd.f32 %v320, 1e-06
    %v323 = vadd.f32 %v321, 1e-06
    %v324 = vrsqrt.pop %v322
    %v325 = vrsqrt.pop %v323
    %v326 = vmul.f32 %v310, %v324
    %v327 = vmul.f32 %v311, %v325
    %v329 = vlaneseq
    %v330 = vshrl.u32 %v329, 7
    %v331 = vsub.s32 0, %v330
    %v332 = vrot.slane %v300, %v331
    %v334 = vmul.f32 %v326, %v332
    %v335 = vmul.f32 %v327, %v332
    %v337 = vlaneseq
    %v338 = vshrl.u32 %v337, 7
    %v339 = vsub.s32 0, %v338
    %v340 = vrot.slane %v301, %v339
    %v342 = vadd.f32 %v334, %v340
    %v343 = vadd.f32 %v335, %v340
    %v344 = vpack.c.bf16 %v343, %v342
    %v346 = vunpack.c.l.b16 %v344
    %v347 = vunpack.c.h.b16 %v344
    %v348 = vpack.c.b16 %v346, %v346
    %v349 = vpack.c.b16 %v347, %v347
    %352 = vst.msk [vmem:[%s10] sm:$0xf] %vm296, %v348
    %353 = vst.msk [vmem:[%s10 + $0x4] sm:$0x1] %vm298, %v349
    // Predicated region
    $region38: #{feature_extractor_eva_forward.13} parent=1 // pred_check
      _
    $region39: #{feature_extractor_eva_forward.13} parent=1 // pred_check_branch
      %355 = sbr.rel (0) target = $region41
    $region40: #{feature_extractor_eva_forward.13} parent=1 // pred_region
      %s357 = ssub.s32 128, 128
      %358 = vsyncadd [#allocation3], %s357
      %s359 = sshll.u32 [#allocation2], 4
      %s360 = int_to_ptr.vmem [resolvable:$true] %s359
      %365 = dma.vmem_to_hbm [thread:$0]  %s360, 128, %s9, [#allocation3], 64, 64, 4
    $region41: #{feature_extractor_eva_forward.13} parent=1 // pred_fallthru
      _
    // Predicated region
    $region42: #{feature_extractor_eva_forward.13} parent=1 // pred_check
      _
    $region43: #{feature_extractor_eva_forward.13} parent=1 // pred_check_branch
      %367 = sbr.rel (0) target = $region45
    $region44: #{feature_extractor_eva_forward.13} parent=1 // pred_region
      _
    $region45: #{feature_extractor_eva_forward.13} parent=1 // pred_fallthru
      _
    // Predicated region
    $region46: #{feature_extractor_eva_forward.13} parent=1 // pred_check
      _
    $region47: #{feature_extractor_eva_forward.13} parent=1 // pred_check_branch
      %369 = sbr.rel (0) target = $region49
    $region48: #{feature_extractor_eva_forward.13} parent=1 // pred_region
      %370 = dma.done [#allocation3], 128
    $region49: #{feature_extractor_eva_forward.13} parent=1 // pred_fallthru
      _
    // Predicated region
    $region50: #{feature_extractor_eva_forward.13} parent=1 // pred_check
      _
    $region51: #{feature_extractor_eva_forward.13} parent=1 // pred_check_branch
      %372 = sbr.rel (0) target = $region53
    $region52: #{feature_extractor_eva_forward.13} parent=1 // pred_region
      _
    $region53: #{feature_extractor_eva_forward.13} parent=1 // pred_fallthru
      _
    %373 = vsyncpa [#allocation3], 1

</llo_original>
